<compile_context>
chip_gen: v7x
topology: tpu7x:2x2x1
jax: 0.10.0
libtpu: 0.0.40
codegen_flags: <defaults>
</compile_context>

<pallas_src>
import jax
import jax.numpy as jnp
from jax import lax
from jax.experimental import pallas as pl
from jax.experimental.pallas import tpu as pltpu

# ---------------- config (small synthetic shapes) ----------------
BLANK = 0
VOCAB = 10          # target token ids live in [1, VOCAB)
B, T, F_IN, U = 2, 8, 16, 4
U1 = U + 1          # decoder sees targets prepended with <blank>
EMB = 16            # decoder embedding width
H = 32              # joint width; doubles as the loss "vocab" axis (no extra
                    # projection in the upstream JointNet)


# ---------------- fused Transducer kernel ----------------
def _transducer_kernel(tgt_ref, ilen_ref, tlen_ref,          # scalar prefetch (SMEM)
                       x_ref, emb_ref, w_enc_ref, b_enc_ref,  # inputs (VMEM)
                       w_dec_ref, b_dec_ref,
                       loss_ref):                             # output (VMEM)
    f32 = jnp.float32
    NEG = f32(-1e30)
    b_idx = pl.program_id(0)

    _, t_sz, _ = x_ref.shape          # (1, T, F)
    v_sz, _ = emb_ref.shape           # (VOCAB, EMB)
    h_sz = w_enc_ref.shape[1]
    u_sz = tgt_ref.shape[1]           # U
    u1_sz = u_sz + 1

    # ---- encoder: tanh(x @ W_enc + b_enc)  (bf16 MXU operands, f32 acc) ----
    x = x_ref[0]                                                    # (T, F)
    enc = jnp.tanh(
        jnp.dot(x.astype(jnp.bfloat16), w_enc_ref[...].astype(jnp.bfloat16),
                preferred_element_type=f32) + b_enc_ref[...])        # (T, H)

    # ---- decoder: embed([blank] + targets) then tanh(emb @ W_dec + b_dec) ----
    # embedding gather as a one-hot matmul from scalar-prefetched targets.
    r_e = lax.broadcasted_iota(jnp.int32, (u1_sz, v_sz), 0)
    c_e = lax.broadcasted_iota(jnp.int32, (u1_sz, v_sz), 1)
    onehot = jnp.where((r_e == 0) & (c_e == BLANK), 1.0, 0.0).astype(f32)
    for u in range(1, u1_sz):                     # tiny static unroll (U=4)
        tok = tgt_ref[b_idx, u - 1]
        onehot = jnp.where((r_e == u) & (c_e == tok), 1.0, onehot)
    hi = lax.Precision.HIGHEST
    emb = jnp.dot(onehot, emb_ref[...], precision=hi,
                  preferred_element_type=f32)                        # (U1, EMB)
    dec = jnp.tanh(
        jnp.dot(emb.astype(jnp.bfloat16), w_dec_ref[...].astype(jnp.bfloat16),
                preferred_element_type=f32) + b_dec_ref[...])        # (U1, H)

    # ---- JointNet broadcast add + log-softmax over the feature axis ----
    logits = enc[:, None, :] + dec[None, :, :]                       # (T, U1, H)
    m = jnp.max(logits, axis=-1, keepdims=True)
    lse = m + jnp.log(jnp.sum(jnp.exp(logits - m), axis=-1, keepdims=True))
    logp = logits - lse                                              # (T, U1, H)

    # ---- extract just the blank column and the target-token column ----
    lane3 = lax.broadcasted_iota(jnp.int32, (t_sz, u1_sz, h_sz), 2)
    lp_blank = jnp.sum(jnp.where(lane3 == BLANK, logp, 0.0), axis=-1)  # (T, U1)

    r_u = lax.broadcasted_iota(jnp.int32, (u1_sz, h_sz), 0)
    c_h = lax.broadcasted_iota(jnp.int32, (u1_sz, h_sz), 1)
    sel = jnp.zeros((u1_sz, h_sz), f32)
    for u in range(u_sz):                          # tiny static unroll (U=4)
        tok = tgt_ref[b_idx, u]
        sel = jnp.where((r_u == u) & (c_h == tok), 1.0, sel)
    lp_label = jnp.sum(logp * sel[None, :, :], axis=-1)               # (T, U1)
    # column u_sz of lp_label is never read by the recursion.

    # ---- RNNT forward DP (wavefront over anti-diagonals) ----
    # alpha[t,u] = logaddexp(alpha[t-1,u] + lp_blank[t-1,u],
    #                        alpha[t,u-1] + lp_label[t,u-1]),  alpha[0,0] = 0
    row_t = lax.broadcasted_iota(jnp.int32, (t_sz, u1_sz), 0)
    col_u = lax.broadcasted_iota(jnp.int32, (t_sz, u1_sz), 1)
    origin = (row_t == 0) & (col_u == 0)

    # constant one-hot shift matrices (exact shifts via MXU, precision=HIGHEST)
    it = lax.broadcasted_iota(jnp.int32, (t_sz, t_sz), 0)
    jt = lax.broadcasted_iota(jnp.int32, (t_sz, t_sz), 1)
    shift_t = jnp.where(it == jt + 1, 1.0, 0.0).astype(f32)   # (S@A)[t]   = A[t-1]
    iu = lax.broadcasted_iota(jnp.int32, (u1_sz, u1_sz), 0)
    ju = lax.broadcasted_iota(jnp.int32, (u1_sz, u1_sz), 1)
    shift_u = jnp.where(ju == iu + 1, 1.0, 0.0).astype(f32)   # (A@S)[:,u] = A[:,u-1]

    # emission terms shifted once (borders -> NEG so boundary cells fall back
    # to the single valid predecessor).
    bl_sh = jnp.where(row_t == 0, NEG,
                      jnp.dot(shift_t, lp_blank, precision=hi,
                              preferred_element_type=f32))
    la_sh = jnp.where(col_u == 0, NEG,
                      jnp.dot(lp_label, shift_u, precision=hi,
                              preferred_element_type=f32))

    def _logaddexp(a, b):
        mm = jnp.maximum(a, b)
        return mm + jnp.log(jnp.exp(a - mm) + jnp.exp(b - mm))

    alpha0 = jnp.where(origin, 0.0, NEG)

    def dp_step(_, alpha):
        a_dn = jnp.dot(shift_t, alpha, precision=hi, preferred_element_type=f32)
        a_rt = jnp.dot(alpha, shift_u, precision=hi, preferred_element_type=f32)
        new = _logaddexp(a_dn + bl_sh, a_rt + la_sh)
        return jnp.where(origin, 0.0, new)

    # after k steps every cell with t+u <= k is final; need k = T+U1-2.
    alpha = lax.fori_loop(0, t_sz + u1_sz - 2, dp_step, alpha0)

    # ---- per-utterance NLL readout at dynamic (T_b - 1, U_b) ----
    t_last = ilen_ref[b_idx] - 1
    u_last = tlen_ref[b_idx]
    pick = (row_t == t_last) & (col_u == u_last)
    log_like = jnp.sum(jnp.where(pick, alpha + lp_blank, 0.0))
    # lane-dense scalar slab (128 lanes, unmasked store)
    loss_ref[...] = jnp.broadcast_to(-log_like, loss_ref.shape)


# ---------------- Transducer.forward ----------------
def transducer_forward(params, inputs, inputs_length, targets, targets_length):
    bn = inputs.shape[0]

    grid_spec = pltpu.PrefetchScalarGridSpec(
        num_scalar_prefetch=3,          # targets, input_lengths, target_lengths
        grid=(bn,),
        in_specs=[
            pl.BlockSpec((1, T, F_IN), lambda b, *_: (b, 0, 0)),   # inputs
            pl.BlockSpec((VOCAB, EMB), lambda b, *_: (0, 0)),      # embedding
            pl.BlockSpec((F_IN, H), lambda b, *_: (0, 0)),         # w_enc
            pl.BlockSpec((1, H), lambda b, *_: (0, 0)),            # b_enc
            pl.BlockSpec((EMB, H), lambda b, *_: (0, 0)),          # w_dec
            pl.BlockSpec((1, H), lambda b, *_: (0, 0)),            # b_dec
        ],
        out_specs=pl.BlockSpec((1, 1, 128), lambda b, *_: (b, 0, 0)),
    )

    losses = pl.pallas_call(
        _transducer_kernel,
        grid_spec=grid_spec,
        out_shape=jax.ShapeDtypeStruct((bn, 1, 128), jnp.float32),
        compiler_params=pltpu.CompilerParams(
            dimension_semantics=("parallel",),        # batch is independent
            vmem_limit_bytes=16 * 1024 * 1024,        # tiny kernel; explicit & v7x-safe
        ),
    )(targets.astype(jnp.int32), inputs_length.astype(jnp.int32),
      targets_length.astype(jnp.int32),
      inputs, params["embedding"], params["w_enc"], params["b_enc"],
      params["w_dec"], params["b_dec"])

    # RNNTLoss(reduction='mean'): mean over batch of per-utterance NLLs.
    return jnp.mean(losses[:, 0, 0])


def init_params(key):
    k1, k2, k3 = jax.random.split(key, 3)
    scale = 0.1
    return {
        "w_enc": scale * jax.random.normal(k1, (F_IN, H), jnp.float32),
        "b_enc": jnp.zeros((1, H), jnp.float32),
        "w_dec": scale * jax.random.normal(k2, (EMB, H), jnp.float32),
        "b_dec": jnp.zeros((1, H), jnp.float32),
        "embedding": scale * jax.random.normal(k3, (VOCAB, EMB), jnp.float32),
    }


if __name__ == "__main__":
    key = jax.random.PRNGKey(0)
    kp, kx, kt = jax.random.split(key, 3)

    params = init_params(kp)
    inputs = jax.random.normal(kx, (B, T, F_IN), jnp.float32)
    inputs_length = jnp.array([T, T - 2], dtype=jnp.int32)
    targets = jax.random.randint(kt, (B, U), 1, VOCAB, dtype=jnp.int32)
    targets_length = jnp.array([U, U - 1], dtype=jnp.int32)

    loss = jax.jit(transducer_forward)(
        params, inputs, inputs_length, targets, targets_length)
    jax.block_until_ready(loss)

    assert loss.shape == ()
    assert bool(jnp.isfinite(loss))
    print("KERNEL_OK")
</pallas_src>

<mosaic_0001>
module attributes {stable_mosaic.version = 11 : i64} {
  func.func @_transducer_kernel(%arg0: i32, %arg1: memref<2x4xi32, #tpu.memory_space<smem>>, %arg2: memref<2xi32, #tpu.memory_space<smem>>, %arg3: memref<2xi32, #tpu.memory_space<smem>>, %arg4: memref<1x8x16xf32, #tpu.memory_space<vmem>>, %arg5: memref<10x16xf32, #tpu.memory_space<vmem>>, %arg6: memref<16x32xf32, #tpu.memory_space<vmem>>, %arg7: memref<1x32xf32, #tpu.memory_space<vmem>>, %arg8: memref<16x32xf32, #tpu.memory_space<vmem>>, %arg9: memref<1x32xf32, #tpu.memory_space<vmem>>, %arg10: memref<1x1x128xf32, #tpu.memory_space<vmem>>) attributes {dimension_semantics = [#tpu.dimension_semantics<parallel>], iteration_bounds = array<i64: 2>, scalar_prefetch = 3 : i64, scratch_operands = 0 : i64, tpu.core_type = #tpu.core_type<tc>, window_params = [{transform_indices = @transform_0, window_bounds = array<i64: 1, 8, 16>}, {pipeline_mode = #tpu.pipeline_mode<synchronous>, transform_indices = @transform_1, window_bounds = array<i64: 10, 16>}, {pipeline_mode = #tpu.pipeline_mode<synchronous>, transform_indices = @transform_2, window_bounds = array<i64: 16, 32>}, {pipeline_mode = #tpu.pipeline_mode<synchronous>, transform_indices = @transform_3, window_bounds = array<i64: 1, 32>}, {pipeline_mode = #tpu.pipeline_mode<synchronous>, transform_indices = @transform_4, window_bounds = array<i64: 16, 32>}, {pipeline_mode = #tpu.pipeline_mode<synchronous>, transform_indices = @transform_5, window_bounds = array<i64: 1, 32>}, {transform_indices = @transform_6, window_bounds = array<i64: 1, 1, 128>}]} {
    %c0 = arith.constant 0 : index
    %c0_0 = arith.constant 0 : index
    %c0_1 = arith.constant 0 : index
    %0 = vector.load %arg4[%c0, %c0_0, %c0_1] : memref<1x8x16xf32, #tpu.memory_space<vmem>>, vector<1x8x16xf32>
    %1 = vector.shape_cast %0 : vector<1x8x16xf32> to vector<8x16xf32>
    %2 = arith.truncf %1 : vector<8x16xf32> to vector<8x16xbf16>
    %c0_2 = arith.constant 0 : index
    %c0_3 = arith.constant 0 : index
    %3 = vector.load %arg6[%c0_2, %c0_3] : memref<16x32xf32, #tpu.memory_space<vmem>>, vector<16x32xf32>
    %4 = arith.truncf %3 : vector<16x32xf32> to vector<16x32xbf16>
    %cst = arith.constant dense<0.000000e+00> : vector<8x32xf32>
    %5 = tpu.matmul %2, %4, %cst {dimension_numbers = #tpu.dot_dimension_numbers<[1], [0], [0], [1], [0, 0, 1, 1], [], []>} : vector<8x16xbf16>, vector<16x32xbf16>, vector<8x32xf32> -> vector<8x32xf32>
    %c0_4 = arith.constant 0 : index
    %c0_5 = arith.constant 0 : index
    %6 = vector.load %arg7[%c0_4, %c0_5] : memref<1x32xf32, #tpu.memory_space<vmem>>, vector<1x32xf32>
    %7 = vector.broadcast %6 : vector<1x32xf32> to vector<8x32xf32>
    %8 = arith.addf %5, %7 : vector<8x32xf32>
    %9 = math.tanh %8 : vector<8x32xf32>
    %10 = tpu.iota {dimensions = array<i32: 0>} : vector<5x10xi32>
    %11 = tpu.iota {dimensions = array<i32: 1>} : vector<5x10xi32>
    %c0_i32 = arith.constant 0 : i32
    %12 = vector.broadcast %c0_i32 : i32 to vector<5x10xi32>
    %13 = arith.cmpi eq, %10, %12 : vector<5x10xi32>
    %c0_i32_6 = arith.constant 0 : i32
    %14 = vector.broadcast %c0_i32_6 : i32 to vector<5x10xi32>
    %15 = arith.cmpi eq, %11, %14 : vector<5x10xi32>
    %16 = arith.andi %13, %15 : vector<5x10xi1>
    %cst_7 = arith.constant 1.000000e+00 : f32
    %cst_8 = arith.constant 0.000000e+00 : f32
    %17 = vector.broadcast %cst_7 : f32 to vector<5x10xf32>
    %18 = vector.broadcast %cst_8 : f32 to vector<5x10xf32>
    %19 = arith.select %16, %17, %18 : vector<5x10xi1>, vector<5x10xf32>
    %20 = arith.index_cast %arg0 : i32 to index
    %c0_9 = arith.constant 0 : index
    %21 = memref.load %arg1[%20, %c0_9] : memref<2x4xi32, #tpu.memory_space<smem>>
    %c1_i32 = arith.constant 1 : i32
    %22 = vector.broadcast %c1_i32 : i32 to vector<5x10xi32>
    %23 = arith.cmpi eq, %10, %22 : vector<5x10xi32>
    %24 = vector.broadcast %21 : i32 to vector<5x10xi32>
    %25 = arith.cmpi eq, %11, %24 : vector<5x10xi32>
    %26 = arith.andi %23, %25 : vector<5x10xi1>
    %cst_10 = arith.constant 1.000000e+00 : f32
    %27 = vector.broadcast %cst_10 : f32 to vector<5x10xf32>
    %28 = arith.select %26, %27, %19 : vector<5x10xi1>, vector<5x10xf32>
    %29 = arith.index_cast %arg0 : i32 to index
    %c1 = arith.constant 1 : index
    %30 = memref.load %arg1[%29, %c1] : memref<2x4xi32, #tpu.memory_space<smem>>
    %c2_i32 = arith.constant 2 : i32
    %31 = vector.broadcast %c2_i32 : i32 to vector<5x10xi32>
    %32 = arith.cmpi eq, %10, %31 : vector<5x10xi32>
    %33 = vector.broadcast %30 : i32 to vector<5x10xi32>
    %34 = arith.cmpi eq, %11, %33 : vector<5x10xi32>
    %35 = arith.andi %32, %34 : vector<5x10xi1>
    %cst_11 = arith.constant 1.000000e+00 : f32
    %36 = vector.broadcast %cst_11 : f32 to vector<5x10xf32>
    %37 = arith.select %35, %36, %28 : vector<5x10xi1>, vector<5x10xf32>
    %38 = arith.index_cast %arg0 : i32 to index
    %c2 = arith.constant 2 : index
    %39 = memref.load %arg1[%38, %c2] : memref<2x4xi32, #tpu.memory_space<smem>>
    %c3_i32 = arith.constant 3 : i32
    %40 = vector.broadcast %c3_i32 : i32 to vector<5x10xi32>
    %41 = arith.cmpi eq, %10, %40 : vector<5x10xi32>
    %42 = vector.broadcast %39 : i32 to vector<5x10xi32>
    %43 = arith.cmpi eq, %11, %42 : vector<5x10xi32>
    %44 = arith.andi %41, %43 : vector<5x10xi1>
    %cst_12 = arith.constant 1.000000e+00 : f32
    %45 = vector.broadcast %cst_12 : f32 to vector<5x10xf32>
    %46 = arith.select %44, %45, %37 : vector<5x10xi1>, vector<5x10xf32>
    %47 = arith.index_cast %arg0 : i32 to index
    %c3 = arith.constant 3 : index
    %48 = memref.load %arg1[%47, %c3] : memref<2x4xi32, #tpu.memory_space<smem>>
    %c4_i32 = arith.constant 4 : i32
    %49 = vector.broadcast %c4_i32 : i32 to vector<5x10xi32>
    %50 = arith.cmpi eq, %10, %49 : vector<5x10xi32>
    %51 = vector.broadcast %48 : i32 to vector<5x10xi32>
    %52 = arith.cmpi eq, %11, %51 : vector<5x10xi32>
    %53 = arith.andi %50, %52 : vector<5x10xi1>
    %cst_13 = arith.constant 1.000000e+00 : f32
    %54 = vector.broadcast %cst_13 : f32 to vector<5x10xf32>
    %55 = arith.select %53, %54, %46 : vector<5x10xi1>, vector<5x10xf32>
    %c0_14 = arith.constant 0 : index
    %c0_15 = arith.constant 0 : index
    %56 = vector.load %arg5[%c0_14, %c0_15] : memref<10x16xf32, #tpu.memory_space<vmem>>, vector<10x16xf32>
    %cst_16 = arith.constant dense<0.000000e+00> : vector<5x16xf32>
    %57 = tpu.matmul %55, %56, %cst_16 {dimension_numbers = #tpu.dot_dimension_numbers<[1], [0], [0], [1], [0, 0, 1, 1], [], []>, precision = #tpu.contract_precision<fp32>} : vector<5x10xf32>, vector<10x16xf32>, vector<5x16xf32> -> vector<5x16xf32>
    %58 = arith.truncf %57 : vector<5x16xf32> to vector<5x16xbf16>
    %c0_17 = arith.constant 0 : index
    %c0_18 = arith.constant 0 : index
    %59 = vector.load %arg8[%c0_17, %c0_18] : memref<16x32xf32, #tpu.memory_space<vmem>>, vector<16x32xf32>
    %60 = arith.truncf %59 : vector<16x32xf32> to vector<16x32xbf16>
    %cst_19 = arith.constant dense<0.000000e+00> : vector<5x32xf32>
    %61 = tpu.matmul %58, %60, %cst_19 {dimension_numbers = #tpu.dot_dimension_numbers<[1], [0], [0], [1], [0, 0, 1, 1], [], []>} : vector<5x16xbf16>, vector<16x32xbf16>, vector<5x32xf32> -> vector<5x32xf32>
    %c0_20 = arith.constant 0 : index
    %c0_21 = arith.constant 0 : index
    %62 = vector.load %arg9[%c0_20, %c0_21] : memref<1x32xf32, #tpu.memory_space<vmem>>, vector<1x32xf32>
    %63 = vector.broadcast %62 : vector<1x32xf32> to vector<5x32xf32>
    %64 = arith.addf %61, %63 : vector<5x32xf32>
    %65 = math.tanh %64 : vector<5x32xf32>
    %66 = vector.shape_cast %9 : vector<8x32xf32> to vector<8x1x32xf32>
    %67 = vector.shape_cast %65 : vector<5x32xf32> to vector<1x5x32xf32>
    %68 = vector.broadcast %66 : vector<8x1x32xf32> to vector<8x5x32xf32>
    %69 = vector.broadcast %67 : vector<1x5x32xf32> to vector<8x5x32xf32>
    %70 = arith.addf %68, %69 : vector<8x5x32xf32>
    %cst_22 = arith.constant dense<0xFF800000> : vector<8x5xf32>
    %71 = vector.multi_reduction <maximumf>, %70, %cst_22 [2] : vector<8x5x32xf32> to vector<8x5xf32>
    %72 = vector.shape_cast %71 : vector<8x5xf32> to vector<8x5x1xf32>
    %73 = vector.broadcast %72 : vector<8x5x1xf32> to vector<8x5x32xf32>
    %74 = arith.subf %70, %73 : vector<8x5x32xf32>
    %75 = math.exp %74 : vector<8x5x32xf32>
    %cst_23 = arith.constant dense<0.000000e+00> : vector<8x5xf32>
    %76 = vector.multi_reduction <add>, %75, %cst_23 [2] : vector<8x5x32xf32> to vector<8x5xf32>
    %77 = vector.shape_cast %76 : vector<8x5xf32> to vector<8x5x1xf32>
    %78 = math.log %77 : vector<8x5x1xf32>
    %79 = arith.addf %72, %78 : vector<8x5x1xf32>
    %80 = vector.broadcast %79 : vector<8x5x1xf32> to vector<8x5x32xf32>
    %81 = arith.subf %70, %80 : vector<8x5x32xf32>
    %82 = tpu.iota {dimensions = array<i32: 2>} : vector<8x5x32xi32>
    %c0_i32_24 = arith.constant 0 : i32
    %83 = vector.broadcast %c0_i32_24 : i32 to vector<8x5x32xi32>
    %84 = arith.cmpi eq, %82, %83 : vector<8x5x32xi32>
    %cst_25 = arith.constant 0.000000e+00 : f32
    %85 = vector.broadcast %cst_25 : f32 to vector<8x5x32xf32>
    %86 = arith.select %84, %81, %85 : vector<8x5x32xi1>, vector<8x5x32xf32>
    %cst_26 = arith.constant dense<0.000000e+00> : vector<8x5xf32>
    %87 = vector.multi_reduction <add>, %86, %cst_26 [2] : vector<8x5x32xf32> to vector<8x5xf32>
    %88 = tpu.iota {dimensions = array<i32: 0>} : vector<5x32xi32>
    %89 = tpu.iota {dimensions = array<i32: 1>} : vector<5x32xi32>
    %cst_27 = arith.constant 0.000000e+00 : f32
    %90 = vector.broadcast %cst_27 : f32 to vector<5x32xf32>
    %91 = arith.index_cast %arg0 : i32 to index
    %c0_28 = arith.constant 0 : index
    %92 = memref.load %arg1[%91, %c0_28] : memref<2x4xi32, #tpu.memory_space<smem>>
    %c0_i32_29 = arith.constant 0 : i32
    %93 = vector.broadcast %c0_i32_29 : i32 to vector<5x32xi32>
    %94 = arith.cmpi eq, %88, %93 : vector<5x32xi32>
    %95 = vector.broadcast %92 : i32 to vector<5x32xi32>
    %96 = arith.cmpi eq, %89, %95 : vector<5x32xi32>
    %97 = arith.andi %94, %96 : vector<5x32xi1>
    %cst_30 = arith.constant 1.000000e+00 : f32
    %98 = vector.broadcast %cst_30 : f32 to vector<5x32xf32>
    %99 = arith.select %97, %98, %90 : vector<5x32xi1>, vector<5x32xf32>
    %100 = arith.index_cast %arg0 : i32 to index
    %c1_31 = arith.constant 1 : index
    %101 = memref.load %arg1[%100, %c1_31] : memref<2x4xi32, #tpu.memory_space<smem>>
    %c1_i32_32 = arith.constant 1 : i32
    %102 = vector.broadcast %c1_i32_32 : i32 to vector<5x32xi32>
    %103 = arith.cmpi eq, %88, %102 : vector<5x32xi32>
    %104 = vector.broadcast %101 : i32 to vector<5x32xi32>
    %105 = arith.cmpi eq, %89, %104 : vector<5x32xi32>
    %106 = arith.andi %103, %105 : vector<5x32xi1>
    %cst_33 = arith.constant 1.000000e+00 : f32
    %107 = vector.broadcast %cst_33 : f32 to vector<5x32xf32>
    %108 = arith.select %106, %107, %99 : vector<5x32xi1>, vector<5x32xf32>
    %109 = arith.index_cast %arg0 : i32 to index
    %c2_34 = arith.constant 2 : index
    %110 = memref.load %arg1[%109, %c2_34] : memref<2x4xi32, #tpu.memory_space<smem>>
    %c2_i32_35 = arith.constant 2 : i32
    %111 = vector.broadcast %c2_i32_35 : i32 to vector<5x32xi32>
    %112 = arith.cmpi eq, %88, %111 : vector<5x32xi32>
    %113 = vector.broadcast %110 : i32 to vector<5x32xi32>
    %114 = arith.cmpi eq, %89, %113 : vector<5x32xi32>
    %115 = arith.andi %112, %114 : vector<5x32xi1>
    %cst_36 = arith.constant 1.000000e+00 : f32
    %116 = vector.broadcast %cst_36 : f32 to vector<5x32xf32>
    %117 = arith.select %115, %116, %108 : vector<5x32xi1>, vector<5x32xf32>
    %118 = arith.index_cast %arg0 : i32 to index
    %c3_37 = arith.constant 3 : index
    %119 = memref.load %arg1[%118, %c3_37] : memref<2x4xi32, #tpu.memory_space<smem>>
    %c3_i32_38 = arith.constant 3 : i32
    %120 = vector.broadcast %c3_i32_38 : i32 to vector<5x32xi32>
    %121 = arith.cmpi eq, %88, %120 : vector<5x32xi32>
    %122 = vector.broadcast %119 : i32 to vector<5x32xi32>
    %123 = arith.cmpi eq, %89, %122 : vector<5x32xi32>
    %124 = arith.andi %121, %123 : vector<5x32xi1>
    %cst_39 = arith.constant 1.000000e+00 : f32
    %125 = vector.broadcast %cst_39 : f32 to vector<5x32xf32>
    %126 = arith.select %124, %125, %117 : vector<5x32xi1>, vector<5x32xf32>
    %127 = vector.shape_cast %126 : vector<5x32xf32> to vector<1x5x32xf32>
    %128 = vector.broadcast %127 : vector<1x5x32xf32> to vector<8x5x32xf32>
    %129 = arith.mulf %81, %128 : vector<8x5x32xf32>
    %cst_40 = arith.constant dense<0.000000e+00> : vector<8x5xf32>
    %130 = vector.multi_reduction <add>, %129, %cst_40 [2] : vector<8x5x32xf32> to vector<8x5xf32>
    %131 = tpu.iota {dimensions = array<i32: 0>} : vector<8x5xi32>
    %132 = tpu.iota {dimensions = array<i32: 1>} : vector<8x5xi32>
    %c0_i32_41 = arith.constant 0 : i32
    %133 = vector.broadcast %c0_i32_41 : i32 to vector<8x5xi32>
    %134 = arith.cmpi eq, %131, %133 : vector<8x5xi32>
    %c0_i32_42 = arith.constant 0 : i32
    %135 = vector.broadcast %c0_i32_42 : i32 to vector<8x5xi32>
    %136 = arith.cmpi eq, %132, %135 : vector<8x5xi32>
    %137 = arith.andi %134, %136 : vector<8x5xi1>
    %138 = tpu.iota {dimensions = array<i32: 0>} : vector<8x8xi32>
    %139 = tpu.iota {dimensions = array<i32: 1>} : vector<8x8xi32>
    %c1_i32_43 = arith.constant 1 : i32
    %140 = vector.broadcast %c1_i32_43 : i32 to vector<8x8xi32>
    %141 = arith.addi %139, %140 : vector<8x8xi32>
    %142 = arith.cmpi eq, %138, %141 : vector<8x8xi32>
    %cst_44 = arith.constant 1.000000e+00 : f32
    %cst_45 = arith.constant 0.000000e+00 : f32
    %143 = vector.broadcast %cst_44 : f32 to vector<8x8xf32>
    %144 = vector.broadcast %cst_45 : f32 to vector<8x8xf32>
    %145 = arith.select %142, %143, %144 : vector<8x8xi1>, vector<8x8xf32>
    %146 = tpu.iota {dimensions = array<i32: 0>} : vector<5x5xi32>
    %147 = tpu.iota {dimensions = array<i32: 1>} : vector<5x5xi32>
    %c1_i32_46 = arith.constant 1 : i32
    %148 = vector.broadcast %c1_i32_46 : i32 to vector<5x5xi32>
    %149 = arith.addi %146, %148 : vector<5x5xi32>
    %150 = arith.cmpi eq, %147, %149 : vector<5x5xi32>
    %cst_47 = arith.constant 1.000000e+00 : f32
    %cst_48 = arith.constant 0.000000e+00 : f32
    %151 = vector.broadcast %cst_47 : f32 to vector<5x5xf32>
    %152 = vector.broadcast %cst_48 : f32 to vector<5x5xf32>
    %153 = arith.select %150, %151, %152 : vector<5x5xi1>, vector<5x5xf32>
    %c0_i32_49 = arith.constant 0 : i32
    %154 = vector.broadcast %c0_i32_49 : i32 to vector<8x5xi32>
    %155 = arith.cmpi eq, %131, %154 : vector<8x5xi32>
    %cst_50 = arith.constant dense<0.000000e+00> : vector<8x5xf32>
    %156 = tpu.matmul %145, %87, %cst_50 {dimension_numbers = #tpu.dot_dimension_numbers<[1], [0], [0], [1], [0, 0, 1, 1], [], []>, precision = #tpu.contract_precision<fp32>} : vector<8x8xf32>, vector<8x5xf32>, vector<8x5xf32> -> vector<8x5xf32>
    %cst_51 = arith.constant -1.000000e+30 : f32
    %157 = vector.broadcast %cst_51 : f32 to vector<8x5xf32>
    %158 = arith.select %155, %157, %156 : vector<8x5xi1>, vector<8x5xf32>
    %c0_i32_52 = arith.constant 0 : i32
    %159 = vector.broadcast %c0_i32_52 : i32 to vector<8x5xi32>
    %160 = arith.cmpi eq, %132, %159 : vector<8x5xi32>
    %cst_53 = arith.constant dense<0.000000e+00> : vector<8x5xf32>
    %161 = tpu.matmul %130, %153, %cst_53 {dimension_numbers = #tpu.dot_dimension_numbers<[1], [0], [0], [1], [0, 0, 1, 1], [], []>, precision = #tpu.contract_precision<fp32>} : vector<8x5xf32>, vector<5x5xf32>, vector<8x5xf32> -> vector<8x5xf32>
    %cst_54 = arith.constant -1.000000e+30 : f32
    %162 = vector.broadcast %cst_54 : f32 to vector<8x5xf32>
    %163 = arith.select %160, %162, %161 : vector<8x5xi1>, vector<8x5xf32>
    %cst_55 = arith.constant 0.000000e+00 : f32
    %cst_56 = arith.constant -1.000000e+30 : f32
    %164 = vector.broadcast %cst_55 : f32 to vector<8x5xf32>
    %165 = vector.broadcast %cst_56 : f32 to vector<8x5xf32>
    %166 = arith.select %137, %164, %165 : vector<8x5xi1>, vector<8x5xf32>
    %c0_i32_57 = arith.constant 0 : i32
    %c11_i32 = arith.constant 11 : i32
    %167 = arith.addi %c0_i32_57, %c11_i32 : i32
    %c1_i32_58 = arith.constant 1 : i32
    %168 = scf.for %arg11 = %c0_i32_57 to %167 step %c1_i32_58 iter_args(%arg12 = %166) -> (vector<8x5xf32>)  : i32 {
      %cst_66 = arith.constant dense<0.000000e+00> : vector<8x5xf32>
      %189 = tpu.matmul %145, %arg12, %cst_66 {dimension_numbers = #tpu.dot_dimension_numbers<[1], [0], [0], [1], [0, 0, 1, 1], [], []>, precision = #tpu.contract_precision<fp32>} : vector<8x8xf32>, vector<8x5xf32>, vector<8x5xf32> -> vector<8x5xf32>
      %cst_67 = arith.constant dense<0.000000e+00> : vector<8x5xf32>
      %190 = tpu.matmul %arg12, %153, %cst_67 {dimension_numbers = #tpu.dot_dimension_numbers<[1], [0], [0], [1], [0, 0, 1, 1], [], []>, precision = #tpu.contract_precision<fp32>} : vector<8x5xf32>, vector<5x5xf32>, vector<8x5xf32> -> vector<8x5xf32>
      %191 = arith.addf %189, %158 : vector<8x5xf32>
      %192 = arith.addf %190, %163 : vector<8x5xf32>
      %193 = arith.maximumf %191, %192 : vector<8x5xf32>
      %194 = arith.subf %191, %193 : vector<8x5xf32>
      %195 = math.exp %194 : vector<8x5xf32>
      %196 = arith.subf %192, %193 : vector<8x5xf32>
      %197 = math.exp %196 : vector<8x5xf32>
      %198 = arith.addf %195, %197 : vector<8x5xf32>
      %199 = math.log %198 : vector<8x5xf32>
      %200 = arith.addf %193, %199 : vector<8x5xf32>
      %cst_68 = arith.constant 0.000000e+00 : f32
      %201 = vector.broadcast %cst_68 : f32 to vector<8x5xf32>
      %202 = arith.select %137, %201, %200 : vector<8x5xi1>, vector<8x5xf32>
      scf.yield %202 : vector<8x5xf32>
    }
    %169 = arith.index_cast %arg0 : i32 to index
    %170 = memref.load %arg2[%169] : memref<2xi32, #tpu.memory_space<smem>>
    %c1_i32_59 = arith.constant 1 : i32
    %171 = arith.subi %170, %c1_i32_59 : i32
    %172 = arith.index_cast %arg0 : i32 to index
    %173 = memref.load %arg3[%172] : memref<2xi32, #tpu.memory_space<smem>>
    %174 = vector.broadcast %171 : i32 to vector<8x5xi32>
    %175 = arith.cmpi eq, %131, %174 : vector<8x5xi32>
    %176 = vector.broadcast %173 : i32 to vector<8x5xi32>
    %177 = arith.cmpi eq, %132, %176 : vector<8x5xi32>
    %178 = arith.andi %175, %177 : vector<8x5xi1>
    %179 = arith.addf %168, %87 : vector<8x5xf32>
    %cst_60 = arith.constant 0.000000e+00 : f32
    %180 = vector.broadcast %cst_60 : f32 to vector<8x5xf32>
    %181 = arith.select %178, %179, %180 : vector<8x5xi1>, vector<8x5xf32>
    %182 = vector.shape_cast %181 : vector<8x5xf32> to vector<1x8x5xf32>
    %cst_61 = arith.constant dense<0.000000e+00> : vector<1xf32>
    %183 = vector.multi_reduction <add>, %182, %cst_61 [1, 2] : vector<1x8x5xf32> to vector<1xf32>
    %184 = vector.shape_cast %183 : vector<1xf32> to vector<1x1x1xf32>
    %185 = vector.extract %184[0, 0, 0] : f32 from vector<1x1x1xf32>
    %cst_62 = arith.constant 0.000000e+00 : f32
    %186 = arith.subf %cst_62, %185 : f32
    %187 = vector.broadcast %186 : f32 to vector<1x1x128xf32>
    %c0_63 = arith.constant 0 : index
    %c0_64 = arith.constant 0 : index
    %c0_65 = arith.constant 0 : index
    %188 = vector.load %arg10[%c0_63, %c0_64, %c0_65] : memref<1x1x128xf32, #tpu.memory_space<vmem>>, vector<1x1x128xf32>
    tpu.vector_store %arg10[%c0_63, %c0_64, %c0_65], %187 {strides = array<i32>} : memref<1x1x128xf32, #tpu.memory_space<vmem>>, vector<1x1x128xf32>,
    return
  }
  func.func @transform_0(%arg0: i32, %arg1: memref<2x4xi32, #tpu.memory_space<smem>>, %arg2: memref<2xi32, #tpu.memory_space<smem>>, %arg3: memref<2xi32, #tpu.memory_space<smem>>) -> (i32, i32, i32) {
    %c0_i32 = arith.constant 0 : i32
    %c0_i32_0 = arith.constant 0 : i32
    %c0_i32_1 = arith.constant 0 : i32
    return %arg0, %c0_i32, %c0_i32_0 : i32, i32, i32
  }
  func.func @transform_1(%arg0: i32, %arg1: memref<2x4xi32, #tpu.memory_space<smem>>, %arg2: memref<2xi32, #tpu.memory_space<smem>>, %arg3: memref<2xi32, #tpu.memory_space<smem>>) -> (i32, i32) {
    %c0_i32 = arith.constant 0 : i32
    %c0_i32_0 = arith.constant 0 : i32
    %c0_i32_1 = arith.constant 0 : i32
    return %c0_i32, %c0_i32_0 : i32, i32
  }
  func.func @transform_2(%arg0: i32, %arg1: memref<2x4xi32, #tpu.memory_space<smem>>, %arg2: memref<2xi32, #tpu.memory_space<smem>>, %arg3: memref<2xi32, #tpu.memory_space<smem>>) -> (i32, i32) {
    %c0_i32 = arith.constant 0 : i32
    %c0_i32_0 = arith.constant 0 : i32
    %c0_i32_1 = arith.constant 0 : i32
    return %c0_i32, %c0_i32_0 : i32, i32
  }
  func.func @transform_3(%arg0: i32, %arg1: memref<2x4xi32, #tpu.memory_space<smem>>, %arg2: memref<2xi32, #tpu.memory_space<smem>>, %arg3: memref<2xi32, #tpu.memory_space<smem>>) -> (i32, i32) {
    %c0_i32 = arith.constant 0 : i32
    %c0_i32_0 = arith.constant 0 : i32
    %c0_i32_1 = arith.constant 0 : i32
    return %c0_i32, %c0_i32_0 : i32, i32
  }
  func.func @transform_4(%arg0: i32, %arg1: memref<2x4xi32, #tpu.memory_space<smem>>, %arg2: memref<2xi32, #tpu.memory_space<smem>>, %arg3: memref<2xi32, #tpu.memory_space<smem>>) -> (i32, i32) {
    %c0_i32 = arith.constant 0 : i32
    %c0_i32_0 = arith.constant 0 : i32
    %c0_i32_1 = arith.constant 0 : i32
    return %c0_i32, %c0_i32_0 : i32, i32
  }
  func.func @transform_5(%arg0: i32, %arg1: memref<2x4xi32, #tpu.memory_space<smem>>, %arg2: memref<2xi32, #tpu.memory_space<smem>>, %arg3: memref<2xi32, #tpu.memory_space<smem>>) -> (i32, i32) {
    %c0_i32 = arith.constant 0 : i32
    %c0_i32_0 = arith.constant 0 : i32
    %c0_i32_1 = arith.constant 0 : i32
    return %c0_i32, %c0_i32_0 : i32, i32
  }
  func.func @transform_6(%arg0: i32, %arg1: memref<2x4xi32, #tpu.memory_space<smem>>, %arg2: memref<2xi32, #tpu.memory_space<smem>>, %arg3: memref<2xi32, #tpu.memory_space<smem>>) -> (i32, i32, i32) {
    %c0_i32 = arith.constant 0 : i32
    %c0_i32_0 = arith.constant 0 : i32
    %c0_i32_1 = arith.constant 0 : i32
    return %arg0, %c0_i32, %c0_i32_0 : i32, i32, i32
  }
}

</mosaic_0001>

<llo_original>
// kernel: transducer_forward.1
$region0: #{transducer_forward.1}
  #allocation0 [shape = 'u32[]', space=smem, size = 0x4, offset = 0x4, fixed_abs, tag = 'smem constant byte address 0x4 - core index']
  #allocation1 [shape = 'u32[144,128]{1,0:T(1,128)}', space=vmem, size = 0x12000, scoped, tag = 'internal scratch']
  #allocation2 [shape = 's32[1]{0}', space=sflag, size = 0x4, scoped, tag = 'scoped memory for transducer_forward.1']
  #allocation3 [shape = 'u8[1024]{0}', space=smem, size = 0x400, scoped, tag = 'prefetched SMEM operand 0']
  #allocation4 [shape = 'u8[512]{0}', space=smem, size = 0x200, scoped, tag = 'prefetched SMEM operand 1']
  #allocation5 [shape = 'u8[512]{0}', space=smem, size = 0x200, scoped, tag = 'prefetched SMEM operand 2']
  %s0 = inlined_call_operand.vmem [shape: s32[2,4], index: 0, kind: input, shape index: {}]
  %s1 = inlined_call_operand.vmem [shape: s32[2], index: 1, kind: input, shape index: {}]
  %s2 = inlined_call_operand.vmem [shape: s32[2], index: 2, kind: input, shape index: {}]
  %s3 = inlined_call_operand.vmem [shape: f32[2,8,16], index: 3, kind: input, shape index: {}]
  %s4 = inlined_call_operand.hbm [shape: f32[10,16], index: 4, kind: input, shape index: {}]
  %s5 = inlined_call_operand.hbm [shape: f32[16,32], index: 5, kind: input, shape index: {}]
  %s6 = inlined_call_operand.hbm [shape: f32[1,32], index: 6, kind: input, shape index: {}]
  %s7 = inlined_call_operand.hbm [shape: f32[16,32], index: 7, kind: input, shape index: {}]
  %s8 = inlined_call_operand.hbm [shape: f32[1,32], index: 8, kind: input, shape index: {}]
  %s9 = inlined_call_operand.vmem [shape: f32[2,1,128], index: 9, kind: output, shape index: {}]
  %s10 = sld [smem:[#allocation0]]
  $region84: #{transducer_forward.1} parent=0
    _
  %s12 = ssub.s32 1, %s10
  %s13 = scalar_select 0, %s12, %s10
  %s14 = sshll.u32 %s0, 4
  %s15 = int_to_ptr.vmem [resolvable:$true] %s14
  %17 = dma.vmem_to_smem %s15, 32, [#allocation3], [#allocation2]
  %s18 = sshll.u32 %s1, 4
  %s19 = int_to_ptr.vmem [resolvable:$true] %s18
  %21 = dma.vmem_to_smem %s19, 16, [#allocation4], [#allocation2]
  %s22 = sshll.u32 %s2, 4
  %s23 = int_to_ptr.vmem [resolvable:$true] %s22
  %25 = dma.vmem_to_smem %s23, 16, [#allocation5], [#allocation2]
  %26 = dma.done [#allocation2], 64
  %27 = sfence
  $region1: #{transducer_forward.1} parent=0
    #allocation6 [shape = 'u8[8192]{0}', space=vmem, size = 0x2000, scoped, tag = 'input window, operand 4, single buffered']
    #allocation7 [shape = 's32[2]{0}', space=sflag, size = 0x8, scoped, tag = 'scoped memory for transducer_forward.1']
    #allocation8 [shape = 'u8[8192]{0}', space=vmem, size = 0x2000, scoped, tag = 'input window, operand 5, single buffered']
    #allocation9 [shape = 's32[1]{0}', space=sflag, size = 0x4, scoped, tag = 'scoped memory for transducer_forward.1']
    #allocation10 [shape = 'u8[512]{0}', space=vmem, size = 0x400, scoped, tag = 'input window, operand 6, single buffered']
    #allocation11 [shape = 'u8[8192]{0}', space=vmem, size = 0x2000, scoped, tag = 'input window, operand 7, single buffered']
    #allocation12 [shape = 's32[1]{0}', space=sflag, size = 0x4, scoped, tag = 'scoped memory for transducer_forward.1']
    #allocation13 [shape = 'u8[512]{0}', space=vmem, size = 0x400, scoped, tag = 'input window, operand 8, single buffered']
    %28 = vsyncpa [#allocation7], 0
    %29 = vsyncpa [#allocation9], 0
    %30 = vsyncpa [#allocation12], 0
    loop: start=0, step=1, limit=4
    $region2: #{transducer_forward.1} parent=1 // loop_pre_header
      _
    $region3: #{transducer_forward.1} parent=1 // loop_header
      %s32 = sphi 0, %s36
      %p33 = scmp.ge.s32.totalorder %s32, 4
      %s42 = sphi 0, %s44
      %s45 = sphi 0, %s42
      %s46 = sphi 0, %s45
      %s62 = sphi 0, %s46
      %s66 = sphi 0, %s66
      %s68 = sphi 0, %s66
      %s69 = sphi 0, %s68
      %s83 = sphi 0, %s69
      %s87 = sphi 0, %s87
      %s89 = sphi 0, %s87
      %s90 = sphi 0, %s89
      %s104 = sphi 0, %s90
      %s108 = sphi 0, %s108
      %s110 = sphi 0, %s108
      %s111 = sphi 0, %s110
      %s125 = sphi 0, %s111
      %s129 = sphi 0, %s129
      %s131 = sphi 0, %s129
      %s132 = sphi 0, %s131
      %s146 = sphi 0, %s132
      %s150 = sphi 0, %s150
      %s152 = sphi 0, %s150
      %s153 = sphi 0, %s152
      %s167 = sphi 0, %s153
      %s173 = sphi 0, %s175
      %s176 = sphi 0, %s173
      %s177 = sphi 0, %s176
      %s193 = sphi 0, %s177
    $region4: #{transducer_forward.1} parent=1 // loop_header_branch
      %35 = sbr.rel (%p33) target = $region8
    $region5: #{transducer_forward.1} parent=1 // loop_body
      %s37 = ssub.s32 %s32, 1
      %s38 = ssub.s32 %s32, 2
      %s39 = sadd.s32 %s32, 1
      %s40 = ssub.s32 %s32, %s39
      %p41 = scmp.eq.s32.totalorder %s40, 0
      %s43 = sadd.s32 %s42, 1
      %s44 = scalar_select %p41, %s42, %s43
      %p47 = pneg %p41
      %p48 = scmp.eq.s32.totalorder %s32, 1
      %p49 = por %p47, %p48
      %p50 = scmp.ne.s32.totalorder %s42, %s45
      %p51 = scmp.eq.s32.totalorder %s32, 0
      %p52 = por %p50, %p51
      %p53 = scmp.ne.s32.totalorder %s42, %s45
      %p54 = scmp.eq.s32.totalorder %s37, 1
      %p55 = por %p53, %p54
      %p56 = scmp.ne.s32.totalorder %s45, %s46
      %p57 = scmp.eq.s32.totalorder %s37, 0
      %p58 = por %p56, %p57
      %p59 = scmp.ne.s32.totalorder %s45, %s46
      %p60 = scmp.eq.s32.totalorder %s38, 1
      %p61 = por %p59, %p60
      %p63 = scmp.ne.s32.totalorder %s46, %s62
      %p64 = scmp.eq.s32.totalorder %s38, 0
      %p65 = por %p63, %p64
      %s67 = sadd.s32 %s66, 1
      %p70 = scmp.eq.s32.totalorder %s32, 1
      %p71 = scmp.ne.s32.totalorder %s66, %s68
      %p72 = scmp.eq.s32.totalorder %s32, 0
      %p73 = por %p71, %p72
      %p74 = scmp.ne.s32.totalorder %s66, %s68
      %p75 = scmp.eq.s32.totalorder %s37, 1
      %p76 = por %p74, %p75
      %p77 = scmp.ne.s32.totalorder %s68, %s69
      %p78 = scmp.eq.s32.totalorder %s37, 0
      %p79 = por %p77, %p78
      %p80 = scmp.ne.s32.totalorder %s68, %s69
      %p81 = scmp.eq.s32.totalorder %s38, 1
      %p82 = por %p80, %p81
      %p84 = scmp.ne.s32.totalorder %s69, %s83
      %p85 = scmp.eq.s32.totalorder %s38, 0
      %p86 = por %p84, %p85
      %s88 = sadd.s32 %s87, 1
      %p91 = scmp.eq.s32.totalorder %s32, 1
      %p92 = scmp.ne.s32.totalorder %s87, %s89
      %p93 = scmp.eq.s32.totalorder %s32, 0
      %p94 = por %p92, %p93
      %p95 = scmp.ne.s32.totalorder %s87, %s89
      %p96 = scmp.eq.s32.totalorder %s37, 1
      %p97 = por %p95, %p96
      %p98 = scmp.ne.s32.totalorder %s89, %s90
      %p99 = scmp.eq.s32.totalorder %s37, 0
      %p100 = por %p98, %p99
      %p101 = scmp.ne.s32.totalorder %s89, %s90
      %p102 = scmp.eq.s32.totalorder %s38, 1
      %p103 = por %p101, %p102
      %p105 = scmp.ne.s32.totalorder %s90, %s104
      %p106 = scmp.eq.s32.totalorder %s38, 0
      %p107 = por %p105, %p106
      %s109 = sadd.s32 %s108, 1
      %p112 = scmp.eq.s32.totalorder %s32, 1
      %p113 = scmp.ne.s32.totalorder %s108, %s110
      %p114 = scmp.eq.s32.totalorder %s32, 0
      %p115 = por %p113, %p114
      %p116 = scmp.ne.s32.totalorder %s108, %s110
      %p117 = scmp.eq.s32.totalorder %s37, 1
      %p118 = por %p116, %p117
      %p119 = scmp.ne.s32.totalorder %s110, %s111
      %p120 = scmp.eq.s32.totalorder %s37, 0
      %p121 = por %p119, %p120
      %p122 = scmp.ne.s32.totalorder %s110, %s111
      %p123 = scmp.eq.s32.totalorder %s38, 1
      %p124 = por %p122, %p123
      %p126 = scmp.ne.s32.totalorder %s111, %s125
      %p127 = scmp.eq.s32.totalorder %s38, 0
      %p128 = por %p126, %p127
      %s130 = sadd.s32 %s129, 1
      %p133 = scmp.eq.s32.totalorder %s32, 1
      %p134 = scmp.ne.s32.totalorder %s129, %s131
      %p135 = scmp.eq.s32.totalorder %s32, 0
      %p136 = por %p134, %p135
      %p137 = scmp.ne.s32.totalorder %s129, %s131
      %p138 = scmp.eq.s32.totalorder %s37, 1
      %p139 = por %p137, %p138
      %p140 = scmp.ne.s32.totalorder %s131, %s132
      %p141 = scmp.eq.s32.totalorder %s37, 0
      %p142 = por %p140, %p141
      %p143 = scmp.ne.s32.totalorder %s131, %s132
      %p144 = scmp.eq.s32.totalorder %s38, 1
      %p145 = por %p143, %p144
      %p147 = scmp.ne.s32.totalorder %s132, %s146
      %p148 = scmp.eq.s32.totalorder %s38, 0
      %p149 = por %p147, %p148
      %s151 = sadd.s32 %s150, 1
      %p154 = scmp.eq.s32.totalorder %s32, 1
      %p155 = scmp.ne.s32.totalorder %s150, %s152
      %p156 = scmp.eq.s32.totalorder %s32, 0
      %p157 = por %p155, %p156
      %p158 = scmp.ne.s32.totalorder %s150, %s152
      %p159 = scmp.eq.s32.totalorder %s37, 1
      %p160 = por %p158, %p159
      %p161 = scmp.ne.s32.totalorder %s152, %s153
      %p162 = scmp.eq.s32.totalorder %s37, 0
      %p163 = por %p161, %p162
      %p164 = scmp.ne.s32.totalorder %s152, %s153
      %p165 = scmp.eq.s32.totalorder %s38, 1
      %p166 = por %p164, %p165
      %p168 = scmp.ne.s32.totalorder %s153, %s167
      %p169 = scmp.eq.s32.totalorder %s38, 0
      %p170 = por %p168, %p169
      %s171 = ssub.s32 %s32, %s39
      %p172 = scmp.eq.s32.totalorder %s171, 0
      %s174 = sadd.s32 %s173, 1
      %s175 = scalar_select %p172, %s173, %s174
      %p178 = pneg %p172
      %p179 = scmp.eq.s32.totalorder %s32, 1
      %p180 = por %p178, %p179
      %p181 = scmp.ne.s32.totalorder %s173, %s176
      %p182 = scmp.eq.s32.totalorder %s32, 0
      %p183 = por %p181, %p182
      %p184 = scmp.ne.s32.totalorder %s173, %s176
      %p185 = scmp.eq.s32.totalorder %s37, 1
      %p186 = por %p184, %p185
      %p187 = scmp.ne.s32.totalorder %s176, %s177
      %p188 = scmp.eq.s32.totalorder %s37, 0
      %p189 = por %p187, %p188
      %p190 = scmp.ne.s32.totalorder %s176, %s177
      %p191 = scmp.eq.s32.totalorder %s38, 1
      %p192 = por %p190, %p191
      %p194 = scmp.ne.s32.totalorder %s177, %s193
      %p195 = scmp.eq.s32.totalorder %s38, 0
      %p196 = por %p194, %p195
      %p197 = scmp.le.s32.totalorder 1, %s32
      %p198 = scmp.lt.s32.totalorder %s32, 3
      %p199 = pnand %p197, %p198
      %p200 = pneg %p199
      // Predicated region
      $region9: #{transducer_forward.1} parent=5 // pred_check
        _
      $region10: #{transducer_forward.1} parent=5 // pred_check_branch
        %202 = sbr.rel (%p199) target = $region12
      $region11: #{transducer_forward.1} parent=5 // pred_region
        %s203 = ssub.s32 %s32, 1
        // Predicated region
        $region13: #{transducer_forward.1} parent=11 // pred_check
          %p204 = pneg %p79
        $region14: #{transducer_forward.1} parent=11 // pred_check_branch
          %206 = sbr.rel (%p204) target = $region16
        $region15: #{transducer_forward.1} parent=11 // pred_region
          %s208 = ssub.s32 256, 256
          %209 = vsyncadd [#allocation7], %s208
          %s210 = sshll.u32 [#allocation6], 4
          %s211 = int_to_ptr.vmem [resolvable:$true] %s210
          %216 = dma.hbm_to_vmem [thread:$0]  %s4, 256, %s211, [#allocation7], 128, 128, 8
        $region16: #{transducer_forward.1} parent=11 // pred_fallthru
          _
        // Predicated region
        $region17: #{transducer_forward.1} parent=11 // pred_check
          %p217 = pneg %p100
        $region18: #{transducer_forward.1} parent=11 // pred_check_branch
          %219 = sbr.rel (%p217) target = $region20
        $region19: #{transducer_forward.1} parent=11 // pred_region
          %s221 = ssub.s32 256, 256
          %222 = vsyncadd [#allocation9], %s221
          %s223 = sshll.u32 [#allocation8], 4
          %s224 = int_to_ptr.vmem [resolvable:$true] %s223
          %229 = dma.hbm_to_vmem [thread:$0]  %s5, 256, %s224, [#allocation9], 128, 128, 8
        $region20: #{transducer_forward.1} parent=11 // pred_fallthru
          _
        // Predicated region
        $region21: #{transducer_forward.1} parent=11 // pred_check
          %p230 = pneg %p121
        $region22: #{transducer_forward.1} parent=11 // pred_check_branch
          %232 = sbr.rel (%p230) target = $region24
        $region23: #{transducer_forward.1} parent=11 // pred_region
          %s234 = ssub.s32 16, 16
          %235 = vsyncadd [#allocation9], %s234
          %s237 = sshll.u32 [#allocation10], 4
          %s238 = int_to_ptr.vmem [resolvable:$true] %s237
          %240 = dma.hbm_to_vmem [thread:$0]  %s6, 16, %s238, [#allocation9]
        $region24: #{transducer_forward.1} parent=11 // pred_fallthru
          _
        // Predicated region
        $region25: #{transducer_forward.1} parent=11 // pred_check
          %p241 = pneg %p142
        $region26: #{transducer_forward.1} parent=11 // pred_check_branch
          %243 = sbr.rel (%p241) target = $region28
        $region27: #{transducer_forward.1} parent=11 // pred_region
          %s245 = ssub.s32 256, 256
          %246 = vsyncadd [#allocation12], %s245
          %s247 = sshll.u32 [#allocation11], 4
          %s248 = int_to_ptr.vmem [resolvable:$true] %s247
          %253 = dma.hbm_to_vmem [thread:$0]  %s7, 256, %s248, [#allocation12], 128, 128, 8
        $region28: #{transducer_forward.1} parent=11 // pred_fallthru
          _
        // Predicated region
        $region29: #{transducer_forward.1} parent=11 // pred_check
          %p254 = pneg %p163
        $region30: #{transducer_forward.1} parent=11 // pred_check_branch
          %256 = sbr.rel (%p254) target = $region32
        $region31: #{transducer_forward.1} parent=11 // pred_region
          %s258 = ssub.s32 16, 16
          %259 = vsyncadd [#allocation12], %s258
          %s261 = sshll.u32 [#allocation13], 4
          %s262 = int_to_ptr.vmem [resolvable:$true] %s261
          %264 = dma.hbm_to_vmem [thread:$0]  %s8, 16, %s262, [#allocation12]
        $region32: #{transducer_forward.1} parent=11 // pred_fallthru
          _
      $region12: #{transducer_forward.1} parent=5 // pred_fallthru
        _
      %p265 = scmp.lt.s32.totalorder %s32, 2
      // Predicated region
      $region33: #{transducer_forward.1} parent=5 // pred_check
        %p266 = pneg %p265
      $region34: #{transducer_forward.1} parent=5 // pred_check_branch
        %268 = sbr.rel (%p266) target = $region36
      $region35: #{transducer_forward.1} parent=5 // pred_region
        // Predicated region
        $region37: #{transducer_forward.1} parent=35 // pred_check
          %p269 = pneg %p52
        $region38: #{transducer_forward.1} parent=35 // pred_check_branch
          %271 = sbr.rel (%p269) target = $region40
        $region39: #{transducer_forward.1} parent=35 // pred_region
          %p272 = scmp.lt.s32.totalorder %s32, 1
          %s273 = scalar_select %p272, %s32, 1
          %s274 = smul.addr %s273, 8
          %s275 = scalar_lea.vmem %s3, %s274
        $region40: #{transducer_forward.1} parent=35 // pred_fallthru
          _
      $region36: #{transducer_forward.1} parent=5 // pred_fallthru
        _
      %p276 = scmp.le.s32.totalorder 1, %s32
      %p277 = scmp.lt.s32.totalorder %s32, 3
      %p278 = pnand %p276, %p277
      %p279 = pneg %p278
      // Predicated region
      $region41: #{transducer_forward.1} parent=5 // pred_check
        _
      $region42: #{transducer_forward.1} parent=5 // pred_check_branch
        %281 = sbr.rel (%p278) target = $region44
      $region43: #{transducer_forward.1} parent=5 // pred_region
        %s282 = ssub.s32 %s32, 1
        // Predicated region
        $region45: #{transducer_forward.1} parent=43 // pred_check
          %p283 = pneg %p79
        $region46: #{transducer_forward.1} parent=43 // pred_check_branch
          %285 = sbr.rel (%p283) target = $region48
        $region47: #{transducer_forward.1} parent=43 // pred_region
          %286 = dma.done [#allocation7], 256
        $region48: #{transducer_forward.1} parent=43 // pred_fallthru
          _
        // Predicated region
        $region49: #{transducer_forward.1} parent=43 // pred_check
          %p287 = pneg %p100
        $region50: #{transducer_forward.1} parent=43 // pred_check_branch
          %289 = sbr.rel (%p287) target = $region52
        $region51: #{transducer_forward.1} parent=43 // pred_region
          %290 = dma.done [#allocation9], 256
        $region52: #{transducer_forward.1} parent=43 // pred_fallthru
          _
        // Predicated region
        $region53: #{transducer_forward.1} parent=43 // pred_check
          %p291 = pneg %p121
        $region54: #{transducer_forward.1} parent=43 // pred_check_branch
          %293 = sbr.rel (%p291) target = $region56
        $region55: #{transducer_forward.1} parent=43 // pred_region
          %294 = dma.done [#allocation9], 16
        $region56: #{transducer_forward.1} parent=43 // pred_fallthru
          _
        // Predicated region
        $region57: #{transducer_forward.1} parent=43 // pred_check
          %p295 = pneg %p142
        $region58: #{transducer_forward.1} parent=43 // pred_check_branch
          %297 = sbr.rel (%p295) target = $region60
        $region59: #{transducer_forward.1} parent=43 // pred_region
          %298 = dma.done [#allocation12], 256
        $region60: #{transducer_forward.1} parent=43 // pred_fallthru
          _
        // Predicated region
        $region61: #{transducer_forward.1} parent=43 // pred_check
          %p299 = pneg %p163
        $region62: #{transducer_forward.1} parent=43 // pred_check_branch
          %301 = sbr.rel (%p299) target = $region64
        $region63: #{transducer_forward.1} parent=43 // pred_region
          %302 = dma.done [#allocation12], 16
        $region64: #{transducer_forward.1} parent=43 // pred_fallthru
          _
        %p303 = scmp.lt.s32.totalorder %s37, 1
        %s304 = scalar_select %p303, %s37, 1
        %s305 = smul.addr %s304, 8
        %s306 = scalar_lea.vmem %s3, %s305
        %p307 = pneg %p58
        %p308 = pneg %p55
        %p309 = pneg %p79
        %p310 = pneg %p76
        %p311 = pneg %p100
        %p312 = pneg %p97
        %p313 = pneg %p121
        %p314 = pneg %p118
        %p315 = pneg %p142
        %p316 = pneg %p139
        %p317 = pneg %p163
        %p318 = pneg %p160
        %p319 = pneg %p189
        %p320 = pneg %p186
        %p321 = scmp.lt.s32.totalorder %s37, 1
        %s322 = scalar_select %p321, %s37, 1
        %s323 = scalar_lea.vmem %s9, %s322
        %p324 = scmp.lt.s32.totalorder %s37, 1
        %s325 = scalar_select %p324, %s37, 1
        %s326 = smul.addr %s325, 8
        %s327 = scalar_lea.vmem %s3, %s326
        %p328 = scmp.lt.s32.totalorder %s37, 1
        %s329 = scalar_select %p328, %s37, 1
        %s330 = scalar_lea.vmem %s9, %s329
        %v332 = vld [vmem:[%s327] sm:$0xff]
        %v333 = vpack.c.bf16 %v332, %v332
        %v334 = vld [vmem:[#allocation8] sm:$0xff]
        %v335 = vld [vmem:[#allocation8 + $0x8] sm:$0xff]
        %v336 = vpack.c.bf16 %v335, %v334
        %v337 = vld [vmem:[#allocation10] sm:$0x1]
        %v339 = vlaneseq
        %v340 = vshrl.u32 %v339, 7
        %v341 = vsub.s32 0, %v340
        %v342 = vrot.slane %v337, %v341
        %vm344 = vcmask 130048
        %v346 = vsel %vm344, %v333, 0
        %348 = vmatprep.subr.bf16.mxu0 0
        %349 = vmatpush1.bf16.msra.mxu0 %v336
        %350 = vmatprep.subr.bf16.mxu0 0
        %351 = vmatpush1.bf16.msra.mxu0 0
        %352 = vmatprep.subr.bf16.mxu0 0
        %353 = vmatpush1.bf16.msra.mxu0 0
        %354 = vmatprep.subr.bf16.mxu0 0
        %355 = vmatpush1.bf16.msra.mxu0 0
        %356 = vmatprep.subr.bf16.mxu0 0
        %357 = vmatpush1.bf16.msra.mxu0 0
        %358 = vmatprep.subr.bf16.mxu0 0
        %359 = vmatpush1.bf16.msra.mxu0 0
        %360 = vmatprep.subr.bf16.mxu0 0
        %361 = vmatpush1.bf16.msra.mxu0 0
        %362 = vmatprep.subr.bf16.mxu0 0
        %363 = vmatpush1.bf16.msra.mxu0 0
        %364 = vmatprep.subr.bf16.mxu0 0
        %365 = vmatpush1.bf16.msra.mxu0 0
        %366 = vmatprep.subr.bf16.mxu0 0
        %367 = vmatpush1.bf16.msra.mxu0 0
        %368 = vmatprep.subr.bf16.mxu0 0
        %369 = vmatpush1.bf16.msra.mxu0 0
        %370 = vmatprep.subr.bf16.mxu0 0
        %371 = vmatpush1.bf16.msra.mxu0 0
        %372 = vmatprep.subr.bf16.mxu0 0
        %373 = vmatpush1.bf16.msra.mxu0 0
        %374 = vmatprep.subr.bf16.mxu0 0
        %375 = vmatpush1.bf16.msra.mxu0 0
        %376 = vmatprep.subr.bf16.mxu0 0
        %377 = vmatpush1.bf16.msra.mxu0 0
        %378 = vmatprep.subr.bf16.mxu0 0
        %379 = vmatpush1.bf16.msra.mxu0 0
        %380 = vmatprep.mubr.bf16.mxu0 0
        %381 = vmatmul.mubr.bf16.gmra.mrb[0].mxu0 %v346
        %v382 = vpop.f32.mrb[0].mxu0
        %v383 = vadd.f32 %v342, %v382
        %v384 = vpop.f32.mrb[0].mxu0
        %v385 = vpop.f32.mrb[0].mxu0
        %v386 = vpop.f32.mrb[0].mxu0
        %387 = vdwg.mxu0
        %v388 = vtanh.pop %v383
        %v389 = vlaneseq
        %v390 = vshrl.u32 %v389, 7
        %v391 = vlaneseq
        %v392 = vand.u32 %v391, 127
        %vm393 = vcmp.eq.s32.totalorder %v390, 0
        %vm394 = vcmp.eq.s32.totalorder %v392, 0
        %vm395 = vmand %vm393, %vm394
        %v396 = vsel %vm395, 1.0, 0.0
        %s397 = smul.u32 %s37, 128
        %s398 = sld [smem:[#allocation3 + %s397]]
        %vm399 = vcmp.eq.s32.totalorder %v390, 1
        %v400 = vstv %s398
        %vm401 = vcmp.eq.s32.totalorder %v392, %v400
        %vm402 = vmand %vm399, %vm401
        %v403 = vsel %vm402, 1.0, %v396
        %s404 = sadd.s32 %s397, 1
        %s405 = sld [smem:[#allocation3 + %s404]]
        %vm406 = vcmp.eq.s32.totalorder %v390, 2
        %v407 = vstv %s405
        %vm408 = vcmp.eq.s32.totalorder %v392, %v407
        %vm409 = vmand %vm406, %vm408
        %v410 = vsel %vm409, 1.0, %v403
        %s411 = sadd.s32 %s397, 2
        %s412 = sld [smem:[#allocation3 + %s411]]
        %vm413 = vcmp.eq.s32.totalorder %v390, 3
        %v414 = vstv %s412
        %vm415 = vcmp.eq.s32.totalorder %v392, %v414
        %vm416 = vmand %vm413, %vm415
        %v417 = vsel %vm416, 1.0, %v410
        %s418 = sadd.s32 %s397, 3
        %s419 = sld [smem:[#allocation3 + %s418]]
        %vm420 = vcmp.eq.s32.totalorder %v390, 4
        %v421 = vstv %s419
        %vm422 = vcmp.eq.s32.totalorder %v392, %v421
        %vm423 = vmand %vm420, %vm422
        %v424 = vsel %vm423, 1.0, %v417
        %v425 = vld [vmem:[#allocation6] sm:$0xff]
        %v426 = vld [vmem:[#allocation6 + $0x8] sm:$0x3]
        %vm427 = vcmask 80896
        %v429 = vsel %vm427, %v424, 0
        %vm431 = vcmask 1041408
        %v433 = vsel %vm431, %v426, 0
        %435 = vmatprep.subr.mxu0 0.0
        %v436 = vand.u32 %v425, 4294901760
        %437 = vmatpush1.msra.mxu0 %v436
        %438 = vmatprep.subr.mxu0 0.0
        %v439 = vand.u32 %v433, 4294901760
        %440 = vmatpush1.msra.mxu0 %v439
        %441 = vmatprep.subr.mxu0 0.0
        %442 = vmatpush1.msra.mxu0 0.0
        %443 = vmatprep.subr.mxu0 0.0
        %444 = vmatpush1.msra.mxu0 0.0
        %445 = vmatprep.subr.mxu0 0.0
        %446 = vmatpush1.msra.mxu0 0.0
        %447 = vmatprep.subr.mxu0 0.0
        %448 = vmatpush1.msra.mxu0 0.0
        %449 = vmatprep.subr.mxu0 0.0
        %450 = vmatpush1.msra.mxu0 0.0
        %451 = vmatprep.subr.mxu0 0.0
        %452 = vmatpush1.msra.mxu0 0.0
        %453 = vmatprep.subr.mxu0 0.0
        %454 = vmatpush1.msra.mxu0 0.0
        %455 = vmatprep.subr.mxu0 0.0
        %456 = vmatpush1.msra.mxu0 0.0
        %457 = vmatprep.subr.mxu0 0.0
        %458 = vmatpush1.msra.mxu0 0.0
        %459 = vmatprep.subr.mxu0 0.0
        %460 = vmatpush1.msra.mxu0 0.0
        %461 = vmatprep.subr.mxu0 0.0
        %462 = vmatpush1.msra.mxu0 0.0
        %463 = vmatprep.subr.mxu0 0.0
        %464 = vmatpush1.msra.mxu0 0.0
        %465 = vmatprep.subr.mxu0 0.0
        %466 = vmatpush1.msra.mxu0 0.0
        %467 = vmatprep.subr.mxu0 0.0
        %468 = vmatpush1.msra.mxu0 0.0
        %469 = vmatprep.subr.mxu0 0.0
        %470 = vmatpush1.msra.mxu0 0.0
        %471 = vmatprep.subr.mxu0 0.0
        %472 = vmatpush1.msra.mxu0 0.0
        %473 = vmatprep.subr.mxu0 0.0
        %474 = vmatpush1.msra.mxu0 0.0
        %475 = vmatprep.subr.mxu0 0.0
        %476 = vmatpush1.msra.mxu0 0.0
        %477 = vmatprep.subr.mxu0 0.0
        %478 = vmatpush1.msra.mxu0 0.0
        %479 = vmatprep.subr.mxu0 0.0
        %480 = vmatpush1.msra.mxu0 0.0
        %481 = vmatprep.subr.mxu0 0.0
        %482 = vmatpush1.msra.mxu0 0.0
        %483 = vmatprep.subr.mxu0 0.0
        %484 = vmatpush1.msra.mxu0 0.0
        %485 = vmatprep.subr.mxu0 0.0
        %486 = vmatpush1.msra.mxu0 0.0
        %487 = vmatprep.subr.mxu0 0.0
        %488 = vmatpush1.msra.mxu0 0.0
        %489 = vmatprep.subr.mxu0 0.0
        %490 = vmatpush1.msra.mxu0 0.0
        %491 = vmatprep.subr.mxu0 0.0
        %492 = vmatpush1.msra.mxu0 0.0
        %493 = vmatprep.subr.mxu0 0.0
        %494 = vmatpush1.msra.mxu0 0.0
        %495 = vmatprep.subr.mxu0 0.0
        %496 = vmatpush1.msra.mxu0 0.0
        %497 = vmatprep.subr.mxu0 0.0
        %498 = vmatpush1.msra.mxu0 0.0
        %499 = vmatprep.subr.mxu0 0.0
        %500 = vmatpush1.msra.mxu0 0.0
        %501 = vmatprep.mubr.f32.mxu0 0.0
        %v502 = vand.u32 %v429, 4294901760
        %v503 = vsub.f32 %v429, %v502
        %v504 = vand.u32 %v503, 4294901760
        %v505 = vsub.f32 %v503, %v504
        %v506 = vand.u32 %v505, 4294901760
        %507 = vmatmul.mubr.f32.gmra.mrb[0].mxu0 %v506
        %v508 = vpop.f32.mrb[0].mxu0
        %v509 = vadd.f32 0.0, %v508
        %v510 = vpop.f32.mrb[0].mxu0
        %511 = vdwg.mxu0
        %512 = vmatprep.subr.mxu0 0.0
        %v513 = vand.u32 %v425, 4294901760
        %v514 = vsub.f32 %v425, %v513
        %v515 = vand.u32 %v514, 4294901760
        %v516 = vsub.f32 %v514, %v515
        %v517 = vand.u32 %v516, 4294901760
        %518 = vmatpush1.msra.mxu0 %v517
        %519 = vmatprep.subr.mxu0 0.0
        %v520 = vand.u32 %v433, 4294901760
        %v521 = vsub.f32 %v433, %v520
        %v522 = vand.u32 %v521, 4294901760
        %v523 = vsub.f32 %v521, %v522
        %v524 = vand.u32 %v523, 4294901760
        %525 = vmatpush1.msra.mxu0 %v524
        %526 = vmatprep.subr.mxu0 0.0
        %527 = vmatpush1.msra.mxu0 0.0
        %528 = vmatprep.subr.mxu0 0.0
        %529 = vmatpush1.msra.mxu0 0.0
        %530 = vmatprep.subr.mxu0 0.0
        %531 = vmatpush1.msra.mxu0 0.0
        %532 = vmatprep.subr.mxu0 0.0
        %533 = vmatpush1.msra.mxu0 0.0
        %534 = vmatprep.subr.mxu0 0.0
        %535 = vmatpush1.msra.mxu0 0.0
        %536 = vmatprep.subr.mxu0 0.0
        %537 = vmatpush1.msra.mxu0 0.0
        %538 = vmatprep.subr.mxu0 0.0
        %539 = vmatpush1.msra.mxu0 0.0
        %540 = vmatprep.subr.mxu0 0.0
        %541 = vmatpush1.msra.mxu0 0.0
        %542 = vmatprep.subr.mxu0 0.0
        %543 = vmatpush1.msra.mxu0 0.0
        %544 = vmatprep.subr.mxu0 0.0
        %545 = vmatpush1.msra.mxu0 0.0
        %546 = vmatprep.subr.mxu0 0.0
        %547 = vmatpush1.msra.mxu0 0.0
        %548 = vmatprep.subr.mxu0 0.0
        %549 = vmatpush1.msra.mxu0 0.0
        %550 = vmatprep.subr.mxu0 0.0
        %551 = vmatpush1.msra.mxu0 0.0
        %552 = vmatprep.subr.mxu0 0.0
        %553 = vmatpush1.msra.mxu0 0.0
        %554 = vmatprep.subr.mxu0 0.0
        %555 = vmatpush1.msra.mxu0 0.0
        %556 = vmatprep.subr.mxu0 0.0
        %557 = vmatpush1.msra.mxu0 0.0
        %558 = vmatprep.subr.mxu0 0.0
        %559 = vmatpush1.msra.mxu0 0.0
        %560 = vmatprep.subr.mxu0 0.0
        %561 = vmatpush1.msra.mxu0 0.0
        %562 = vmatprep.subr.mxu0 0.0
        %563 = vmatpush1.msra.mxu0 0.0
        %564 = vmatprep.subr.mxu0 0.0
        %565 = vmatpush1.msra.mxu0 0.0
        %566 = vmatprep.subr.mxu0 0.0
        %567 = vmatpush1.msra.mxu0 0.0
        %568 = vmatprep.subr.mxu0 0.0
        %569 = vmatpush1.msra.mxu0 0.0
        %570 = vmatprep.subr.mxu0 0.0
        %571 = vmatpush1.msra.mxu0 0.0
        %572 = vmatprep.subr.mxu0 0.0
        %573 = vmatpush1.msra.mxu0 0.0
        %574 = vmatprep.subr.mxu0 0.0
        %575 = vmatpush1.msra.mxu0 0.0
        %576 = vmatprep.subr.mxu0 0.0
        %577 = vmatpush1.msra.mxu0 0.0
        %578 = vmatprep.subr.mxu0 0.0
        %579 = vmatpush1.msra.mxu0 0.0
        %580 = vmatprep.subr.mxu0 0.0
        %581 = vmatpush1.msra.mxu0 0.0
        %582 = vmatprep.subr.mxu0 0.0
        %583 = vmatpush1.msra.mxu0 0.0
        %584 = vmatprep.subr.mxu0 0.0
        %585 = vmatpush1.msra.mxu0 0.0
        %586 = vmatprep.mubr.f32.mxu0 0.0
        %v587 = vand.u32 %v429, 4294901760
        %588 = vmatmul.mubr.f32.gmra.mrb[0].mxu0 %v587
        %v589 = vpop.f32.mrb[0].mxu0
        %v590 = vadd.f32 %v509, %v589
        %v591 = vpop.f32.mrb[0].mxu0
        %592 = vdwg.mxu0
        %593 = vmatprep.subr.mxu0 0.0
        %v594 = vand.u32 %v425, 4294901760
        %v595 = vsub.f32 %v425, %v594
        %596 = vmatpush1.msra.mxu0 %v595
        %597 = vmatprep.subr.mxu0 0.0
        %v598 = vand.u32 %v433, 4294901760
        %v599 = vsub.f32 %v433, %v598
        %600 = vmatpush1.msra.mxu0 %v599
        %601 = vmatprep.subr.mxu0 0.0
        %602 = vmatpush1.msra.mxu0 0.0
        %603 = vmatprep.subr.mxu0 0.0
        %604 = vmatpush1.msra.mxu0 0.0
        %605 = vmatprep.subr.mxu0 0.0
        %606 = vmatpush1.msra.mxu0 0.0
        %607 = vmatprep.subr.mxu0 0.0
        %608 = vmatpush1.msra.mxu0 0.0
        %609 = vmatprep.subr.mxu0 0.0
        %610 = vmatpush1.msra.mxu0 0.0
        %611 = vmatprep.subr.mxu0 0.0
        %612 = vmatpush1.msra.mxu0 0.0
        %613 = vmatprep.subr.mxu0 0.0
        %614 = vmatpush1.msra.mxu0 0.0
        %615 = vmatprep.subr.mxu0 0.0
        %616 = vmatpush1.msra.mxu0 0.0
        %617 = vmatprep.subr.mxu0 0.0
        %618 = vmatpush1.msra.mxu0 0.0
        %619 = vmatprep.subr.mxu0 0.0
        %620 = vmatpush1.msra.mxu0 0.0
        %621 = vmatprep.subr.mxu0 0.0
        %622 = vmatpush1.msra.mxu0 0.0
        %623 = vmatprep.subr.mxu0 0.0
        %624 = vmatpush1.msra.mxu0 0.0
        %625 = vmatprep.subr.mxu0 0.0
        %626 = vmatpush1.msra.mxu0 0.0
        %627 = vmatprep.subr.mxu0 0.0
        %628 = vmatpush1.msra.mxu0 0.0
        %629 = vmatprep.subr.mxu0 0.0
        %630 = vmatpush1.msra.mxu0 0.0
        %631 = vmatprep.subr.mxu0 0.0
        %632 = vmatpush1.msra.mxu0 0.0
        %633 = vmatprep.subr.mxu0 0.0
        %634 = vmatpush1.msra.mxu0 0.0
        %635 = vmatprep.subr.mxu0 0.0
        %636 = vmatpush1.msra.mxu0 0.0
        %637 = vmatprep.subr.mxu0 0.0
        %638 = vmatpush1.msra.mxu0 0.0
        %639 = vmatprep.subr.mxu0 0.0
        %640 = vmatpush1.msra.mxu0 0.0
        %641 = vmatprep.subr.mxu0 0.0
        %642 = vmatpush1.msra.mxu0 0.0
        %643 = vmatprep.subr.mxu0 0.0
        %644 = vmatpush1.msra.mxu0 0.0
        %645 = vmatprep.subr.mxu0 0.0
        %646 = vmatpush1.msra.mxu0 0.0
        %647 = vmatprep.subr.mxu0 0.0
        %648 = vmatpush1.msra.mxu0 0.0
        %649 = vmatprep.subr.mxu0 0.0
        %650 = vmatpush1.msra.mxu0 0.0
        %651 = vmatprep.subr.mxu0 0.0
        %652 = vmatpush1.msra.mxu0 0.0
        %653 = vmatprep.subr.mxu0 0.0
        %654 = vmatpush1.msra.mxu0 0.0
        %655 = vmatprep.subr.mxu0 0.0
        %656 = vmatpush1.msra.mxu0 0.0
        %657 = vmatprep.subr.mxu0 0.0
        %658 = vmatpush1.msra.mxu0 0.0
        %659 = vmatprep.subr.mxu0 0.0
        %660 = vmatpush1.msra.mxu0 0.0
        %661 = vmatprep.mubr.f32.mxu0 0.0
        %v662 = vand.u32 %v429, 4294901760
        %v663 = vsub.f32 %v429, %v662
        %664 = vmatmul.mubr.f32.gmra.mrb[0].mxu0 %v663
        %v665 = vpop.f32.mrb[0].mxu0
        %v666 = vadd.f32 %v590, %v665
        %v667 = vpop.f32.mrb[0].mxu0
        %668 = vdwg.mxu0
        %669 = vmatprep.subr.mxu0 0.0
        %v670 = vand.u32 %v425, 4294901760
        %671 = vmatpush1.msra.mxu0 %v670
        %672 = vmatprep.subr.mxu0 0.0
        %v673 = vand.u32 %v433, 4294901760
        %674 = vmatpush1.msra.mxu0 %v673
        %675 = vmatprep.subr.mxu0 0.0
        %676 = vmatpush1.msra.mxu0 0.0
        %677 = vmatprep.subr.mxu0 0.0
        %678 = vmatpush1.msra.mxu0 0.0
        %679 = vmatprep.subr.mxu0 0.0
        %680 = vmatpush1.msra.mxu0 0.0
        %681 = vmatprep.subr.mxu0 0.0
        %682 = vmatpush1.msra.mxu0 0.0
        %683 = vmatprep.subr.mxu0 0.0
        %684 = vmatpush1.msra.mxu0 0.0
        %685 = vmatprep.subr.mxu0 0.0
        %686 = vmatpush1.msra.mxu0 0.0
        %687 = vmatprep.subr.mxu0 0.0
        %688 = vmatpush1.msra.mxu0 0.0
        %689 = vmatprep.subr.mxu0 0.0
        %690 = vmatpush1.msra.mxu0 0.0
        %691 = vmatprep.subr.mxu0 0.0
        %692 = vmatpush1.msra.mxu0 0.0
        %693 = vmatprep.subr.mxu0 0.0
        %694 = vmatpush1.msra.mxu0 0.0
        %695 = vmatprep.subr.mxu0 0.0
        %696 = vmatpush1.msra.mxu0 0.0
        %697 = vmatprep.subr.mxu0 0.0
        %698 = vmatpush1.msra.mxu0 0.0
        %699 = vmatprep.subr.mxu0 0.0
        %700 = vmatpush1.msra.mxu0 0.0
        %701 = vmatprep.subr.mxu0 0.0
        %702 = vmatpush1.msra.mxu0 0.0
        %703 = vmatprep.subr.mxu0 0.0
        %704 = vmatpush1.msra.mxu0 0.0
        %705 = vmatprep.subr.mxu0 0.0
        %706 = vmatpush1.msra.mxu0 0.0
        %707 = vmatprep.subr.mxu0 0.0
        %708 = vmatpush1.msra.mxu0 0.0
        %709 = vmatprep.subr.mxu0 0.0
        %710 = vmatpush1.msra.mxu0 0.0
        %711 = vmatprep.subr.mxu0 0.0
        %712 = vmatpush1.msra.mxu0 0.0
        %713 = vmatprep.subr.mxu0 0.0
        %714 = vmatpush1.msra.mxu0 0.0
        %715 = vmatprep.subr.mxu0 0.0
        %716 = vmatpush1.msra.mxu0 0.0
        %717 = vmatprep.subr.mxu0 0.0
        %718 = vmatpush1.msra.mxu0 0.0
        %719 = vmatprep.subr.mxu0 0.0
        %720 = vmatpush1.msra.mxu0 0.0
        %721 = vmatprep.subr.mxu0 0.0
        %722 = vmatpush1.msra.mxu0 0.0
        %723 = vmatprep.subr.mxu0 0.0
        %724 = vmatpush1.msra.mxu0 0.0
        %725 = vmatprep.subr.mxu0 0.0
        %726 = vmatpush1.msra.mxu0 0.0
        %727 = vmatprep.subr.mxu0 0.0
        %728 = vmatpush1.msra.mxu0 0.0
        %729 = vmatprep.subr.mxu0 0.0
        %730 = vmatpush1.msra.mxu0 0.0
        %731 = vmatprep.subr.mxu0 0.0
        %732 = vmatpush1.msra.mxu0 0.0
        %733 = vmatprep.subr.mxu0 0.0
        %734 = vmatpush1.msra.mxu0 0.0
        %735 = vmatprep.mubr.f32.mxu0 0.0
        %v736 = vand.u32 %v429, 4294901760
        %v737 = vsub.f32 %v429, %v736
        %v738 = vand.u32 %v737, 4294901760
        %739 = vmatmul.mubr.f32.gmra.mrb[0].mxu0 %v738
        %v740 = vpop.f32.mrb[0].mxu0
        %v741 = vadd.f32 %v666, %v740
        %v742 = vpop.f32.mrb[0].mxu0
        %743 = vdwg.mxu0
        %744 = vmatprep.subr.mxu0 0.0
        %v745 = vand.u32 %v425, 4294901760
        %v746 = vsub.f32 %v425, %v745
        %v747 = vand.u32 %v746, 4294901760
        %748 = vmatpush1.msra.mxu0 %v747
        %749 = vmatprep.subr.mxu0 0.0
        %v750 = vand.u32 %v433, 4294901760
        %v751 = vsub.f32 %v433, %v750
        %v752 = vand.u32 %v751, 4294901760
        %753 = vmatpush1.msra.mxu0 %v752
        %754 = vmatprep.subr.mxu0 0.0
        %755 = vmatpush1.msra.mxu0 0.0
        %756 = vmatprep.subr.mxu0 0.0
        %757 = vmatpush1.msra.mxu0 0.0
        %758 = vmatprep.subr.mxu0 0.0
        %759 = vmatpush1.msra.mxu0 0.0
        %760 = vmatprep.subr.mxu0 0.0
        %761 = vmatpush1.msra.mxu0 0.0
        %762 = vmatprep.subr.mxu0 0.0
        %763 = vmatpush1.msra.mxu0 0.0
        %764 = vmatprep.subr.mxu0 0.0
        %765 = vmatpush1.msra.mxu0 0.0
        %766 = vmatprep.subr.mxu0 0.0
        %767 = vmatpush1.msra.mxu0 0.0
        %768 = vmatprep.subr.mxu0 0.0
        %769 = vmatpush1.msra.mxu0 0.0
        %770 = vmatprep.subr.mxu0 0.0
        %771 = vmatpush1.msra.mxu0 0.0
        %772 = vmatprep.subr.mxu0 0.0
        %773 = vmatpush1.msra.mxu0 0.0
        %774 = vmatprep.subr.mxu0 0.0
        %775 = vmatpush1.msra.mxu0 0.0
        %776 = vmatprep.subr.mxu0 0.0
        %777 = vmatpush1.msra.mxu0 0.0
        %778 = vmatprep.subr.mxu0 0.0
        %779 = vmatpush1.msra.mxu0 0.0
        %780 = vmatprep.subr.mxu0 0.0
        %781 = vmatpush1.msra.mxu0 0.0
        %782 = vmatprep.subr.mxu0 0.0
        %783 = vmatpush1.msra.mxu0 0.0
        %784 = vmatprep.subr.mxu0 0.0
        %785 = vmatpush1.msra.mxu0 0.0
        %786 = vmatprep.subr.mxu0 0.0
        %787 = vmatpush1.msra.mxu0 0.0
        %788 = vmatprep.subr.mxu0 0.0
        %789 = vmatpush1.msra.mxu0 0.0
        %790 = vmatprep.subr.mxu0 0.0
        %791 = vmatpush1.msra.mxu0 0.0
        %792 = vmatprep.subr.mxu0 0.0
        %793 = vmatpush1.msra.mxu0 0.0
        %794 = vmatprep.subr.mxu0 0.0
        %795 = vmatpush1.msra.mxu0 0.0
        %796 = vmatprep.subr.mxu0 0.0
        %797 = vmatpush1.msra.mxu0 0.0
        %798 = vmatprep.subr.mxu0 0.0
        %799 = vmatpush1.msra.mxu0 0.0
        %800 = vmatprep.subr.mxu0 0.0
        %801 = vmatpush1.msra.mxu0 0.0
        %802 = vmatprep.subr.mxu0 0.0
        %803 = vmatpush1.msra.mxu0 0.0
        %804 = vmatprep.subr.mxu0 0.0
        %805 = vmatpush1.msra.mxu0 0.0
        %806 = vmatprep.subr.mxu0 0.0
        %807 = vmatpush1.msra.mxu0 0.0
        %808 = vmatprep.subr.mxu0 0.0
        %809 = vmatpush1.msra.mxu0 0.0
        %810 = vmatprep.subr.mxu0 0.0
        %811 = vmatpush1.msra.mxu0 0.0
        %812 = vmatprep.subr.mxu0 0.0
        %813 = vmatpush1.msra.mxu0 0.0
        %814 = vmatprep.mubr.f32.mxu0 0.0
        %v815 = vand.u32 %v429, 4294901760
        %816 = vmatmul.mubr.f32.gmra.mrb[0].mxu0 %v815
        %v817 = vpop.f32.mrb[0].mxu0
        %v818 = vadd.f32 %v741, %v817
        %v819 = vpop.f32.mrb[0].mxu0
        %820 = vdwg.mxu0
        %821 = vmatprep.subr.mxu0 0.0
        %v822 = vand.u32 %v425, 4294901760
        %823 = vmatpush1.msra.mxu0 %v822
        %824 = vmatprep.subr.mxu0 0.0
        %v825 = vand.u32 %v433, 4294901760
        %826 = vmatpush1.msra.mxu0 %v825
        %827 = vmatprep.subr.mxu0 0.0
        %828 = vmatpush1.msra.mxu0 0.0
        %829 = vmatprep.subr.mxu0 0.0
        %830 = vmatpush1.msra.mxu0 0.0
        %831 = vmatprep.subr.mxu0 0.0
        %832 = vmatpush1.msra.mxu0 0.0
        %833 = vmatprep.subr.mxu0 0.0
        %834 = vmatpush1.msra.mxu0 0.0
        %835 = vmatprep.subr.mxu0 0.0
        %836 = vmatpush1.msra.mxu0 0.0
        %837 = vmatprep.subr.mxu0 0.0
        %838 = vmatpush1.msra.mxu0 0.0
        %839 = vmatprep.subr.mxu0 0.0
        %840 = vmatpush1.msra.mxu0 0.0
        %841 = vmatprep.subr.mxu0 0.0
        %842 = vmatpush1.msra.mxu0 0.0
        %843 = vmatprep.subr.mxu0 0.0
        %844 = vmatpush1.msra.mxu0 0.0
        %845 = vmatprep.subr.mxu0 0.0
        %846 = vmatpush1.msra.mxu0 0.0
        %847 = vmatprep.subr.mxu0 0.0
        %848 = vmatpush1.msra.mxu0 0.0
        %849 = vmatprep.subr.mxu0 0.0
        %850 = vmatpush1.msra.mxu0 0.0
        %851 = vmatprep.subr.mxu0 0.0
        %852 = vmatpush1.msra.mxu0 0.0
        %853 = vmatprep.subr.mxu0 0.0
        %854 = vmatpush1.msra.mxu0 0.0
        %855 = vmatprep.subr.mxu0 0.0
        %856 = vmatpush1.msra.mxu0 0.0
        %857 = vmatprep.subr.mxu0 0.0
        %858 = vmatpush1.msra.mxu0 0.0
        %859 = vmatprep.subr.mxu0 0.0
        %860 = vmatpush1.msra.mxu0 0.0
        %861 = vmatprep.subr.mxu0 0.0
        %862 = vmatpush1.msra.mxu0 0.0
        %863 = vmatprep.subr.mxu0 0.0
        %864 = vmatpush1.msra.mxu0 0.0
        %865 = vmatprep.subr.mxu0 0.0
        %866 = vmatpush1.msra.mxu0 0.0
        %867 = vmatprep.subr.mxu0 0.0
        %868 = vmatpush1.msra.mxu0 0.0
        %869 = vmatprep.subr.mxu0 0.0
        %870 = vmatpush1.msra.mxu0 0.0
        %871 = vmatprep.subr.mxu0 0.0
        %872 = vmatpush1.msra.mxu0 0.0
        %873 = vmatprep.subr.mxu0 0.0
        %874 = vmatpush1.msra.mxu0 0.0
        %875 = vmatprep.subr.mxu0 0.0
        %876 = vmatpush1.msra.mxu0 0.0
        %877 = vmatprep.subr.mxu0 0.0
        %878 = vmatpush1.msra.mxu0 0.0
        %879 = vmatprep.subr.mxu0 0.0
        %880 = vmatpush1.msra.mxu0 0.0
        %881 = vmatprep.subr.mxu0 0.0
        %882 = vmatpush1.msra.mxu0 0.0
        %883 = vmatprep.subr.mxu0 0.0
        %884 = vmatpush1.msra.mxu0 0.0
        %885 = vmatprep.subr.mxu0 0.0
        %886 = vmatpush1.msra.mxu0 0.0
        %887 = vmatprep.mubr.f32.mxu0 0.0
        %v888 = vand.u32 %v429, 4294901760
        %889 = vmatmul.mubr.f32.gmra.mrb[0].mxu0 %v888
        %v890 = vpop.f32.mrb[0].mxu0
        %v891 = vadd.f32 %v818, %v890
        %v892 = vpop.f32.mrb[0].mxu0
        %893 = vdwg.mxu0
        %v894 = vpack.c.bf16 %v891, %v891
        %v895 = vld [vmem:[#allocation11] sm:$0xff]
        %v896 = vld [vmem:[#allocation11 + $0x8] sm:$0xff]
        %v897 = vpack.c.bf16 %v896, %v895
        %v898 = vld [vmem:[#allocation13] sm:$0x1]
        %v900 = vlaneseq
        %v901 = vshrl.u32 %v900, 7
        %v902 = vsub.s32 0, %v901
        %v903 = vrot.slane %v898, %v902
        %v906 = vsel %vm344, %v894, 0
        %908 = vmatprep.subr.bf16.mxu0 0
        %909 = vmatpush1.bf16.msra.mxu0 %v897
        %910 = vmatprep.subr.bf16.mxu0 0
        %911 = vmatpush1.bf16.msra.mxu0 0
        %912 = vmatprep.subr.bf16.mxu0 0
        %913 = vmatpush1.bf16.msra.mxu0 0
        %914 = vmatprep.subr.bf16.mxu0 0
        %915 = vmatpush1.bf16.msra.mxu0 0
        %916 = vmatprep.subr.bf16.mxu0 0
        %917 = vmatpush1.bf16.msra.mxu0 0
        %918 = vmatprep.subr.bf16.mxu0 0
        %919 = vmatpush1.bf16.msra.mxu0 0
        %920 = vmatprep.subr.bf16.mxu0 0
        %921 = vmatpush1.bf16.msra.mxu0 0
        %922 = vmatprep.subr.bf16.mxu0 0
        %923 = vmatpush1.bf16.msra.mxu0 0
        %924 = vmatprep.subr.bf16.mxu0 0
        %925 = vmatpush1.bf16.msra.mxu0 0
        %926 = vmatprep.subr.bf16.mxu0 0
        %927 = vmatpush1.bf16.msra.mxu0 0
        %928 = vmatprep.subr.bf16.mxu0 0
        %929 = vmatpush1.bf16.msra.mxu0 0
        %930 = vmatprep.subr.bf16.mxu0 0
        %931 = vmatpush1.bf16.msra.mxu0 0
        %932 = vmatprep.subr.bf16.mxu0 0
        %933 = vmatpush1.bf16.msra.mxu0 0
        %934 = vmatprep.subr.bf16.mxu0 0
        %935 = vmatpush1.bf16.msra.mxu0 0
        %936 = vmatprep.subr.bf16.mxu0 0
        %937 = vmatpush1.bf16.msra.mxu0 0
        %938 = vmatprep.subr.bf16.mxu0 0
        %939 = vmatpush1.bf16.msra.mxu0 0
        %940 = vmatprep.mubr.bf16.mxu0 0
        %941 = vmatmul.mubr.bf16.gmra.mrb[0].mxu0 %v906
        %v942 = vpop.f32.mrb[0].mxu0
        %v943 = vadd.f32 %v903, %v942
        %v944 = vpop.f32.mrb[0].mxu0
        %v945 = vpop.f32.mrb[0].mxu0
        %v946 = vpop.f32.mrb[0].mxu0
        %947 = vdwg.mxu0
        %v948 = vtanh.pop %v943
        %v950 = vcombine.high %v388, %v388
        %v952 = vunpack.c.l.s4 1966171168
        %v953 = vunpack.c.0.s8 %v952
        %v954 = vlaneseq
        %v955 = vshrl.u32 %v954, 7
        %v956 = vsub.s32 %v953, %v955
        %v957 = vrot.slane %v388, %v956
        %v959 = vunpack.c.l.s4 1966171168
        %v960 = vunpack.c.0.s8 %v959
        %v961 = vlaneseq
        %v962 = vshrl.u32 %v961, 7
        %v963 = vsub.s32 %v960, %v962
        %v964 = vrot.slane %v950, %v963
        %v965 = vcombine.high %v957, %v957
        %v966 = vcombine.high %v964, %v964
        %v968 = vunpack.c.l.s4 1966171168
        %v969 = vunpack.c.0.s8 %v968
        %v970 = vlaneseq
        %v971 = vshrl.u32 %v970, 7
        %v972 = vsub.s32 %v969, %v971
        %v973 = vrot.slane %v957, %v972
        %v975 = vunpack.c.l.s4 1966171168
        %v976 = vunpack.c.0.s8 %v975
        %v977 = vlaneseq
        %v978 = vshrl.u32 %v977, 7
        %v979 = vsub.s32 %v976, %v978
        %v980 = vrot.slane %v964, %v979
        %v982 = vunpack.c.l.s4 1966171168
        %v983 = vunpack.c.0.s8 %v982
        %v984 = vlaneseq
        %v985 = vshrl.u32 %v984, 7
        %v986 = vsub.s32 %v983, %v985
        %v987 = vrot.slane %v965, %v986
        %v989 = vunpack.c.l.s4 1966171168
        %v990 = vunpack.c.0.s8 %v989
        %v991 = vlaneseq
        %v992 = vshrl.u32 %v991, 7
        %v993 = vsub.s32 %v990, %v992
        %v994 = vrot.slane %v966, %v993
        %v995 = vcombine.high %v973, %v973
        %v996 = vcombine.high %v980, %v980
        %v997 = vcombine.high %v987, %v987
        %v998 = vcombine.high %v994, %v994
        %v999 = vlaneseq
        %v1000 = vshrl.u32 %v999, 7
        %v1001 = vsub.s32 0, %v1000
        %v1002 = vrot.slane %v973, %v1001
        %v1003 = vlaneseq
        %v1004 = vshrl.u32 %v1003, 7
        %v1005 = vsub.s32 0, %v1004
        %v1006 = vrot.slane %v987, %v1005
        %v1007 = vlaneseq
        %v1008 = vshrl.u32 %v1007, 7
        %v1009 = vsub.s32 0, %v1008
        %v1010 = vrot.slane %v995, %v1009
        %v1011 = vlaneseq
        %v1012 = vshrl.u32 %v1011, 7
        %v1013 = vsub.s32 0, %v1012
        %v1014 = vrot.slane %v997, %v1013
        %v1015 = vlaneseq
        %v1016 = vshrl.u32 %v1015, 7
        %v1017 = vsub.s32 0, %v1016
        %v1018 = vrot.slane %v980, %v1017
        %v1019 = vlaneseq
        %v1020 = vshrl.u32 %v1019, 7
        %v1021 = vsub.s32 0, %v1020
        %v1022 = vrot.slane %v994, %v1021
        %v1023 = vlaneseq
        %v1024 = vshrl.u32 %v1023, 7
        %v1025 = vsub.s32 0, %v1024
        %v1026 = vrot.slane %v996, %v1025
        %v1027 = vlaneseq
        %v1028 = vshrl.u32 %v1027, 7
        %v1029 = vsub.s32 0, %v1028
        %v1030 = vrot.slane %v998, %v1029
        %v1039 = vadd.f32 %v1002, %v948
        %v1040 = vadd.f32 %v1006, %v948
        %v1041 = vadd.f32 %v1010, %v948
        %v1042 = vadd.f32 %v1014, %v948
        %v1043 = vadd.f32 %v1018, %v948
        %v1044 = vadd.f32 %v1022, %v948
        %v1045 = vadd.f32 %v1026, %v948
        %v1046 = vadd.f32 %v1030, %v948
        %vm1047 = vcmask 258048
        %v1048 = vsel %vm1047, %v1039, -inf
        %1049 = vmax.xlane.f32.xlu0 %v1048
        %v1050 = vpop.xlane.xlu0 %1049
        %v1051 = vsel %vm1047, %v1040, -inf
        %1052 = vmax.xlane.f32.xlu0 %v1051
        %v1053 = vpop.xlane.xlu0 %1052
        %v1054 = vsel %vm1047, %v1041, -inf
        %1055 = vmax.xlane.f32.xlu0 %v1054
        %v1056 = vpop.xlane.xlu0 %1055
        %v1057 = vsel %vm1047, %v1042, -inf
        %1058 = vmax.xlane.f32.xlu0 %v1057
        %v1059 = vpop.xlane.xlu0 %1058
        %v1060 = vsel %vm1047, %v1043, -inf
        %1061 = vmax.xlane.f32.xlu0 %v1060
        %v1062 = vpop.xlane.xlu0 %1061
        %v1063 = vsel %vm1047, %v1044, -inf
        %1064 = vmax.xlane.f32.xlu0 %v1063
        %v1065 = vpop.xlane.xlu0 %1064
        %v1066 = vsel %vm1047, %v1045, -inf
        %1067 = vmax.xlane.f32.xlu0 %v1066
        %v1068 = vpop.xlane.xlu0 %1067
        %v1069 = vsel %vm1047, %v1046, -inf
        %1070 = vmax.xlane.f32.xlu0 %v1069
        %v1071 = vpop.xlane.xlu0 %1070
        %v1072 = vsub.f32 %v1039, %v1050
        %v1073 = vsub.f32 %v1040, %v1053
        %v1074 = vsub.f32 %v1041, %v1056
        %v1075 = vsub.f32 %v1042, %v1059
        %v1076 = vsub.f32 %v1043, %v1062
        %v1077 = vsub.f32 %v1044, %v1065
        %v1078 = vsub.f32 %v1045, %v1068
        %v1079 = vsub.f32 %v1046, %v1071
        %v1080 = vmul.f32 %v1072, 1.442695
        %v1081 = vpow.pop %v1080
        %v1082 = vmul.f32 %v1073, 1.442695
        %v1083 = vpow.pop %v1082
        %v1084 = vmul.f32 %v1074, 1.442695
        %v1085 = vpow.pop %v1084
        %v1086 = vmul.f32 %v1075, 1.442695
        %v1087 = vpow.pop %v1086
        %v1088 = vmul.f32 %v1076, 1.442695
        %v1089 = vpow.pop %v1088
        %v1090 = vmul.f32 %v1077, 1.442695
        %v1091 = vpow.pop %v1090
        %v1092 = vmul.f32 %v1078, 1.442695
        %v1093 = vpow.pop %v1092
        %v1094 = vmul.f32 %v1079, 1.442695
        %v1095 = vpow.pop %v1094
        %v1096 = vsel %vm1047, %v1081, 0.0
        %1097 = vadd.xlane.f32.xlu0 %v1096
        %v1098 = vpop.xlane.xlu0 %1097
        %v1099 = vsel %vm1047, %v1083, 0.0
        %1100 = vadd.xlane.f32.xlu0 %v1099
        %v1101 = vpop.xlane.xlu0 %1100
        %v1102 = vsel %vm1047, %v1085, 0.0
        %1103 = vadd.xlane.f32.xlu0 %v1102
        %v1104 = vpop.xlane.xlu0 %1103
        %v1105 = vsel %vm1047, %v1087, 0.0
        %1106 = vadd.xlane.f32.xlu0 %v1105
        %v1107 = vpop.xlane.xlu0 %1106
        %v1108 = vsel %vm1047, %v1089, 0.0
        %1109 = vadd.xlane.f32.xlu0 %v1108
        %v1110 = vpop.xlane.xlu0 %1109
        %v1111 = vsel %vm1047, %v1091, 0.0
        %1112 = vadd.xlane.f32.xlu0 %v1111
        %v1113 = vpop.xlane.xlu0 %1112
        %v1114 = vsel %vm1047, %v1093, 0.0
        %1115 = vadd.xlane.f32.xlu0 %v1114
        %v1116 = vpop.xlane.xlu0 %1115
        %v1117 = vsel %vm1047, %v1095, 0.0
        %1118 = vadd.xlane.f32.xlu0 %v1117
        %v1119 = vpop.xlane.xlu0 %1118
        %v1120 = vlog2.pop %v1098
        %v1121 = vmul.f32 %v1120, 0.6931472
        %v1122 = vlog2.pop %v1101
        %v1123 = vmul.f32 %v1122, 0.6931472
        %v1124 = vlog2.pop %v1104
        %v1125 = vmul.f32 %v1124, 0.6931472
        %v1126 = vlog2.pop %v1107
        %v1127 = vmul.f32 %v1126, 0.6931472
        %v1128 = vlog2.pop %v1110
        %v1129 = vmul.f32 %v1128, 0.6931472
        %v1130 = vlog2.pop %v1113
        %v1131 = vmul.f32 %v1130, 0.6931472
        %v1132 = vlog2.pop %v1116
        %v1133 = vmul.f32 %v1132, 0.6931472
        %v1134 = vlog2.pop %v1119
        %v1135 = vmul.f32 %v1134, 0.6931472
        %v1136 = vadd.f32 %v1050, %v1121
        %v1137 = vadd.f32 %v1053, %v1123
        %v1138 = vadd.f32 %v1056, %v1125
        %v1139 = vadd.f32 %v1059, %v1127
        %v1140 = vadd.f32 %v1062, %v1129
        %v1141 = vadd.f32 %v1065, %v1131
        %v1142 = vadd.f32 %v1068, %v1133
        %v1143 = vadd.f32 %v1071, %v1135
        %v1144 = vsub.f32 %v1039, %v1136
        %v1145 = vsub.f32 %v1040, %v1137
        %v1146 = vsub.f32 %v1041, %v1138
        %v1147 = vsub.f32 %v1042, %v1139
        %v1148 = vsub.f32 %v1043, %v1140
        %v1149 = vsub.f32 %v1044, %v1141
        %v1150 = vsub.f32 %v1045, %v1142
        %v1151 = vsub.f32 %v1046, %v1143
        %v1152 = vsel %vm394, %v1144, 0.0
        %v1153 = vsel %vm394, %v1145, 0.0
        %v1154 = vsel %vm394, %v1146, 0.0
        %v1155 = vsel %vm394, %v1147, 0.0
        %v1156 = vsel %vm394, %v1148, 0.0
        %v1157 = vsel %vm394, %v1149, 0.0
        %v1158 = vsel %vm394, %v1150, 0.0
        %v1159 = vsel %vm394, %v1151, 0.0
        %v1160 = vsel %vm1047, %v1152, 0.0
        %1161 = vadd.xlane.f32.xlu0 %v1160
        %v1162 = vpop.xlane.xlu0 %1161
        %v1163 = vsel %vm1047, %v1153, 0.0
        %1164 = vadd.xlane.f32.xlu0 %v1163
        %v1165 = vpop.xlane.xlu0 %1164
        %v1166 = vsel %vm1047, %v1154, 0.0
        %1167 = vadd.xlane.f32.xlu0 %v1166
        %v1168 = vpop.xlane.xlu0 %1167
        %v1169 = vsel %vm1047, %v1155, 0.0
        %1170 = vadd.xlane.f32.xlu0 %v1169
        %v1171 = vpop.xlane.xlu0 %1170
        %v1172 = vsel %vm1047, %v1156, 0.0
        %1173 = vadd.xlane.f32.xlu0 %v1172
        %v1174 = vpop.xlane.xlu0 %1173
        %v1175 = vsel %vm1047, %v1157, 0.0
        %1176 = vadd.xlane.f32.xlu0 %v1175
        %v1177 = vpop.xlane.xlu0 %1176
        %v1178 = vsel %vm1047, %v1158, 0.0
        %1179 = vadd.xlane.f32.xlu0 %v1178
        %v1180 = vpop.xlane.xlu0 %1179
        %v1181 = vsel %vm1047, %v1159, 0.0
        %1182 = vadd.xlane.f32.xlu0 %v1181
        %v1183 = vpop.xlane.xlu0 %1182
        %vm1184 = vmand %vm393, %vm401
        %v1185 = vsel %vm1184, 1.0, 0.0
        %vm1186 = vmand %vm399, %vm408
        %v1187 = vsel %vm1186, 1.0, %v1185
        %vm1188 = vmand %vm406, %vm415
        %v1189 = vsel %vm1188, 1.0, %v1187
        %vm1190 = vmand %vm413, %vm422
        %v1191 = vsel %vm1190, 1.0, %v1189
        %v1192 = vmul.f32 %v1144, %v1191
        %v1193 = vmul.f32 %v1145, %v1191
        %v1194 = vmul.f32 %v1146, %v1191
        %v1195 = vmul.f32 %v1147, %v1191
        %v1196 = vmul.f32 %v1148, %v1191
        %v1197 = vmul.f32 %v1149, %v1191
        %v1198 = vmul.f32 %v1150, %v1191
        %v1199 = vmul.f32 %v1151, %v1191
        %v1200 = vsel %vm1047, %v1192, 0.0
        %1201 = vadd.xlane.f32.xlu0 %v1200
        %v1202 = vpop.xlane.xlu0 %1201
        %v1203 = vsel %vm1047, %v1193, 0.0
        %1204 = vadd.xlane.f32.xlu0 %v1203
        %v1205 = vpop.xlane.xlu0 %1204
        %v1206 = vsel %vm1047, %v1194, 0.0
        %1207 = vadd.xlane.f32.xlu0 %v1206
        %v1208 = vpop.xlane.xlu0 %1207
        %v1209 = vsel %vm1047, %v1195, 0.0
        %1210 = vadd.xlane.f32.xlu0 %v1209
        %v1211 = vpop.xlane.xlu0 %1210
        %v1212 = vsel %vm1047, %v1196, 0.0
        %1213 = vadd.xlane.f32.xlu0 %v1212
        %v1214 = vpop.xlane.xlu0 %1213
        %v1215 = vsel %vm1047, %v1197, 0.0
        %1216 = vadd.xlane.f32.xlu0 %v1215
        %v1217 = vpop.xlane.xlu0 %1216
        %v1218 = vsel %vm1047, %v1198, 0.0
        %1219 = vadd.xlane.f32.xlu0 %v1218
        %v1220 = vpop.xlane.xlu0 %1219
        %v1221 = vsel %vm1047, %v1199, 0.0
        %1222 = vadd.xlane.f32.xlu0 %v1221
        %v1223 = vpop.xlane.xlu0 %1222
        %v1224 = vadd.s32 %v392, 1
        %vm1225 = vcmp.eq.s32.totalorder %v390, %v1224
        %v1226 = vsel %vm1225, 1.0, 0.0
        %v1227 = vadd.s32 %v390, 1
        %vm1228 = vcmp.eq.s32.totalorder %v392, %v1227
        %v1229 = vsel %vm1228, 1.0, 0.0
        %v1238 = vlaneseq
        %v1239 = vshrl.u32 %v1238, 7
        %v1240 = vsub.s32 %v392, %v1239
        %v1241 = vrot.slane %v1162, %v1240
        %v1242 = vlaneseq
        %v1243 = vshrl.u32 %v1242, 7
        %v1244 = vsub.s32 %v392, %v1243
        %v1245 = vrot.slane %v1165, %v1244
        %v1246 = vlaneseq
        %v1247 = vshrl.u32 %v1246, 7
        %v1248 = vsub.s32 %v392, %v1247
        %v1249 = vrot.slane %v1168, %v1248
        %v1250 = vlaneseq
        %v1251 = vshrl.u32 %v1250, 7
        %v1252 = vsub.s32 %v392, %v1251
        %v1253 = vrot.slane %v1171, %v1252
        %v1254 = vlaneseq
        %v1255 = vshrl.u32 %v1254, 7
        %v1256 = vsub.s32 %v392, %v1255
        %v1257 = vrot.slane %v1174, %v1256
        %v1258 = vlaneseq
        %v1259 = vshrl.u32 %v1258, 7
        %v1260 = vsub.s32 %v392, %v1259
        %v1261 = vrot.slane %v1177, %v1260
        %v1262 = vlaneseq
        %v1263 = vshrl.u32 %v1262, 7
        %v1264 = vsub.s32 %v392, %v1263
        %v1265 = vrot.slane %v1180, %v1264
        %v1266 = vlaneseq
        %v1267 = vshrl.u32 %v1266, 7
        %v1268 = vsub.s32 %v392, %v1267
        %v1269 = vrot.slane %v1183, %v1268
        %vm1270 = vcmask 1041409
        %v1271 = vsel %vm1270, %v1245, %v1241
        %vm1272 = vcmask 1042434
        %v1273 = vsel %vm1272, %v1249, %v1271
        %vm1274 = vcmask 1043459
        %v1275 = vsel %vm1274, %v1253, %v1273
        %vm1276 = vcmask 1044484
        %v1277 = vsel %vm1276, %v1257, %v1275
        %vm1278 = vcmask 1045509
        %v1279 = vsel %vm1278, %v1261, %v1277
        %vm1280 = vcmask 1046534
        %v1281 = vsel %vm1280, %v1265, %v1279
        %vm1282 = vcmask 1047559
        %v1283 = vsel %vm1282, %v1269, %v1281
        %vm1285 = vcmask 64512
        %v1287 = vsel %vm1285, %v1226, 0
        %1289 = vmatprep.subr.mxu0 0.0
        %v1290 = vand.u32 %v1283, 4294901760
        %1291 = vmatpush1.msra.mxu0 %v1290
        %1292 = vmatprep.subr.mxu0 0.0
        %1293 = vmatpush1.msra.mxu0 0.0
        %1294 = vmatprep.subr.mxu0 0.0
        %1295 = vmatpush1.msra.mxu0 0.0
        %1296 = vmatprep.subr.mxu0 0.0
        %1297 = vmatpush1.msra.mxu0 0.0
        %1298 = vmatprep.subr.mxu0 0.0
        %1299 = vmatpush1.msra.mxu0 0.0
        %1300 = vmatprep.subr.mxu0 0.0
        %1301 = vmatpush1.msra.mxu0 0.0
        %1302 = vmatprep.subr.mxu0 0.0
        %1303 = vmatpush1.msra.mxu0 0.0
        %1304 = vmatprep.subr.mxu0 0.0
        %1305 = vmatpush1.msra.mxu0 0.0
        %1306 = vmatprep.subr.mxu0 0.0
        %1307 = vmatpush1.msra.mxu0 0.0
        %1308 = vmatprep.subr.mxu0 0.0
        %1309 = vmatpush1.msra.mxu0 0.0
        %1310 = vmatprep.subr.mxu0 0.0
        %1311 = vmatpush1.msra.mxu0 0.0
        %1312 = vmatprep.subr.mxu0 0.0
        %1313 = vmatpush1.msra.mxu0 0.0
        %1314 = vmatprep.subr.mxu0 0.0
        %1315 = vmatpush1.msra.mxu0 0.0
        %1316 = vmatprep.subr.mxu0 0.0
        %1317 = vmatpush1.msra.mxu0 0.0
        %1318 = vmatprep.subr.mxu0 0.0
        %1319 = vmatpush1.msra.mxu0 0.0
        %1320 = vmatprep.subr.mxu0 0.0
        %1321 = vmatpush1.msra.mxu0 0.0
        %1322 = vmatprep.subr.mxu0 0.0
        %1323 = vmatpush1.msra.mxu0 0.0
        %1324 = vmatprep.subr.mxu0 0.0
        %1325 = vmatpush1.msra.mxu0 0.0
        %1326 = vmatprep.subr.mxu0 0.0
        %1327 = vmatpush1.msra.mxu0 0.0
        %1328 = vmatprep.subr.mxu0 0.0
        %1329 = vmatpush1.msra.mxu0 0.0
        %1330 = vmatprep.subr.mxu0 0.0
        %1331 = vmatpush1.msra.mxu0 0.0
        %1332 = vmatprep.subr.mxu0 0.0
        %1333 = vmatpush1.msra.mxu0 0.0
        %1334 = vmatprep.subr.mxu0 0.0
        %1335 = vmatpush1.msra.mxu0 0.0
        %1336 = vmatprep.subr.mxu0 0.0
        %1337 = vmatpush1.msra.mxu0 0.0
        %1338 = vmatprep.subr.mxu0 0.0
        %1339 = vmatpush1.msra.mxu0 0.0
        %1340 = vmatprep.subr.mxu0 0.0
        %1341 = vmatpush1.msra.mxu0 0.0
        %1342 = vmatprep.subr.mxu0 0.0
        %1343 = vmatpush1.msra.mxu0 0.0
        %1344 = vmatprep.subr.mxu0 0.0
        %1345 = vmatpush1.msra.mxu0 0.0
        %1346 = vmatprep.subr.mxu0 0.0
        %1347 = vmatpush1.msra.mxu0 0.0
        %1348 = vmatprep.subr.mxu0 0.0
        %1349 = vmatpush1.msra.mxu0 0.0
        %1350 = vmatprep.subr.mxu0 0.0
        %1351 = vmatpush1.msra.mxu0 0.0
        %1352 = vmatprep.subr.mxu0 0.0
        %1353 = vmatpush1.msra.mxu0 0.0
        %1354 = vmatprep.mubr.f32.mxu0 0.0
        %v1355 = vand.u32 %v1287, 4294901760
        %v1356 = vsub.f32 %v1287, %v1355
        %v1357 = vand.u32 %v1356, 4294901760
        %v1358 = vsub.f32 %v1356, %v1357
        %v1359 = vand.u32 %v1358, 4294901760
        %1360 = vmatmul.mubr.f32.gmra.mrb[0].mxu0 %v1359
        %v1361 = vpop.f32.mrb[0].mxu0
        %v1362 = vadd.f32 0.0, %v1361
        %v1363 = vpop.f32.mrb[0].mxu0
        %1364 = vdwg.mxu0
        %1365 = vmatprep.subr.mxu0 0.0
        %v1366 = vand.u32 %v1283, 4294901760
        %v1367 = vsub.f32 %v1283, %v1366
        %v1368 = vand.u32 %v1367, 4294901760
        %v1369 = vsub.f32 %v1367, %v1368
        %v1370 = vand.u32 %v1369, 4294901760
        %1371 = vmatpush1.msra.mxu0 %v1370
        %1372 = vmatprep.subr.mxu0 0.0
        %1373 = vmatpush1.msra.mxu0 0.0
        %1374 = vmatprep.subr.mxu0 0.0
        %1375 = vmatpush1.msra.mxu0 0.0
        %1376 = vmatprep.subr.mxu0 0.0
        %1377 = vmatpush1.msra.mxu0 0.0
        %1378 = vmatprep.subr.mxu0 0.0
        %1379 = vmatpush1.msra.mxu0 0.0
        %1380 = vmatprep.subr.mxu0 0.0
        %1381 = vmatpush1.msra.mxu0 0.0
        %1382 = vmatprep.subr.mxu0 0.0
        %1383 = vmatpush1.msra.mxu0 0.0
        %1384 = vmatprep.subr.mxu0 0.0
        %1385 = vmatpush1.msra.mxu0 0.0
        %1386 = vmatprep.subr.mxu0 0.0
        %1387 = vmatpush1.msra.mxu0 0.0
        %1388 = vmatprep.subr.mxu0 0.0
        %1389 = vmatpush1.msra.mxu0 0.0
        %1390 = vmatprep.subr.mxu0 0.0
        %1391 = vmatpush1.msra.mxu0 0.0
        %1392 = vmatprep.subr.mxu0 0.0
        %1393 = vmatpush1.msra.mxu0 0.0
        %1394 = vmatprep.subr.mxu0 0.0
        %1395 = vmatpush1.msra.mxu0 0.0
        %1396 = vmatprep.subr.mxu0 0.0
        %1397 = vmatpush1.msra.mxu0 0.0
        %1398 = vmatprep.subr.mxu0 0.0
        %1399 = vmatpush1.msra.mxu0 0.0
        %1400 = vmatprep.subr.mxu0 0.0
        %1401 = vmatpush1.msra.mxu0 0.0
        %1402 = vmatprep.subr.mxu0 0.0
        %1403 = vmatpush1.msra.mxu0 0.0
        %1404 = vmatprep.subr.mxu0 0.0
        %1405 = vmatpush1.msra.mxu0 0.0
        %1406 = vmatprep.subr.mxu0 0.0
        %1407 = vmatpush1.msra.mxu0 0.0
        %1408 = vmatprep.subr.mxu0 0.0
        %1409 = vmatpush1.msra.mxu0 0.0
        %1410 = vmatprep.subr.mxu0 0.0
        %1411 = vmatpush1.msra.mxu0 0.0
        %1412 = vmatprep.subr.mxu0 0.0
        %1413 = vmatpush1.msra.mxu0 0.0
        %1414 = vmatprep.subr.mxu0 0.0
        %1415 = vmatpush1.msra.mxu0 0.0
        %1416 = vmatprep.subr.mxu0 0.0
        %1417 = vmatpush1.msra.mxu0 0.0
        %1418 = vmatprep.subr.mxu0 0.0
        %1419 = vmatpush1.msra.mxu0 0.0
        %1420 = vmatprep.subr.mxu0 0.0
        %1421 = vmatpush1.msra.mxu0 0.0
        %1422 = vmatprep.subr.mxu0 0.0
        %1423 = vmatpush1.msra.mxu0 0.0
        %1424 = vmatprep.subr.mxu0 0.0
        %1425 = vmatpush1.msra.mxu0 0.0
        %1426 = vmatprep.subr.mxu0 0.0
        %1427 = vmatpush1.msra.mxu0 0.0
        %1428 = vmatprep.subr.mxu0 0.0
        %1429 = vmatpush1.msra.mxu0 0.0
        %1430 = vmatprep.subr.mxu0 0.0
        %1431 = vmatpush1.msra.mxu0 0.0
        %1432 = vmatprep.subr.mxu0 0.0
        %1433 = vmatpush1.msra.mxu0 0.0
        %1434 = vmatprep.mubr.f32.mxu0 0.0
        %v1435 = vand.u32 %v1287, 4294901760
        %1436 = vmatmul.mubr.f32.gmra.mrb[0].mxu0 %v1435
        %v1437 = vpop.f32.mrb[0].mxu0
        %v1438 = vadd.f32 %v1362, %v1437
        %v1439 = vpop.f32.mrb[0].mxu0
        %1440 = vdwg.mxu0
        %1441 = vmatprep.subr.mxu0 0.0
        %v1442 = vand.u32 %v1283, 4294901760
        %v1443 = vsub.f32 %v1283, %v1442
        %1444 = vmatpush1.msra.mxu0 %v1443
        %1445 = vmatprep.subr.mxu0 0.0
        %1446 = vmatpush1.msra.mxu0 0.0
        %1447 = vmatprep.subr.mxu0 0.0
        %1448 = vmatpush1.msra.mxu0 0.0
        %1449 = vmatprep.subr.mxu0 0.0
        %1450 = vmatpush1.msra.mxu0 0.0
        %1451 = vmatprep.subr.mxu0 0.0
        %1452 = vmatpush1.msra.mxu0 0.0
        %1453 = vmatprep.subr.mxu0 0.0
        %1454 = vmatpush1.msra.mxu0 0.0
        %1455 = vmatprep.subr.mxu0 0.0
        %1456 = vmatpush1.msra.mxu0 0.0
        %1457 = vmatprep.subr.mxu0 0.0
        %1458 = vmatpush1.msra.mxu0 0.0
        %1459 = vmatprep.subr.mxu0 0.0
        %1460 = vmatpush1.msra.mxu0 0.0
        %1461 = vmatprep.subr.mxu0 0.0
        %1462 = vmatpush1.msra.mxu0 0.0
        %1463 = vmatprep.subr.mxu0 0.0
        %1464 = vmatpush1.msra.mxu0 0.0
        %1465 = vmatprep.subr.mxu0 0.0
        %1466 = vmatpush1.msra.mxu0 0.0
        %1467 = vmatprep.subr.mxu0 0.0
        %1468 = vmatpush1.msra.mxu0 0.0
        %1469 = vmatprep.subr.mxu0 0.0
        %1470 = vmatpush1.msra.mxu0 0.0
        %1471 = vmatprep.subr.mxu0 0.0
        %1472 = vmatpush1.msra.mxu0 0.0
        %1473 = vmatprep.subr.mxu0 0.0
        %1474 = vmatpush1.msra.mxu0 0.0
        %1475 = vmatprep.subr.mxu0 0.0
        %1476 = vmatpush1.msra.mxu0 0.0
        %1477 = vmatprep.subr.mxu0 0.0
        %1478 = vmatpush1.msra.mxu0 0.0
        %1479 = vmatprep.subr.mxu0 0.0
        %1480 = vmatpush1.msra.mxu0 0.0
        %1481 = vmatprep.subr.mxu0 0.0
        %1482 = vmatpush1.msra.mxu0 0.0
        %1483 = vmatprep.subr.mxu0 0.0
        %1484 = vmatpush1.msra.mxu0 0.0
        %1485 = vmatprep.subr.mxu0 0.0
        %1486 = vmatpush1.msra.mxu0 0.0
        %1487 = vmatprep.subr.mxu0 0.0
        %1488 = vmatpush1.msra.mxu0 0.0
        %1489 = vmatprep.subr.mxu0 0.0
        %1490 = vmatpush1.msra.mxu0 0.0
        %1491 = vmatprep.subr.mxu0 0.0
        %1492 = vmatpush1.msra.mxu0 0.0
        %1493 = vmatprep.subr.mxu0 0.0
        %1494 = vmatpush1.msra.mxu0 0.0
        %1495 = vmatprep.subr.mxu0 0.0
        %1496 = vmatpush1.msra.mxu0 0.0
        %1497 = vmatprep.subr.mxu0 0.0
        %1498 = vmatpush1.msra.mxu0 0.0
        %1499 = vmatprep.subr.mxu0 0.0
        %1500 = vmatpush1.msra.mxu0 0.0
        %1501 = vmatprep.subr.mxu0 0.0
        %1502 = vmatpush1.msra.mxu0 0.0
        %1503 = vmatprep.subr.mxu0 0.0
        %1504 = vmatpush1.msra.mxu0 0.0
        %1505 = vmatprep.subr.mxu0 0.0
        %1506 = vmatpush1.msra.mxu0 0.0
        %1507 = vmatprep.mubr.f32.mxu0 0.0
        %v1508 = vand.u32 %v1287, 4294901760
        %v1509 = vsub.f32 %v1287, %v1508
        %1510 = vmatmul.mubr.f32.gmra.mrb[0].mxu0 %v1509
        %v1511 = vpop.f32.mrb[0].mxu0
        %v1512 = vadd.f32 %v1438, %v1511
        %v1513 = vpop.f32.mrb[0].mxu0
        %1514 = vdwg.mxu0
        %1515 = vmatprep.subr.mxu0 0.0
        %v1516 = vand.u32 %v1283, 4294901760
        %1517 = vmatpush1.msra.mxu0 %v1516
        %1518 = vmatprep.subr.mxu0 0.0
        %1519 = vmatpush1.msra.mxu0 0.0
        %1520 = vmatprep.subr.mxu0 0.0
        %1521 = vmatpush1.msra.mxu0 0.0
        %1522 = vmatprep.subr.mxu0 0.0
        %1523 = vmatpush1.msra.mxu0 0.0
        %1524 = vmatprep.subr.mxu0 0.0
        %1525 = vmatpush1.msra.mxu0 0.0
        %1526 = vmatprep.subr.mxu0 0.0
        %1527 = vmatpush1.msra.mxu0 0.0
        %1528 = vmatprep.subr.mxu0 0.0
        %1529 = vmatpush1.msra.mxu0 0.0
        %1530 = vmatprep.subr.mxu0 0.0
        %1531 = vmatpush1.msra.mxu0 0.0
        %1532 = vmatprep.subr.mxu0 0.0
        %1533 = vmatpush1.msra.mxu0 0.0
        %1534 = vmatprep.subr.mxu0 0.0
        %1535 = vmatpush1.msra.mxu0 0.0
        %1536 = vmatprep.subr.mxu0 0.0
        %1537 = vmatpush1.msra.mxu0 0.0
        %1538 = vmatprep.subr.mxu0 0.0
        %1539 = vmatpush1.msra.mxu0 0.0
        %1540 = vmatprep.subr.mxu0 0.0
        %1541 = vmatpush1.msra.mxu0 0.0
        %1542 = vmatprep.subr.mxu0 0.0
        %1543 = vmatpush1.msra.mxu0 0.0
        %1544 = vmatprep.subr.mxu0 0.0
        %1545 = vmatpush1.msra.mxu0 0.0
        %1546 = vmatprep.subr.mxu0 0.0
        %1547 = vmatpush1.msra.mxu0 0.0
        %1548 = vmatprep.subr.mxu0 0.0
        %1549 = vmatpush1.msra.mxu0 0.0
        %1550 = vmatprep.subr.mxu0 0.0
        %1551 = vmatpush1.msra.mxu0 0.0
        %1552 = vmatprep.subr.mxu0 0.0
        %1553 = vmatpush1.msra.mxu0 0.0
        %1554 = vmatprep.subr.mxu0 0.0
        %1555 = vmatpush1.msra.mxu0 0.0
        %1556 = vmatprep.subr.mxu0 0.0
        %1557 = vmatpush1.msra.mxu0 0.0
        %1558 = vmatprep.subr.mxu0 0.0
        %1559 = vmatpush1.msra.mxu0 0.0
        %1560 = vmatprep.subr.mxu0 0.0
        %1561 = vmatpush1.msra.mxu0 0.0
        %1562 = vmatprep.subr.mxu0 0.0
        %1563 = vmatpush1.msra.mxu0 0.0
        %1564 = vmatprep.subr.mxu0 0.0
        %1565 = vmatpush1.msra.mxu0 0.0
        %1566 = vmatprep.subr.mxu0 0.0
        %1567 = vmatpush1.msra.mxu0 0.0
        %1568 = vmatprep.subr.mxu0 0.0
        %1569 = vmatpush1.msra.mxu0 0.0
        %1570 = vmatprep.subr.mxu0 0.0
        %1571 = vmatpush1.msra.mxu0 0.0
        %1572 = vmatprep.subr.mxu0 0.0
        %1573 = vmatpush1.msra.mxu0 0.0
        %1574 = vmatprep.subr.mxu0 0.0
        %1575 = vmatpush1.msra.mxu0 0.0
        %1576 = vmatprep.subr.mxu0 0.0
        %1577 = vmatpush1.msra.mxu0 0.0
        %1578 = vmatprep.subr.mxu0 0.0
        %1579 = vmatpush1.msra.mxu0 0.0
        %1580 = vmatprep.mubr.f32.mxu0 0.0
        %v1581 = vand.u32 %v1287, 4294901760
        %v1582 = vsub.f32 %v1287, %v1581
        %v1583 = vand.u32 %v1582, 4294901760
        %1584 = vmatmul.mubr.f32.gmra.mrb[0].mxu0 %v1583
        %v1585 = vpop.f32.mrb[0].mxu0
        %v1586 = vadd.f32 %v1512, %v1585
        %v1587 = vpop.f32.mrb[0].mxu0
        %1588 = vdwg.mxu0
        %1589 = vmatprep.subr.mxu0 0.0
        %v1590 = vand.u32 %v1283, 4294901760
        %v1591 = vsub.f32 %v1283, %v1590
        %v1592 = vand.u32 %v1591, 4294901760
        %1593 = vmatpush1.msra.mxu0 %v1592
        %1594 = vmatprep.subr.mxu0 0.0
        %1595 = vmatpush1.msra.mxu0 0.0
        %1596 = vmatprep.subr.mxu0 0.0
        %1597 = vmatpush1.msra.mxu0 0.0
        %1598 = vmatprep.subr.mxu0 0.0
        %1599 = vmatpush1.msra.mxu0 0.0
        %1600 = vmatprep.subr.mxu0 0.0
        %1601 = vmatpush1.msra.mxu0 0.0
        %1602 = vmatprep.subr.mxu0 0.0
        %1603 = vmatpush1.msra.mxu0 0.0
        %1604 = vmatprep.subr.mxu0 0.0
        %1605 = vmatpush1.msra.mxu0 0.0
        %1606 = vmatprep.subr.mxu0 0.0
        %1607 = vmatpush1.msra.mxu0 0.0
        %1608 = vmatprep.subr.mxu0 0.0
        %1609 = vmatpush1.msra.mxu0 0.0
        %1610 = vmatprep.subr.mxu0 0.0
        %1611 = vmatpush1.msra.mxu0 0.0
        %1612 = vmatprep.subr.mxu0 0.0
        %1613 = vmatpush1.msra.mxu0 0.0
        %1614 = vmatprep.subr.mxu0 0.0
        %1615 = vmatpush1.msra.mxu0 0.0
        %1616 = vmatprep.subr.mxu0 0.0
        %1617 = vmatpush1.msra.mxu0 0.0
        %1618 = vmatprep.subr.mxu0 0.0
        %1619 = vmatpush1.msra.mxu0 0.0
        %1620 = vmatprep.subr.mxu0 0.0
        %1621 = vmatpush1.msra.mxu0 0.0
        %1622 = vmatprep.subr.mxu0 0.0
        %1623 = vmatpush1.msra.mxu0 0.0
        %1624 = vmatprep.subr.mxu0 0.0
        %1625 = vmatpush1.msra.mxu0 0.0
        %1626 = vmatprep.subr.mxu0 0.0
        %1627 = vmatpush1.msra.mxu0 0.0
        %1628 = vmatprep.subr.mxu0 0.0
        %1629 = vmatpush1.msra.mxu0 0.0
        %1630 = vmatprep.subr.mxu0 0.0
        %1631 = vmatpush1.msra.mxu0 0.0
        %1632 = vmatprep.subr.mxu0 0.0
        %1633 = vmatpush1.msra.mxu0 0.0
        %1634 = vmatprep.subr.mxu0 0.0
        %1635 = vmatpush1.msra.mxu0 0.0
        %1636 = vmatprep.subr.mxu0 0.0
        %1637 = vmatpush1.msra.mxu0 0.0
        %1638 = vmatprep.subr.mxu0 0.0
        %1639 = vmatpush1.msra.mxu0 0.0
        %1640 = vmatprep.subr.mxu0 0.0
        %1641 = vmatpush1.msra.mxu0 0.0
        %1642 = vmatprep.subr.mxu0 0.0
        %1643 = vmatpush1.msra.mxu0 0.0
        %1644 = vmatprep.subr.mxu0 0.0
        %1645 = vmatpush1.msra.mxu0 0.0
        %1646 = vmatprep.subr.mxu0 0.0
        %1647 = vmatpush1.msra.mxu0 0.0
        %1648 = vmatprep.subr.mxu0 0.0
        %1649 = vmatpush1.msra.mxu0 0.0
        %1650 = vmatprep.subr.mxu0 0.0
        %1651 = vmatpush1.msra.mxu0 0.0
        %1652 = vmatprep.subr.mxu0 0.0
        %1653 = vmatpush1.msra.mxu0 0.0
        %1654 = vmatprep.subr.mxu0 0.0
        %1655 = vmatpush1.msra.mxu0 0.0
        %1656 = vmatprep.mubr.f32.mxu0 0.0
        %v1657 = vand.u32 %v1287, 4294901760
        %1658 = vmatmul.mubr.f32.gmra.mrb[0].mxu0 %v1657
        %v1659 = vpop.f32.mrb[0].mxu0
        %v1660 = vadd.f32 %v1586, %v1659
        %v1661 = vpop.f32.mrb[0].mxu0
        %1662 = vdwg.mxu0
        %1663 = vmatprep.subr.mxu0 0.0
        %v1664 = vand.u32 %v1283, 4294901760
        %1665 = vmatpush1.msra.mxu0 %v1664
        %1666 = vmatprep.subr.mxu0 0.0
        %1667 = vmatpush1.msra.mxu0 0.0
        %1668 = vmatprep.subr.mxu0 0.0
        %1669 = vmatpush1.msra.mxu0 0.0
        %1670 = vmatprep.subr.mxu0 0.0
        %1671 = vmatpush1.msra.mxu0 0.0
        %1672 = vmatprep.subr.mxu0 0.0
        %1673 = vmatpush1.msra.mxu0 0.0
        %1674 = vmatprep.subr.mxu0 0.0
        %1675 = vmatpush1.msra.mxu0 0.0
        %1676 = vmatprep.subr.mxu0 0.0
        %1677 = vmatpush1.msra.mxu0 0.0
        %1678 = vmatprep.subr.mxu0 0.0
        %1679 = vmatpush1.msra.mxu0 0.0
        %1680 = vmatprep.subr.mxu0 0.0
        %1681 = vmatpush1.msra.mxu0 0.0
        %1682 = vmatprep.subr.mxu0 0.0
        %1683 = vmatpush1.msra.mxu0 0.0
        %1684 = vmatprep.subr.mxu0 0.0
        %1685 = vmatpush1.msra.mxu0 0.0
        %1686 = vmatprep.subr.mxu0 0.0
        %1687 = vmatpush1.msra.mxu0 0.0
        %1688 = vmatprep.subr.mxu0 0.0
        %1689 = vmatpush1.msra.mxu0 0.0
        %1690 = vmatprep.subr.mxu0 0.0
        %1691 = vmatpush1.msra.mxu0 0.0
        %1692 = vmatprep.subr.mxu0 0.0
        %1693 = vmatpush1.msra.mxu0 0.0
        %1694 = vmatprep.subr.mxu0 0.0
        %1695 = vmatpush1.msra.mxu0 0.0
        %1696 = vmatprep.subr.mxu0 0.0
        %1697 = vmatpush1.msra.mxu0 0.0
        %1698 = vmatprep.subr.mxu0 0.0
        %1699 = vmatpush1.msra.mxu0 0.0
        %1700 = vmatprep.subr.mxu0 0.0
        %1701 = vmatpush1.msra.mxu0 0.0
        %1702 = vmatprep.subr.mxu0 0.0
        %1703 = vmatpush1.msra.mxu0 0.0
        %1704 = vmatprep.subr.mxu0 0.0
        %1705 = vmatpush1.msra.mxu0 0.0
        %1706 = vmatprep.subr.mxu0 0.0
        %1707 = vmatpush1.msra.mxu0 0.0
        %1708 = vmatprep.subr.mxu0 0.0
        %1709 = vmatpush1.msra.mxu0 0.0
        %1710 = vmatprep.subr.mxu0 0.0
        %1711 = vmatpush1.msra.mxu0 0.0
        %1712 = vmatprep.subr.mxu0 0.0
        %1713 = vmatpush1.msra.mxu0 0.0
        %1714 = vmatprep.subr.mxu0 0.0
        %1715 = vmatpush1.msra.mxu0 0.0
        %1716 = vmatprep.subr.mxu0 0.0
        %1717 = vmatpush1.msra.mxu0 0.0
        %1718 = vmatprep.subr.mxu0 0.0
        %1719 = vmatpush1.msra.mxu0 0.0
        %1720 = vmatprep.subr.mxu0 0.0
        %1721 = vmatpush1.msra.mxu0 0.0
        %1722 = vmatprep.subr.mxu0 0.0
        %1723 = vmatpush1.msra.mxu0 0.0
        %1724 = vmatprep.subr.mxu0 0.0
        %1725 = vmatpush1.msra.mxu0 0.0
        %1726 = vmatprep.subr.mxu0 0.0
        %1727 = vmatpush1.msra.mxu0 0.0
        %1728 = vmatprep.mubr.f32.mxu0 0.0
        %v1729 = vand.u32 %v1287, 4294901760
        %1730 = vmatmul.mubr.f32.gmra.mrb[0].mxu0 %v1729
        %v1731 = vpop.f32.mrb[0].mxu0
        %v1732 = vadd.f32 %v1660, %v1731
        %v1733 = vpop.f32.mrb[0].mxu0
        %1734 = vdwg.mxu0
        %v1735 = vsel %vm393, -1e+30, %v1732
        %v1744 = vlaneseq
        %v1745 = vshrl.u32 %v1744, 7
        %v1746 = vsub.s32 %v392, %v1745
        %v1747 = vrot.slane %v1202, %v1746
        %v1748 = vlaneseq
        %v1749 = vshrl.u32 %v1748, 7
        %v1750 = vsub.s32 %v392, %v1749
        %v1751 = vrot.slane %v1205, %v1750
        %v1752 = vlaneseq
        %v1753 = vshrl.u32 %v1752, 7
        %v1754 = vsub.s32 %v392, %v1753
        %v1755 = vrot.slane %v1208, %v1754
        %v1756 = vlaneseq
        %v1757 = vshrl.u32 %v1756, 7
        %v1758 = vsub.s32 %v392, %v1757
        %v1759 = vrot.slane %v1211, %v1758
        %v1760 = vlaneseq
        %v1761 = vshrl.u32 %v1760, 7
        %v1762 = vsub.s32 %v392, %v1761
        %v1763 = vrot.slane %v1214, %v1762
        %v1764 = vlaneseq
        %v1765 = vshrl.u32 %v1764, 7
        %v1766 = vsub.s32 %v392, %v1765
        %v1767 = vrot.slane %v1217, %v1766
        %v1768 = vlaneseq
        %v1769 = vshrl.u32 %v1768, 7
        %v1770 = vsub.s32 %v392, %v1769
        %v1771 = vrot.slane %v1220, %v1770
        %v1772 = vlaneseq
        %v1773 = vshrl.u32 %v1772, 7
        %v1774 = vsub.s32 %v392, %v1773
        %v1775 = vrot.slane %v1223, %v1774
        %v1776 = vsel %vm1270, %v1751, %v1747
        %v1777 = vsel %vm1272, %v1755, %v1776
        %v1778 = vsel %vm1274, %v1759, %v1777
        %v1779 = vsel %vm1276, %v1763, %v1778
        %v1780 = vsel %vm1278, %v1767, %v1779
        %v1781 = vsel %vm1280, %v1771, %v1780
        %v1782 = vsel %vm1282, %v1775, %v1781
        %vm1783 = vcmask 39936
        %v1784 = vsel %vm1783, %v1782, 0
        %vm1786 = vcmask 1044480
        %v1788 = vsel %vm1786, %v1229, 0
        %1790 = vmatprep.subr.mxu0 0.0
        %v1791 = vand.u32 %v1788, 4294901760
        %1792 = vmatpush1.msra.mxu0 %v1791
        %1793 = vmatprep.subr.mxu0 0.0
        %1794 = vmatpush1.msra.mxu0 0.0
        %1795 = vmatprep.subr.mxu0 0.0
        %1796 = vmatpush1.msra.mxu0 0.0
        %1797 = vmatprep.subr.mxu0 0.0
        %1798 = vmatpush1.msra.mxu0 0.0
        %1799 = vmatprep.subr.mxu0 0.0
        %1800 = vmatpush1.msra.mxu0 0.0
        %1801 = vmatprep.subr.mxu0 0.0
        %1802 = vmatpush1.msra.mxu0 0.0
        %1803 = vmatprep.subr.mxu0 0.0
        %1804 = vmatpush1.msra.mxu0 0.0
        %1805 = vmatprep.subr.mxu0 0.0
        %1806 = vmatpush1.msra.mxu0 0.0
        %1807 = vmatprep.subr.mxu0 0.0
        %1808 = vmatpush1.msra.mxu0 0.0
        %1809 = vmatprep.subr.mxu0 0.0
        %1810 = vmatpush1.msra.mxu0 0.0
        %1811 = vmatprep.subr.mxu0 0.0
        %1812 = vmatpush1.msra.mxu0 0.0
        %1813 = vmatprep.subr.mxu0 0.0
        %1814 = vmatpush1.msra.mxu0 0.0
        %1815 = vmatprep.subr.mxu0 0.0
        %1816 = vmatpush1.msra.mxu0 0.0
        %1817 = vmatprep.subr.mxu0 0.0
        %1818 = vmatpush1.msra.mxu0 0.0
        %1819 = vmatprep.subr.mxu0 0.0
        %1820 = vmatpush1.msra.mxu0 0.0
        %1821 = vmatprep.subr.mxu0 0.0
        %1822 = vmatpush1.msra.mxu0 0.0
        %1823 = vmatprep.subr.mxu0 0.0
        %1824 = vmatpush1.msra.mxu0 0.0
        %1825 = vmatprep.subr.mxu0 0.0
        %1826 = vmatpush1.msra.mxu0 0.0
        %1827 = vmatprep.subr.mxu0 0.0
        %1828 = vmatpush1.msra.mxu0 0.0
        %1829 = vmatprep.subr.mxu0 0.0
        %1830 = vmatpush1.msra.mxu0 0.0
        %1831 = vmatprep.subr.mxu0 0.0
        %1832 = vmatpush1.msra.mxu0 0.0
        %1833 = vmatprep.subr.mxu0 0.0
        %1834 = vmatpush1.msra.mxu0 0.0
        %1835 = vmatprep.subr.mxu0 0.0
        %1836 = vmatpush1.msra.mxu0 0.0
        %1837 = vmatprep.subr.mxu0 0.0
        %1838 = vmatpush1.msra.mxu0 0.0
        %1839 = vmatprep.subr.mxu0 0.0
        %1840 = vmatpush1.msra.mxu0 0.0
        %1841 = vmatprep.subr.mxu0 0.0
        %1842 = vmatpush1.msra.mxu0 0.0
        %1843 = vmatprep.subr.mxu0 0.0
        %1844 = vmatpush1.msra.mxu0 0.0
        %1845 = vmatprep.subr.mxu0 0.0
        %1846 = vmatpush1.msra.mxu0 0.0
        %1847 = vmatprep.subr.mxu0 0.0
        %1848 = vmatpush1.msra.mxu0 0.0
        %1849 = vmatprep.subr.mxu0 0.0
        %1850 = vmatpush1.msra.mxu0 0.0
        %1851 = vmatprep.subr.mxu0 0.0
        %1852 = vmatpush1.msra.mxu0 0.0
        %1853 = vmatprep.subr.mxu0 0.0
        %1854 = vmatpush1.msra.mxu0 0.0
        %1855 = vmatprep.mubr.f32.mxu0 0.0
        %v1856 = vand.u32 %v1784, 4294901760
        %v1857 = vsub.f32 %v1784, %v1856
        %v1858 = vand.u32 %v1857, 4294901760
        %v1859 = vsub.f32 %v1857, %v1858
        %v1860 = vand.u32 %v1859, 4294901760
        %1861 = vmatmul.mubr.f32.gmra.mrb[0].mxu0 %v1860
        %v1862 = vpop.f32.mrb[0].mxu0
        %v1863 = vadd.f32 0.0, %v1862
        %v1864 = vpop.f32.mrb[0].mxu0
        %1865 = vdwg.mxu0
        %1866 = vmatprep.subr.mxu0 0.0
        %v1867 = vand.u32 %v1788, 4294901760
        %v1868 = vsub.f32 %v1788, %v1867
        %v1869 = vand.u32 %v1868, 4294901760
        %v1870 = vsub.f32 %v1868, %v1869
        %v1871 = vand.u32 %v1870, 4294901760
        %1872 = vmatpush1.msra.mxu0 %v1871
        %1873 = vmatprep.subr.mxu0 0.0
        %1874 = vmatpush1.msra.mxu0 0.0
        %1875 = vmatprep.subr.mxu0 0.0
        %1876 = vmatpush1.msra.mxu0 0.0
        %1877 = vmatprep.subr.mxu0 0.0
        %1878 = vmatpush1.msra.mxu0 0.0
        %1879 = vmatprep.subr.mxu0 0.0
        %1880 = vmatpush1.msra.mxu0 0.0
        %1881 = vmatprep.subr.mxu0 0.0
        %1882 = vmatpush1.msra.mxu0 0.0
        %1883 = vmatprep.subr.mxu0 0.0
        %1884 = vmatpush1.msra.mxu0 0.0
        %1885 = vmatprep.subr.mxu0 0.0
        %1886 = vmatpush1.msra.mxu0 0.0
        %1887 = vmatprep.subr.mxu0 0.0
        %1888 = vmatpush1.msra.mxu0 0.0
        %1889 = vmatprep.subr.mxu0 0.0
        %1890 = vmatpush1.msra.mxu0 0.0
        %1891 = vmatprep.subr.mxu0 0.0
        %1892 = vmatpush1.msra.mxu0 0.0
        %1893 = vmatprep.subr.mxu0 0.0
        %1894 = vmatpush1.msra.mxu0 0.0
        %1895 = vmatprep.subr.mxu0 0.0
        %1896 = vmatpush1.msra.mxu0 0.0
        %1897 = vmatprep.subr.mxu0 0.0
        %1898 = vmatpush1.msra.mxu0 0.0
        %1899 = vmatprep.subr.mxu0 0.0
        %1900 = vmatpush1.msra.mxu0 0.0
        %1901 = vmatprep.subr.mxu0 0.0
        %1902 = vmatpush1.msra.mxu0 0.0
        %1903 = vmatprep.subr.mxu0 0.0
        %1904 = vmatpush1.msra.mxu0 0.0
        %1905 = vmatprep.subr.mxu0 0.0
        %1906 = vmatpush1.msra.mxu0 0.0
        %1907 = vmatprep.subr.mxu0 0.0
        %1908 = vmatpush1.msra.mxu0 0.0
        %1909 = vmatprep.subr.mxu0 0.0
        %1910 = vmatpush1.msra.mxu0 0.0
        %1911 = vmatprep.subr.mxu0 0.0
        %1912 = vmatpush1.msra.mxu0 0.0
        %1913 = vmatprep.subr.mxu0 0.0
        %1914 = vmatpush1.msra.mxu0 0.0
        %1915 = vmatprep.subr.mxu0 0.0
        %1916 = vmatpush1.msra.mxu0 0.0
        %1917 = vmatprep.subr.mxu0 0.0
        %1918 = vmatpush1.msra.mxu0 0.0
        %1919 = vmatprep.subr.mxu0 0.0
        %1920 = vmatpush1.msra.mxu0 0.0
        %1921 = vmatprep.subr.mxu0 0.0
        %1922 = vmatpush1.msra.mxu0 0.0
        %1923 = vmatprep.subr.mxu0 0.0
        %1924 = vmatpush1.msra.mxu0 0.0
        %1925 = vmatprep.subr.mxu0 0.0
        %1926 = vmatpush1.msra.mxu0 0.0
        %1927 = vmatprep.subr.mxu0 0.0
        %1928 = vmatpush1.msra.mxu0 0.0
        %1929 = vmatprep.subr.mxu0 0.0
        %1930 = vmatpush1.msra.mxu0 0.0
        %1931 = vmatprep.subr.mxu0 0.0
        %1932 = vmatpush1.msra.mxu0 0.0
        %1933 = vmatprep.subr.mxu0 0.0
        %1934 = vmatpush1.msra.mxu0 0.0
        %1935 = vmatprep.mubr.f32.mxu0 0.0
        %v1936 = vand.u32 %v1784, 4294901760
        %1937 = vmatmul.mubr.f32.gmra.mrb[0].mxu0 %v1936
        %v1938 = vpop.f32.mrb[0].mxu0
        %v1939 = vadd.f32 %v1863, %v1938
        %v1940 = vpop.f32.mrb[0].mxu0
        %1941 = vdwg.mxu0
        %1942 = vmatprep.subr.mxu0 0.0
        %v1943 = vand.u32 %v1788, 4294901760
        %v1944 = vsub.f32 %v1788, %v1943
        %1945 = vmatpush1.msra.mxu0 %v1944
        %1946 = vmatprep.subr.mxu0 0.0
        %1947 = vmatpush1.msra.mxu0 0.0
        %1948 = vmatprep.subr.mxu0 0.0
        %1949 = vmatpush1.msra.mxu0 0.0
        %1950 = vmatprep.subr.mxu0 0.0
        %1951 = vmatpush1.msra.mxu0 0.0
        %1952 = vmatprep.subr.mxu0 0.0
        %1953 = vmatpush1.msra.mxu0 0.0
        %1954 = vmatprep.subr.mxu0 0.0
        %1955 = vmatpush1.msra.mxu0 0.0
        %1956 = vmatprep.subr.mxu0 0.0
        %1957 = vmatpush1.msra.mxu0 0.0
        %1958 = vmatprep.subr.mxu0 0.0
        %1959 = vmatpush1.msra.mxu0 0.0
        %1960 = vmatprep.subr.mxu0 0.0
        %1961 = vmatpush1.msra.mxu0 0.0
        %1962 = vmatprep.subr.mxu0 0.0
        %1963 = vmatpush1.msra.mxu0 0.0
        %1964 = vmatprep.subr.mxu0 0.0
        %1965 = vmatpush1.msra.mxu0 0.0
        %1966 = vmatprep.subr.mxu0 0.0
        %1967 = vmatpush1.msra.mxu0 0.0
        %1968 = vmatprep.subr.mxu0 0.0
        %1969 = vmatpush1.msra.mxu0 0.0
        %1970 = vmatprep.subr.mxu0 0.0
        %1971 = vmatpush1.msra.mxu0 0.0
        %1972 = vmatprep.subr.mxu0 0.0
        %1973 = vmatpush1.msra.mxu0 0.0
        %1974 = vmatprep.subr.mxu0 0.0
        %1975 = vmatpush1.msra.mxu0 0.0
        %1976 = vmatprep.subr.mxu0 0.0
        %1977 = vmatpush1.msra.mxu0 0.0
        %1978 = vmatprep.subr.mxu0 0.0
        %1979 = vmatpush1.msra.mxu0 0.0
        %1980 = vmatprep.subr.mxu0 0.0
        %1981 = vmatpush1.msra.mxu0 0.0
        %1982 = vmatprep.subr.mxu0 0.0
        %1983 = vmatpush1.msra.mxu0 0.0
        %1984 = vmatprep.subr.mxu0 0.0
        %1985 = vmatpush1.msra.mxu0 0.0
        %1986 = vmatprep.subr.mxu0 0.0
        %1987 = vmatpush1.msra.mxu0 0.0
        %1988 = vmatprep.subr.mxu0 0.0
        %1989 = vmatpush1.msra.mxu0 0.0
        %1990 = vmatprep.subr.mxu0 0.0
        %1991 = vmatpush1.msra.mxu0 0.0
        %1992 = vmatprep.subr.mxu0 0.0
        %1993 = vmatpush1.msra.mxu0 0.0
        %1994 = vmatprep.subr.mxu0 0.0
        %1995 = vmatpush1.msra.mxu0 0.0
        %1996 = vmatprep.subr.mxu0 0.0
        %1997 = vmatpush1.msra.mxu0 0.0
        %1998 = vmatprep.subr.mxu0 0.0
        %1999 = vmatpush1.msra.mxu0 0.0
        %2000 = vmatprep.subr.mxu0 0.0
        %2001 = vmatpush1.msra.mxu0 0.0
        %2002 = vmatprep.subr.mxu0 0.0
        %2003 = vmatpush1.msra.mxu0 0.0
        %2004 = vmatprep.subr.mxu0 0.0
        %2005 = vmatpush1.msra.mxu0 0.0
        %2006 = vmatprep.subr.mxu0 0.0
        %2007 = vmatpush1.msra.mxu0 0.0
        %2008 = vmatprep.mubr.f32.mxu0 0.0
        %v2009 = vand.u32 %v1784, 4294901760
        %v2010 = vsub.f32 %v1784, %v2009
        %2011 = vmatmul.mubr.f32.gmra.mrb[0].mxu0 %v2010
        %v2012 = vpop.f32.mrb[0].mxu0
        %v2013 = vadd.f32 %v1939, %v2012
        %v2014 = vpop.f32.mrb[0].mxu0
        %2015 = vdwg.mxu0
        %2016 = vmatprep.subr.mxu0 0.0
        %v2017 = vand.u32 %v1788, 4294901760
        %2018 = vmatpush1.msra.mxu0 %v2017
        %2019 = vmatprep.subr.mxu0 0.0
        %2020 = vmatpush1.msra.mxu0 0.0
        %2021 = vmatprep.subr.mxu0 0.0
        %2022 = vmatpush1.msra.mxu0 0.0
        %2023 = vmatprep.subr.mxu0 0.0
        %2024 = vmatpush1.msra.mxu0 0.0
        %2025 = vmatprep.subr.mxu0 0.0
        %2026 = vmatpush1.msra.mxu0 0.0
        %2027 = vmatprep.subr.mxu0 0.0
        %2028 = vmatpush1.msra.mxu0 0.0
        %2029 = vmatprep.subr.mxu0 0.0
        %2030 = vmatpush1.msra.mxu0 0.0
        %2031 = vmatprep.subr.mxu0 0.0
        %2032 = vmatpush1.msra.mxu0 0.0
        %2033 = vmatprep.subr.mxu0 0.0
        %2034 = vmatpush1.msra.mxu0 0.0
        %2035 = vmatprep.subr.mxu0 0.0
        %2036 = vmatpush1.msra.mxu0 0.0
        %2037 = vmatprep.subr.mxu0 0.0
        %2038 = vmatpush1.msra.mxu0 0.0
        %2039 = vmatprep.subr.mxu0 0.0
        %2040 = vmatpush1.msra.mxu0 0.0
        %2041 = vmatprep.subr.mxu0 0.0
        %2042 = vmatpush1.msra.mxu0 0.0
        %2043 = vmatprep.subr.mxu0 0.0
        %2044 = vmatpush1.msra.mxu0 0.0
        %2045 = vmatprep.subr.mxu0 0.0
        %2046 = vmatpush1.msra.mxu0 0.0
        %2047 = vmatprep.subr.mxu0 0.0
        %2048 = vmatpush1.msra.mxu0 0.0
        %2049 = vmatprep.subr.mxu0 0.0
        %2050 = vmatpush1.msra.mxu0 0.0
        %2051 = vmatprep.subr.mxu0 0.0
        %2052 = vmatpush1.msra.mxu0 0.0
        %2053 = vmatprep.subr.mxu0 0.0
        %2054 = vmatpush1.msra.mxu0 0.0
        %2055 = vmatprep.subr.mxu0 0.0
        %2056 = vmatpush1.msra.mxu0 0.0
        %2057 = vmatprep.subr.mxu0 0.0
        %2058 = vmatpush1.msra.mxu0 0.0
        %2059 = vmatprep.subr.mxu0 0.0
        %2060 = vmatpush1.msra.mxu0 0.0
        %2061 = vmatprep.subr.mxu0 0.0
        %2062 = vmatpush1.msra.mxu0 0.0
        %2063 = vmatprep.subr.mxu0 0.0
        %2064 = vmatpush1.msra.mxu0 0.0
        %2065 = vmatprep.subr.mxu0 0.0
        %2066 = vmatpush1.msra.mxu0 0.0
        %2067 = vmatprep.subr.mxu0 0.0
        %2068 = vmatpush1.msra.mxu0 0.0
        %2069 = vmatprep.subr.mxu0 0.0
        %2070 = vmatpush1.msra.mxu0 0.0
        %2071 = vmatprep.subr.mxu0 0.0
        %2072 = vmatpush1.msra.mxu0 0.0
        %2073 = vmatprep.subr.mxu0 0.0
        %2074 = vmatpush1.msra.mxu0 0.0
        %2075 = vmatprep.subr.mxu0 0.0
        %2076 = vmatpush1.msra.mxu0 0.0
        %2077 = vmatprep.subr.mxu0 0.0
        %2078 = vmatpush1.msra.mxu0 0.0
        %2079 = vmatprep.subr.mxu0 0.0
        %2080 = vmatpush1.msra.mxu0 0.0
        %2081 = vmatprep.mubr.f32.mxu0 0.0
        %v2082 = vand.u32 %v1784, 4294901760
        %v2083 = vsub.f32 %v1784, %v2082
        %v2084 = vand.u32 %v2083, 4294901760
        %2085 = vmatmul.mubr.f32.gmra.mrb[0].mxu0 %v2084
        %v2086 = vpop.f32.mrb[0].mxu0
        %v2087 = vadd.f32 %v2013, %v2086
        %v2088 = vpop.f32.mrb[0].mxu0
        %2089 = vdwg.mxu0
        %2090 = vmatprep.subr.mxu0 0.0
        %v2091 = vand.u32 %v1788, 4294901760
        %v2092 = vsub.f32 %v1788, %v2091
        %v2093 = vand.u32 %v2092, 4294901760
        %2094 = vmatpush1.msra.mxu0 %v2093
        %2095 = vmatprep.subr.mxu0 0.0
        %2096 = vmatpush1.msra.mxu0 0.0
        %2097 = vmatprep.subr.mxu0 0.0
        %2098 = vmatpush1.msra.mxu0 0.0
        %2099 = vmatprep.subr.mxu0 0.0
        %2100 = vmatpush1.msra.mxu0 0.0
        %2101 = vmatprep.subr.mxu0 0.0
        %2102 = vmatpush1.msra.mxu0 0.0
        %2103 = vmatprep.subr.mxu0 0.0
        %2104 = vmatpush1.msra.mxu0 0.0
        %2105 = vmatprep.subr.mxu0 0.0
        %2106 = vmatpush1.msra.mxu0 0.0
        %2107 = vmatprep.subr.mxu0 0.0
        %2108 = vmatpush1.msra.mxu0 0.0
        %2109 = vmatprep.subr.mxu0 0.0
        %2110 = vmatpush1.msra.mxu0 0.0
        %2111 = vmatprep.subr.mxu0 0.0
        %2112 = vmatpush1.msra.mxu0 0.0
        %2113 = vmatprep.subr.mxu0 0.0
        %2114 = vmatpush1.msra.mxu0 0.0
        %2115 = vmatprep.subr.mxu0 0.0
        %2116 = vmatpush1.msra.mxu0 0.0
        %2117 = vmatprep.subr.mxu0 0.0
        %2118 = vmatpush1.msra.mxu0 0.0
        %2119 = vmatprep.subr.mxu0 0.0
        %2120 = vmatpush1.msra.mxu0 0.0
        %2121 = vmatprep.subr.mxu0 0.0
        %2122 = vmatpush1.msra.mxu0 0.0
        %2123 = vmatprep.subr.mxu0 0.0
        %2124 = vmatpush1.msra.mxu0 0.0
        %2125 = vmatprep.subr.mxu0 0.0
        %2126 = vmatpush1.msra.mxu0 0.0
        %2127 = vmatprep.subr.mxu0 0.0
        %2128 = vmatpush1.msra.mxu0 0.0
        %2129 = vmatprep.subr.mxu0 0.0
        %2130 = vmatpush1.msra.mxu0 0.0
        %2131 = vmatprep.subr.mxu0 0.0
        %2132 = vmatpush1.msra.mxu0 0.0
        %2133 = vmatprep.subr.mxu0 0.0
        %2134 = vmatpush1.msra.mxu0 0.0
        %2135 = vmatprep.subr.mxu0 0.0
        %2136 = vmatpush1.msra.mxu0 0.0
        %2137 = vmatprep.subr.mxu0 0.0
        %2138 = vmatpush1.msra.mxu0 0.0
        %2139 = vmatprep.subr.mxu0 0.0
        %2140 = vmatpush1.msra.mxu0 0.0
        %2141 = vmatprep.subr.mxu0 0.0
        %2142 = vmatpush1.msra.mxu0 0.0
        %2143 = vmatprep.subr.mxu0 0.0
        %2144 = vmatpush1.msra.mxu0 0.0
        %2145 = vmatprep.subr.mxu0 0.0
        %2146 = vmatpush1.msra.mxu0 0.0
        %2147 = vmatprep.subr.mxu0 0.0
        %2148 = vmatpush1.msra.mxu0 0.0
        %2149 = vmatprep.subr.mxu0 0.0
        %2150 = vmatpush1.msra.mxu0 0.0
        %2151 = vmatprep.subr.mxu0 0.0
        %2152 = vmatpush1.msra.mxu0 0.0
        %2153 = vmatprep.subr.mxu0 0.0
        %2154 = vmatpush1.msra.mxu0 0.0
        %2155 = vmatprep.subr.mxu0 0.0
        %2156 = vmatpush1.msra.mxu0 0.0
        %2157 = vmatprep.mubr.f32.mxu0 0.0
        %v2158 = vand.u32 %v1784, 4294901760
        %2159 = vmatmul.mubr.f32.gmra.mrb[0].mxu0 %v2158
        %v2160 = vpop.f32.mrb[0].mxu0
        %v2161 = vadd.f32 %v2087, %v2160
        %v2162 = vpop.f32.mrb[0].mxu0
        %2163 = vdwg.mxu0
        %2164 = vmatprep.subr.mxu0 0.0
        %v2165 = vand.u32 %v1788, 4294901760
        %2166 = vmatpush1.msra.mxu0 %v2165
        %2167 = vmatprep.subr.mxu0 0.0
        %2168 = vmatpush1.msra.mxu0 0.0
        %2169 = vmatprep.subr.mxu0 0.0
        %2170 = vmatpush1.msra.mxu0 0.0
        %2171 = vmatprep.subr.mxu0 0.0
        %2172 = vmatpush1.msra.mxu0 0.0
        %2173 = vmatprep.subr.mxu0 0.0
        %2174 = vmatpush1.msra.mxu0 0.0
        %2175 = vmatprep.subr.mxu0 0.0
        %2176 = vmatpush1.msra.mxu0 0.0
        %2177 = vmatprep.subr.mxu0 0.0
        %2178 = vmatpush1.msra.mxu0 0.0
        %2179 = vmatprep.subr.mxu0 0.0
        %2180 = vmatpush1.msra.mxu0 0.0
        %2181 = vmatprep.subr.mxu0 0.0
        %2182 = vmatpush1.msra.mxu0 0.0
        %2183 = vmatprep.subr.mxu0 0.0
        %2184 = vmatpush1.msra.mxu0 0.0
        %2185 = vmatprep.subr.mxu0 0.0
        %2186 = vmatpush1.msra.mxu0 0.0
        %2187 = vmatprep.subr.mxu0 0.0
        %2188 = vmatpush1.msra.mxu0 0.0
        %2189 = vmatprep.subr.mxu0 0.0
        %2190 = vmatpush1.msra.mxu0 0.0
        %2191 = vmatprep.subr.mxu0 0.0
        %2192 = vmatpush1.msra.mxu0 0.0
        %2193 = vmatprep.subr.mxu0 0.0
        %2194 = vmatpush1.msra.mxu0 0.0
        %2195 = vmatprep.subr.mxu0 0.0
        %2196 = vmatpush1.msra.mxu0 0.0
        %2197 = vmatprep.subr.mxu0 0.0
        %2198 = vmatpush1.msra.mxu0 0.0
        %2199 = vmatprep.subr.mxu0 0.0
        %2200 = vmatpush1.msra.mxu0 0.0
        %2201 = vmatprep.subr.mxu0 0.0
        %2202 = vmatpush1.msra.mxu0 0.0
        %2203 = vmatprep.subr.mxu0 0.0
        %2204 = vmatpush1.msra.mxu0 0.0
        %2205 = vmatprep.subr.mxu0 0.0
        %2206 = vmatpush1.msra.mxu0 0.0
        %2207 = vmatprep.subr.mxu0 0.0
        %2208 = vmatpush1.msra.mxu0 0.0
        %2209 = vmatprep.subr.mxu0 0.0
        %2210 = vmatpush1.msra.mxu0 0.0
        %2211 = vmatprep.subr.mxu0 0.0
        %2212 = vmatpush1.msra.mxu0 0.0
        %2213 = vmatprep.subr.mxu0 0.0
        %2214 = vmatpush1.msra.mxu0 0.0
        %2215 = vmatprep.subr.mxu0 0.0
        %2216 = vmatpush1.msra.mxu0 0.0
        %2217 = vmatprep.subr.mxu0 0.0
        %2218 = vmatpush1.msra.mxu0 0.0
        %2219 = vmatprep.subr.mxu0 0.0
        %2220 = vmatpush1.msra.mxu0 0.0
        %2221 = vmatprep.subr.mxu0 0.0
        %2222 = vmatpush1.msra.mxu0 0.0
        %2223 = vmatprep.subr.mxu0 0.0
        %2224 = vmatpush1.msra.mxu0 0.0
        %2225 = vmatprep.subr.mxu0 0.0
        %2226 = vmatpush1.msra.mxu0 0.0
        %2227 = vmatprep.subr.mxu0 0.0
        %2228 = vmatpush1.msra.mxu0 0.0
        %2229 = vmatprep.mubr.f32.mxu0 0.0
        %v2230 = vand.u32 %v1784, 4294901760
        %2231 = vmatmul.mubr.f32.gmra.mrb[0].mxu0 %v2230
        %v2232 = vpop.f32.mrb[0].mxu0
        %v2233 = vadd.f32 %v2161, %v2232
        %v2234 = vpop.f32.mrb[0].mxu0
        %2235 = vdwg.mxu0
        %v2236 = vsel %vm394, -1e+30, %v2233
        %v2237 = vsel %vm395, 0.0, -1e+30
        loop: start=0, step=1, limit=11
        $region65: #{transducer_forward.1} parent=43 // loop_pre_header
          _
        $region66: #{transducer_forward.1} parent=43 // loop_header
          %s2239 = sphi 0, %s2243
          %p2240 = scmp.ge.s32.totalorder %s2239, 11
          %v2244 = vphi %v2237, %v3151
        $region67: #{transducer_forward.1} parent=43 // loop_header_branch
          %2242 = sbr.rel (%p2240) target = $region71
        $region68: #{transducer_forward.1} parent=43 // loop_body
          %2245 = vmatprep.subr.mxu0 0.0
          %v2246 = vand.u32 %v2244, 4294901760
          %2247 = vmatpush1.msra.mxu0 %v2246
          %2248 = vmatprep.subr.mxu0 0.0
          %2249 = vmatpush1.msra.mxu0 0.0
          %2250 = vmatprep.subr.mxu0 0.0
          %2251 = vmatpush1.msra.mxu0 0.0
          %2252 = vmatprep.subr.mxu0 0.0
          %2253 = vmatpush1.msra.mxu0 0.0
          %2254 = vmatprep.subr.mxu0 0.0
          %2255 = vmatpush1.msra.mxu0 0.0
          %2256 = vmatprep.subr.mxu0 0.0
          %2257 = vmatpush1.msra.mxu0 0.0
          %2258 = vmatprep.subr.mxu0 0.0
          %2259 = vmatpush1.msra.mxu0 0.0
          %2260 = vmatprep.subr.mxu0 0.0
          %2261 = vmatpush1.msra.mxu0 0.0
          %2262 = vmatprep.subr.mxu0 0.0
          %2263 = vmatpush1.msra.mxu0 0.0
          %2264 = vmatprep.subr.mxu0 0.0
          %2265 = vmatpush1.msra.mxu0 0.0
          %2266 = vmatprep.subr.mxu0 0.0
          %2267 = vmatpush1.msra.mxu0 0.0
          %2268 = vmatprep.subr.mxu0 0.0
          %2269 = vmatpush1.msra.mxu0 0.0
          %2270 = vmatprep.subr.mxu0 0.0
          %2271 = vmatpush1.msra.mxu0 0.0
          %2272 = vmatprep.subr.mxu0 0.0
          %2273 = vmatpush1.msra.mxu0 0.0
          %2274 = vmatprep.subr.mxu0 0.0
          %2275 = vmatpush1.msra.mxu0 0.0
          %2276 = vmatprep.subr.mxu0 0.0
          %2277 = vmatpush1.msra.mxu0 0.0
          %2278 = vmatprep.subr.mxu0 0.0
          %2279 = vmatpush1.msra.mxu0 0.0
          %2280 = vmatprep.subr.mxu0 0.0
          %2281 = vmatpush1.msra.mxu0 0.0
          %2282 = vmatprep.subr.mxu0 0.0
          %2283 = vmatpush1.msra.mxu0 0.0
          %2284 = vmatprep.subr.mxu0 0.0
          %2285 = vmatpush1.msra.mxu0 0.0
          %2286 = vmatprep.subr.mxu0 0.0
          %2287 = vmatpush1.msra.mxu0 0.0
          %2288 = vmatprep.subr.mxu0 0.0
          %2289 = vmatpush1.msra.mxu0 0.0
          %2290 = vmatprep.subr.mxu0 0.0
          %2291 = vmatpush1.msra.mxu0 0.0
          %2292 = vmatprep.subr.mxu0 0.0
          %2293 = vmatpush1.msra.mxu0 0.0
          %2294 = vmatprep.subr.mxu0 0.0
          %2295 = vmatpush1.msra.mxu0 0.0
          %2296 = vmatprep.subr.mxu0 0.0
          %2297 = vmatpush1.msra.mxu0 0.0
          %2298 = vmatprep.subr.mxu0 0.0
          %2299 = vmatpush1.msra.mxu0 0.0
          %2300 = vmatprep.subr.mxu0 0.0
          %2301 = vmatpush1.msra.mxu0 0.0
          %2302 = vmatprep.subr.mxu0 0.0
          %2303 = vmatpush1.msra.mxu0 0.0
          %2304 = vmatprep.subr.mxu0 0.0
          %2305 = vmatpush1.msra.mxu0 0.0
          %2306 = vmatprep.subr.mxu0 0.0
          %2307 = vmatpush1.msra.mxu0 0.0
          %2308 = vmatprep.subr.mxu0 0.0
          %2309 = vmatpush1.msra.mxu0 0.0
          %2310 = vmatprep.mubr.f32.mxu0 0.0
          %v2311 = vand.u32 %v1287, 4294901760
          %v2312 = vsub.f32 %v1287, %v2311
          %v2313 = vand.u32 %v2312, 4294901760
          %v2314 = vsub.f32 %v2312, %v2313
          %v2315 = vand.u32 %v2314, 4294901760
          %2316 = vmatmul.mubr.f32.gmra.mrb[0].mxu0 %v2315
          %v2317 = vpop.f32.mrb[0].mxu0
          %v2318 = vadd.f32 %v1735, %v2317
          %v2319 = vpop.f32.mrb[0].mxu0
          %2320 = vdwg.mxu0
          %2321 = vmatprep.subr.mxu0 0.0
          %v2322 = vand.u32 %v2244, 4294901760
          %v2323 = vsub.f32 %v2244, %v2322
          %v2324 = vand.u32 %v2323, 4294901760
          %v2325 = vsub.f32 %v2323, %v2324
          %v2326 = vand.u32 %v2325, 4294901760
          %2327 = vmatpush1.msra.mxu0 %v2326
          %2328 = vmatprep.subr.mxu0 0.0
          %2329 = vmatpush1.msra.mxu0 0.0
          %2330 = vmatprep.subr.mxu0 0.0
          %2331 = vmatpush1.msra.mxu0 0.0
          %2332 = vmatprep.subr.mxu0 0.0
          %2333 = vmatpush1.msra.mxu0 0.0
          %2334 = vmatprep.subr.mxu0 0.0
          %2335 = vmatpush1.msra.mxu0 0.0
          %2336 = vmatprep.subr.mxu0 0.0
          %2337 = vmatpush1.msra.mxu0 0.0
          %2338 = vmatprep.subr.mxu0 0.0
          %2339 = vmatpush1.msra.mxu0 0.0
          %2340 = vmatprep.subr.mxu0 0.0
          %2341 = vmatpush1.msra.mxu0 0.0
          %2342 = vmatprep.subr.mxu0 0.0
          %2343 = vmatpush1.msra.mxu0 0.0
          %2344 = vmatprep.subr.mxu0 0.0
          %2345 = vmatpush1.msra.mxu0 0.0
          %2346 = vmatprep.subr.mxu0 0.0
          %2347 = vmatpush1.msra.mxu0 0.0
          %2348 = vmatprep.subr.mxu0 0.0
          %2349 = vmatpush1.msra.mxu0 0.0
          %2350 = vmatprep.subr.mxu0 0.0
          %2351 = vmatpush1.msra.mxu0 0.0
          %2352 = vmatprep.subr.mxu0 0.0
          %2353 = vmatpush1.msra.mxu0 0.0
          %2354 = vmatprep.subr.mxu0 0.0
          %2355 = vmatpush1.msra.mxu0 0.0
          %2356 = vmatprep.subr.mxu0 0.0
          %2357 = vmatpush1.msra.mxu0 0.0
          %2358 = vmatprep.subr.mxu0 0.0
          %2359 = vmatpush1.msra.mxu0 0.0
          %2360 = vmatprep.subr.mxu0 0.0
          %2361 = vmatpush1.msra.mxu0 0.0
          %2362 = vmatprep.subr.mxu0 0.0
          %2363 = vmatpush1.msra.mxu0 0.0
          %2364 = vmatprep.subr.mxu0 0.0
          %2365 = vmatpush1.msra.mxu0 0.0
          %2366 = vmatprep.subr.mxu0 0.0
          %2367 = vmatpush1.msra.mxu0 0.0
          %2368 = vmatprep.subr.mxu0 0.0
          %2369 = vmatpush1.msra.mxu0 0.0
          %2370 = vmatprep.subr.mxu0 0.0
          %2371 = vmatpush1.msra.mxu0 0.0
          %2372 = vmatprep.subr.mxu0 0.0
          %2373 = vmatpush1.msra.mxu0 0.0
          %2374 = vmatprep.subr.mxu0 0.0
          %2375 = vmatpush1.msra.mxu0 0.0
          %2376 = vmatprep.subr.mxu0 0.0
          %2377 = vmatpush1.msra.mxu0 0.0
          %2378 = vmatprep.subr.mxu0 0.0
          %2379 = vmatpush1.msra.mxu0 0.0
          %2380 = vmatprep.subr.mxu0 0.0
          %2381 = vmatpush1.msra.mxu0 0.0
          %2382 = vmatprep.subr.mxu0 0.0
          %2383 = vmatpush1.msra.mxu0 0.0
          %2384 = vmatprep.subr.mxu0 0.0
          %2385 = vmatpush1.msra.mxu0 0.0
          %2386 = vmatprep.subr.mxu0 0.0
          %2387 = vmatpush1.msra.mxu0 0.0
          %2388 = vmatprep.subr.mxu0 0.0
          %2389 = vmatpush1.msra.mxu0 0.0
          %2390 = vmatprep.mubr.f32.mxu0 0.0
          %v2391 = vand.u32 %v1287, 4294901760
          %2392 = vmatmul.mubr.f32.gmra.mrb[0].mxu0 %v2391
          %v2393 = vpop.f32.mrb[0].mxu0
          %v2394 = vadd.f32 %v2318, %v2393
          %v2395 = vpop.f32.mrb[0].mxu0
          %2396 = vdwg.mxu0
          %2397 = vmatprep.subr.mxu0 0.0
          %v2398 = vand.u32 %v2244, 4294901760
          %v2399 = vsub.f32 %v2244, %v2398
          %2400 = vmatpush1.msra.mxu0 %v2399
          %2401 = vmatprep.subr.mxu0 0.0
          %2402 = vmatpush1.msra.mxu0 0.0
          %2403 = vmatprep.subr.mxu0 0.0
          %2404 = vmatpush1.msra.mxu0 0.0
          %2405 = vmatprep.subr.mxu0 0.0
          %2406 = vmatpush1.msra.mxu0 0.0
          %2407 = vmatprep.subr.mxu0 0.0
          %2408 = vmatpush1.msra.mxu0 0.0
          %2409 = vmatprep.subr.mxu0 0.0
          %2410 = vmatpush1.msra.mxu0 0.0
          %2411 = vmatprep.subr.mxu0 0.0
          %2412 = vmatpush1.msra.mxu0 0.0
          %2413 = vmatprep.subr.mxu0 0.0
          %2414 = vmatpush1.msra.mxu0 0.0
          %2415 = vmatprep.subr.mxu0 0.0
          %2416 = vmatpush1.msra.mxu0 0.0
          %2417 = vmatprep.subr.mxu0 0.0
          %2418 = vmatpush1.msra.mxu0 0.0
          %2419 = vmatprep.subr.mxu0 0.0
          %2420 = vmatpush1.msra.mxu0 0.0
          %2421 = vmatprep.subr.mxu0 0.0
          %2422 = vmatpush1.msra.mxu0 0.0
          %2423 = vmatprep.subr.mxu0 0.0
          %2424 = vmatpush1.msra.mxu0 0.0
          %2425 = vmatprep.subr.mxu0 0.0
          %2426 = vmatpush1.msra.mxu0 0.0
          %2427 = vmatprep.subr.mxu0 0.0
          %2428 = vmatpush1.msra.mxu0 0.0
          %2429 = vmatprep.subr.mxu0 0.0
          %2430 = vmatpush1.msra.mxu0 0.0
          %2431 = vmatprep.subr.mxu0 0.0
          %2432 = vmatpush1.msra.mxu0 0.0
          %2433 = vmatprep.subr.mxu0 0.0
          %2434 = vmatpush1.msra.mxu0 0.0
          %2435 = vmatprep.subr.mxu0 0.0
          %2436 = vmatpush1.msra.mxu0 0.0
          %2437 = vmatprep.subr.mxu0 0.0
          %2438 = vmatpush1.msra.mxu0 0.0
          %2439 = vmatprep.subr.mxu0 0.0
          %2440 = vmatpush1.msra.mxu0 0.0
          %2441 = vmatprep.subr.mxu0 0.0
          %2442 = vmatpush1.msra.mxu0 0.0
          %2443 = vmatprep.subr.mxu0 0.0
          %2444 = vmatpush1.msra.mxu0 0.0
          %2445 = vmatprep.subr.mxu0 0.0
          %2446 = vmatpush1.msra.mxu0 0.0
          %2447 = vmatprep.subr.mxu0 0.0
          %2448 = vmatpush1.msra.mxu0 0.0
          %2449 = vmatprep.subr.mxu0 0.0
          %2450 = vmatpush1.msra.mxu0 0.0
          %2451 = vmatprep.subr.mxu0 0.0
          %2452 = vmatpush1.msra.mxu0 0.0
          %2453 = vmatprep.subr.mxu0 0.0
          %2454 = vmatpush1.msra.mxu0 0.0
          %2455 = vmatprep.subr.mxu0 0.0
          %2456 = vmatpush1.msra.mxu0 0.0
          %2457 = vmatprep.subr.mxu0 0.0
          %2458 = vmatpush1.msra.mxu0 0.0
          %2459 = vmatprep.subr.mxu0 0.0
          %2460 = vmatpush1.msra.mxu0 0.0
          %2461 = vmatprep.subr.mxu0 0.0
          %2462 = vmatpush1.msra.mxu0 0.0
          %2463 = vmatprep.mubr.f32.mxu0 0.0
          %v2464 = vand.u32 %v1287, 4294901760
          %v2465 = vsub.f32 %v1287, %v2464
          %2466 = vmatmul.mubr.f32.gmra.mrb[0].mxu0 %v2465
          %v2467 = vpop.f32.mrb[0].mxu0
          %v2468 = vadd.f32 %v2394, %v2467
          %v2469 = vpop.f32.mrb[0].mxu0
          %2470 = vdwg.mxu0
          %2471 = vmatprep.subr.mxu0 0.0
          %v2472 = vand.u32 %v2244, 4294901760
          %2473 = vmatpush1.msra.mxu0 %v2472
          %2474 = vmatprep.subr.mxu0 0.0
          %2475 = vmatpush1.msra.mxu0 0.0
          %2476 = vmatprep.subr.mxu0 0.0
          %2477 = vmatpush1.msra.mxu0 0.0
          %2478 = vmatprep.subr.mxu0 0.0
          %2479 = vmatpush1.msra.mxu0 0.0
          %2480 = vmatprep.subr.mxu0 0.0
          %2481 = vmatpush1.msra.mxu0 0.0
          %2482 = vmatprep.subr.mxu0 0.0
          %2483 = vmatpush1.msra.mxu0 0.0
          %2484 = vmatprep.subr.mxu0 0.0
          %2485 = vmatpush1.msra.mxu0 0.0
          %2486 = vmatprep.subr.mxu0 0.0
          %2487 = vmatpush1.msra.mxu0 0.0
          %2488 = vmatprep.subr.mxu0 0.0
          %2489 = vmatpush1.msra.mxu0 0.0
          %2490 = vmatprep.subr.mxu0 0.0
          %2491 = vmatpush1.msra.mxu0 0.0
          %2492 = vmatprep.subr.mxu0 0.0
          %2493 = vmatpush1.msra.mxu0 0.0
          %2494 = vmatprep.subr.mxu0 0.0
          %2495 = vmatpush1.msra.mxu0 0.0
          %2496 = vmatprep.subr.mxu0 0.0
          %2497 = vmatpush1.msra.mxu0 0.0
          %2498 = vmatprep.subr.mxu0 0.0
          %2499 = vmatpush1.msra.mxu0 0.0
          %2500 = vmatprep.subr.mxu0 0.0
          %2501 = vmatpush1.msra.mxu0 0.0
          %2502 = vmatprep.subr.mxu0 0.0
          %2503 = vmatpush1.msra.mxu0 0.0
          %2504 = vmatprep.subr.mxu0 0.0
          %2505 = vmatpush1.msra.mxu0 0.0
          %2506 = vmatprep.subr.mxu0 0.0
          %2507 = vmatpush1.msra.mxu0 0.0
          %2508 = vmatprep.subr.mxu0 0.0
          %2509 = vmatpush1.msra.mxu0 0.0
          %2510 = vmatprep.subr.mxu0 0.0
          %2511 = vmatpush1.msra.mxu0 0.0
          %2512 = vmatprep.subr.mxu0 0.0
          %2513 = vmatpush1.msra.mxu0 0.0
          %2514 = vmatprep.subr.mxu0 0.0
          %2515 = vmatpush1.msra.mxu0 0.0
          %2516 = vmatprep.subr.mxu0 0.0
          %2517 = vmatpush1.msra.mxu0 0.0
          %2518 = vmatprep.subr.mxu0 0.0
          %2519 = vmatpush1.msra.mxu0 0.0
          %2520 = vmatprep.subr.mxu0 0.0
          %2521 = vmatpush1.msra.mxu0 0.0
          %2522 = vmatprep.subr.mxu0 0.0
          %2523 = vmatpush1.msra.mxu0 0.0
          %2524 = vmatprep.subr.mxu0 0.0
          %2525 = vmatpush1.msra.mxu0 0.0
          %2526 = vmatprep.subr.mxu0 0.0
          %2527 = vmatpush1.msra.mxu0 0.0
          %2528 = vmatprep.subr.mxu0 0.0
          %2529 = vmatpush1.msra.mxu0 0.0
          %2530 = vmatprep.subr.mxu0 0.0
          %2531 = vmatpush1.msra.mxu0 0.0
          %2532 = vmatprep.subr.mxu0 0.0
          %2533 = vmatpush1.msra.mxu0 0.0
          %2534 = vmatprep.subr.mxu0 0.0
          %2535 = vmatpush1.msra.mxu0 0.0
          %2536 = vmatprep.mubr.f32.mxu0 0.0
          %v2537 = vand.u32 %v1287, 4294901760
          %v2538 = vsub.f32 %v1287, %v2537
          %v2539 = vand.u32 %v2538, 4294901760
          %2540 = vmatmul.mubr.f32.gmra.mrb[0].mxu0 %v2539
          %v2541 = vpop.f32.mrb[0].mxu0
          %v2542 = vadd.f32 %v2468, %v2541
          %v2543 = vpop.f32.mrb[0].mxu0
          %2544 = vdwg.mxu0
          %2545 = vmatprep.subr.mxu0 0.0
          %v2546 = vand.u32 %v2244, 4294901760
          %v2547 = vsub.f32 %v2244, %v2546
          %v2548 = vand.u32 %v2547, 4294901760
          %2549 = vmatpush1.msra.mxu0 %v2548
          %2550 = vmatprep.subr.mxu0 0.0
          %2551 = vmatpush1.msra.mxu0 0.0
          %2552 = vmatprep.subr.mxu0 0.0
          %2553 = vmatpush1.msra.mxu0 0.0
          %2554 = vmatprep.subr.mxu0 0.0
          %2555 = vmatpush1.msra.mxu0 0.0
          %2556 = vmatprep.subr.mxu0 0.0
          %2557 = vmatpush1.msra.mxu0 0.0
          %2558 = vmatprep.subr.mxu0 0.0
          %2559 = vmatpush1.msra.mxu0 0.0
          %2560 = vmatprep.subr.mxu0 0.0
          %2561 = vmatpush1.msra.mxu0 0.0
          %2562 = vmatprep.subr.mxu0 0.0
          %2563 = vmatpush1.msra.mxu0 0.0
          %2564 = vmatprep.subr.mxu0 0.0
          %2565 = vmatpush1.msra.mxu0 0.0
          %2566 = vmatprep.subr.mxu0 0.0
          %2567 = vmatpush1.msra.mxu0 0.0
          %2568 = vmatprep.subr.mxu0 0.0
          %2569 = vmatpush1.msra.mxu0 0.0
          %2570 = vmatprep.subr.mxu0 0.0
          %2571 = vmatpush1.msra.mxu0 0.0
          %2572 = vmatprep.subr.mxu0 0.0
          %2573 = vmatpush1.msra.mxu0 0.0
          %2574 = vmatprep.subr.mxu0 0.0
          %2575 = vmatpush1.msra.mxu0 0.0
          %2576 = vmatprep.subr.mxu0 0.0
          %2577 = vmatpush1.msra.mxu0 0.0
          %2578 = vmatprep.subr.mxu0 0.0
          %2579 = vmatpush1.msra.mxu0 0.0
          %2580 = vmatprep.subr.mxu0 0.0
          %2581 = vmatpush1.msra.mxu0 0.0
          %2582 = vmatprep.subr.mxu0 0.0
          %2583 = vmatpush1.msra.mxu0 0.0
          %2584 = vmatprep.subr.mxu0 0.0
          %2585 = vmatpush1.msra.mxu0 0.0
          %2586 = vmatprep.subr.mxu0 0.0
          %2587 = vmatpush1.msra.mxu0 0.0
          %2588 = vmatprep.subr.mxu0 0.0
          %2589 = vmatpush1.msra.mxu0 0.0
          %2590 = vmatprep.subr.mxu0 0.0
          %2591 = vmatpush1.msra.mxu0 0.0
          %2592 = vmatprep.subr.mxu0 0.0
          %2593 = vmatpush1.msra.mxu0 0.0
          %2594 = vmatprep.subr.mxu0 0.0
          %2595 = vmatpush1.msra.mxu0 0.0
          %2596 = vmatprep.subr.mxu0 0.0
          %2597 = vmatpush1.msra.mxu0 0.0
          %2598 = vmatprep.subr.mxu0 0.0
          %2599 = vmatpush1.msra.mxu0 0.0
          %2600 = vmatprep.subr.mxu0 0.0
          %2601 = vmatpush1.msra.mxu0 0.0
          %2602 = vmatprep.subr.mxu0 0.0
          %2603 = vmatpush1.msra.mxu0 0.0
          %2604 = vmatprep.subr.mxu0 0.0
          %2605 = vmatpush1.msra.mxu0 0.0
          %2606 = vmatprep.subr.mxu0 0.0
          %2607 = vmatpush1.msra.mxu0 0.0
          %2608 = vmatprep.subr.mxu0 0.0
          %2609 = vmatpush1.msra.mxu0 0.0
          %2610 = vmatprep.subr.mxu0 0.0
          %2611 = vmatpush1.msra.mxu0 0.0
          %2612 = vmatprep.mubr.f32.mxu0 0.0
          %v2613 = vand.u32 %v1287, 4294901760
          %2614 = vmatmul.mubr.f32.gmra.mrb[0].mxu0 %v2613
          %v2615 = vpop.f32.mrb[0].mxu0
          %v2616 = vadd.f32 %v2542, %v2615
          %v2617 = vpop.f32.mrb[0].mxu0
          %2618 = vdwg.mxu0
          %2619 = vmatprep.subr.mxu0 0.0
          %v2620 = vand.u32 %v2244, 4294901760
          %2621 = vmatpush1.msra.mxu0 %v2620
          %2622 = vmatprep.subr.mxu0 0.0
          %2623 = vmatpush1.msra.mxu0 0.0
          %2624 = vmatprep.subr.mxu0 0.0
          %2625 = vmatpush1.msra.mxu0 0.0
          %2626 = vmatprep.subr.mxu0 0.0
          %2627 = vmatpush1.msra.mxu0 0.0
          %2628 = vmatprep.subr.mxu0 0.0
          %2629 = vmatpush1.msra.mxu0 0.0
          %2630 = vmatprep.subr.mxu0 0.0
          %2631 = vmatpush1.msra.mxu0 0.0
          %2632 = vmatprep.subr.mxu0 0.0
          %2633 = vmatpush1.msra.mxu0 0.0
          %2634 = vmatprep.subr.mxu0 0.0
          %2635 = vmatpush1.msra.mxu0 0.0
          %2636 = vmatprep.subr.mxu0 0.0
          %2637 = vmatpush1.msra.mxu0 0.0
          %2638 = vmatprep.subr.mxu0 0.0
          %2639 = vmatpush1.msra.mxu0 0.0
          %2640 = vmatprep.subr.mxu0 0.0
          %2641 = vmatpush1.msra.mxu0 0.0
          %2642 = vmatprep.subr.mxu0 0.0
          %2643 = vmatpush1.msra.mxu0 0.0
          %2644 = vmatprep.subr.mxu0 0.0
          %2645 = vmatpush1.msra.mxu0 0.0
          %2646 = vmatprep.subr.mxu0 0.0
          %2647 = vmatpush1.msra.mxu0 0.0
          %2648 = vmatprep.subr.mxu0 0.0
          %2649 = vmatpush1.msra.mxu0 0.0
          %2650 = vmatprep.subr.mxu0 0.0
          %2651 = vmatpush1.msra.mxu0 0.0
          %2652 = vmatprep.subr.mxu0 0.0
          %2653 = vmatpush1.msra.mxu0 0.0
          %2654 = vmatprep.subr.mxu0 0.0
          %2655 = vmatpush1.msra.mxu0 0.0
          %2656 = vmatprep.subr.mxu0 0.0
          %2657 = vmatpush1.msra.mxu0 0.0
          %2658 = vmatprep.subr.mxu0 0.0
          %2659 = vmatpush1.msra.mxu0 0.0
          %2660 = vmatprep.subr.mxu0 0.0
          %2661 = vmatpush1.msra.mxu0 0.0
          %2662 = vmatprep.subr.mxu0 0.0
          %2663 = vmatpush1.msra.mxu0 0.0
          %2664 = vmatprep.subr.mxu0 0.0
          %2665 = vmatpush1.msra.mxu0 0.0
          %2666 = vmatprep.subr.mxu0 0.0
          %2667 = vmatpush1.msra.mxu0 0.0
          %2668 = vmatprep.subr.mxu0 0.0
          %2669 = vmatpush1.msra.mxu0 0.0
          %2670 = vmatprep.subr.mxu0 0.0
          %2671 = vmatpush1.msra.mxu0 0.0
          %2672 = vmatprep.subr.mxu0 0.0
          %2673 = vmatpush1.msra.mxu0 0.0
          %2674 = vmatprep.subr.mxu0 0.0
          %2675 = vmatpush1.msra.mxu0 0.0
          %2676 = vmatprep.subr.mxu0 0.0
          %2677 = vmatpush1.msra.mxu0 0.0
          %2678 = vmatprep.subr.mxu0 0.0
          %2679 = vmatpush1.msra.mxu0 0.0
          %2680 = vmatprep.subr.mxu0 0.0
          %2681 = vmatpush1.msra.mxu0 0.0
          %2682 = vmatprep.subr.mxu0 0.0
          %2683 = vmatpush1.msra.mxu0 0.0
          %2684 = vmatprep.mubr.f32.mxu0 0.0
          %v2685 = vand.u32 %v1287, 4294901760
          %2686 = vmatmul.mubr.f32.gmra.mrb[0].mxu0 %v2685
          %v2687 = vpop.f32.mrb[0].mxu0
          %v2688 = vadd.f32 %v2616, %v2687
          %v2689 = vpop.f32.mrb[0].mxu0
          %2690 = vdwg.mxu0
          %v2692 = vsel %vm1783, %v2244, 0
          %2694 = vmatprep.subr.mxu0 0.0
          %v2695 = vand.u32 %v1788, 4294901760
          %2696 = vmatpush1.msra.mxu0 %v2695
          %2697 = vmatprep.subr.mxu0 0.0
          %2698 = vmatpush1.msra.mxu0 0.0
          %2699 = vmatprep.subr.mxu0 0.0
          %2700 = vmatpush1.msra.mxu0 0.0
          %2701 = vmatprep.subr.mxu0 0.0
          %2702 = vmatpush1.msra.mxu0 0.0
          %2703 = vmatprep.subr.mxu0 0.0
          %2704 = vmatpush1.msra.mxu0 0.0
          %2705 = vmatprep.subr.mxu0 0.0
          %2706 = vmatpush1.msra.mxu0 0.0
          %2707 = vmatprep.subr.mxu0 0.0
          %2708 = vmatpush1.msra.mxu0 0.0
          %2709 = vmatprep.subr.mxu0 0.0
          %2710 = vmatpush1.msra.mxu0 0.0
          %2711 = vmatprep.subr.mxu0 0.0
          %2712 = vmatpush1.msra.mxu0 0.0
          %2713 = vmatprep.subr.mxu0 0.0
          %2714 = vmatpush1.msra.mxu0 0.0
          %2715 = vmatprep.subr.mxu0 0.0
          %2716 = vmatpush1.msra.mxu0 0.0
          %2717 = vmatprep.subr.mxu0 0.0
          %2718 = vmatpush1.msra.mxu0 0.0
          %2719 = vmatprep.subr.mxu0 0.0
          %2720 = vmatpush1.msra.mxu0 0.0
          %2721 = vmatprep.subr.mxu0 0.0
          %2722 = vmatpush1.msra.mxu0 0.0
          %2723 = vmatprep.subr.mxu0 0.0
          %2724 = vmatpush1.msra.mxu0 0.0
          %2725 = vmatprep.subr.mxu0 0.0
          %2726 = vmatpush1.msra.mxu0 0.0
          %2727 = vmatprep.subr.mxu0 0.0
          %2728 = vmatpush1.msra.mxu0 0.0
          %2729 = vmatprep.subr.mxu0 0.0
          %2730 = vmatpush1.msra.mxu0 0.0
          %2731 = vmatprep.subr.mxu0 0.0
          %2732 = vmatpush1.msra.mxu0 0.0
          %2733 = vmatprep.subr.mxu0 0.0
          %2734 = vmatpush1.msra.mxu0 0.0
          %2735 = vmatprep.subr.mxu0 0.0
          %2736 = vmatpush1.msra.mxu0 0.0
          %2737 = vmatprep.subr.mxu0 0.0
          %2738 = vmatpush1.msra.mxu0 0.0
          %2739 = vmatprep.subr.mxu0 0.0
          %2740 = vmatpush1.msra.mxu0 0.0
          %2741 = vmatprep.subr.mxu0 0.0
          %2742 = vmatpush1.msra.mxu0 0.0
          %2743 = vmatprep.subr.mxu0 0.0
          %2744 = vmatpush1.msra.mxu0 0.0
          %2745 = vmatprep.subr.mxu0 0.0
          %2746 = vmatpush1.msra.mxu0 0.0
          %2747 = vmatprep.subr.mxu0 0.0
          %2748 = vmatpush1.msra.mxu0 0.0
          %2749 = vmatprep.subr.mxu0 0.0
          %2750 = vmatpush1.msra.mxu0 0.0
          %2751 = vmatprep.subr.mxu0 0.0
          %2752 = vmatpush1.msra.mxu0 0.0
          %2753 = vmatprep.subr.mxu0 0.0
          %2754 = vmatpush1.msra.mxu0 0.0
          %2755 = vmatprep.subr.mxu0 0.0
          %2756 = vmatpush1.msra.mxu0 0.0
          %2757 = vmatprep.subr.mxu0 0.0
          %2758 = vmatpush1.msra.mxu0 0.0
          %2759 = vmatprep.mubr.f32.mxu0 0.0
          %v2760 = vand.u32 %v2692, 4294901760
          %v2761 = vsub.f32 %v2692, %v2760
          %v2762 = vand.u32 %v2761, 4294901760
          %v2763 = vsub.f32 %v2761, %v2762
          %v2764 = vand.u32 %v2763, 4294901760
          %2765 = vmatmul.mubr.f32.gmra.mrb[0].mxu0 %v2764
          %v2766 = vpop.f32.mrb[0].mxu0
          %v2767 = vadd.f32 %v2236, %v2766
          %v2768 = vpop.f32.mrb[0].mxu0
          %2769 = vdwg.mxu0
          %2770 = vmatprep.subr.mxu0 0.0
          %v2771 = vand.u32 %v1788, 4294901760
          %v2772 = vsub.f32 %v1788, %v2771
          %v2773 = vand.u32 %v2772, 4294901760
          %v2774 = vsub.f32 %v2772, %v2773
          %v2775 = vand.u32 %v2774, 4294901760
          %2776 = vmatpush1.msra.mxu0 %v2775
          %2777 = vmatprep.subr.mxu0 0.0
          %2778 = vmatpush1.msra.mxu0 0.0
          %2779 = vmatprep.subr.mxu0 0.0
          %2780 = vmatpush1.msra.mxu0 0.0
          %2781 = vmatprep.subr.mxu0 0.0
          %2782 = vmatpush1.msra.mxu0 0.0
          %2783 = vmatprep.subr.mxu0 0.0
          %2784 = vmatpush1.msra.mxu0 0.0
          %2785 = vmatprep.subr.mxu0 0.0
          %2786 = vmatpush1.msra.mxu0 0.0
          %2787 = vmatprep.subr.mxu0 0.0
          %2788 = vmatpush1.msra.mxu0 0.0
          %2789 = vmatprep.subr.mxu0 0.0
          %2790 = vmatpush1.msra.mxu0 0.0
          %2791 = vmatprep.subr.mxu0 0.0
          %2792 = vmatpush1.msra.mxu0 0.0
          %2793 = vmatprep.subr.mxu0 0.0
          %2794 = vmatpush1.msra.mxu0 0.0
          %2795 = vmatprep.subr.mxu0 0.0
          %2796 = vmatpush1.msra.mxu0 0.0
          %2797 = vmatprep.subr.mxu0 0.0
          %2798 = vmatpush1.msra.mxu0 0.0
          %2799 = vmatprep.subr.mxu0 0.0
          %2800 = vmatpush1.msra.mxu0 0.0
          %2801 = vmatprep.subr.mxu0 0.0
          %2802 = vmatpush1.msra.mxu0 0.0
          %2803 = vmatprep.subr.mxu0 0.0
          %2804 = vmatpush1.msra.mxu0 0.0
          %2805 = vmatprep.subr.mxu0 0.0
          %2806 = vmatpush1.msra.mxu0 0.0
          %2807 = vmatprep.subr.mxu0 0.0
          %2808 = vmatpush1.msra.mxu0 0.0
          %2809 = vmatprep.subr.mxu0 0.0
          %2810 = vmatpush1.msra.mxu0 0.0
          %2811 = vmatprep.subr.mxu0 0.0
          %2812 = vmatpush1.msra.mxu0 0.0
          %2813 = vmatprep.subr.mxu0 0.0
          %2814 = vmatpush1.msra.mxu0 0.0
          %2815 = vmatprep.subr.mxu0 0.0
          %2816 = vmatpush1.msra.mxu0 0.0
          %2817 = vmatprep.subr.mxu0 0.0
          %2818 = vmatpush1.msra.mxu0 0.0
          %2819 = vmatprep.subr.mxu0 0.0
          %2820 = vmatpush1.msra.mxu0 0.0
          %2821 = vmatprep.subr.mxu0 0.0
          %2822 = vmatpush1.msra.mxu0 0.0
          %2823 = vmatprep.subr.mxu0 0.0
          %2824 = vmatpush1.msra.mxu0 0.0
          %2825 = vmatprep.subr.mxu0 0.0
          %2826 = vmatpush1.msra.mxu0 0.0
          %2827 = vmatprep.subr.mxu0 0.0
          %2828 = vmatpush1.msra.mxu0 0.0
          %2829 = vmatprep.subr.mxu0 0.0
          %2830 = vmatpush1.msra.mxu0 0.0
          %2831 = vmatprep.subr.mxu0 0.0
          %2832 = vmatpush1.msra.mxu0 0.0
          %2833 = vmatprep.subr.mxu0 0.0
          %2834 = vmatpush1.msra.mxu0 0.0
          %2835 = vmatprep.subr.mxu0 0.0
          %2836 = vmatpush1.msra.mxu0 0.0
          %2837 = vmatprep.subr.mxu0 0.0
          %2838 = vmatpush1.msra.mxu0 0.0
          %2839 = vmatprep.mubr.f32.mxu0 0.0
          %v2840 = vand.u32 %v2692, 4294901760
          %2841 = vmatmul.mubr.f32.gmra.mrb[0].mxu0 %v2840
          %v2842 = vpop.f32.mrb[0].mxu0
          %v2843 = vadd.f32 %v2767, %v2842
          %v2844 = vpop.f32.mrb[0].mxu0
          %2845 = vdwg.mxu0
          %2846 = vmatprep.subr.mxu0 0.0
          %v2847 = vand.u32 %v1788, 4294901760
          %v2848 = vsub.f32 %v1788, %v2847
          %2849 = vmatpush1.msra.mxu0 %v2848
          %2850 = vmatprep.subr.mxu0 0.0
          %2851 = vmatpush1.msra.mxu0 0.0
          %2852 = vmatprep.subr.mxu0 0.0
          %2853 = vmatpush1.msra.mxu0 0.0
          %2854 = vmatprep.subr.mxu0 0.0
          %2855 = vmatpush1.msra.mxu0 0.0
          %2856 = vmatprep.subr.mxu0 0.0
          %2857 = vmatpush1.msra.mxu0 0.0
          %2858 = vmatprep.subr.mxu0 0.0
          %2859 = vmatpush1.msra.mxu0 0.0
          %2860 = vmatprep.subr.mxu0 0.0
          %2861 = vmatpush1.msra.mxu0 0.0
          %2862 = vmatprep.subr.mxu0 0.0
          %2863 = vmatpush1.msra.mxu0 0.0
          %2864 = vmatprep.subr.mxu0 0.0
          %2865 = vmatpush1.msra.mxu0 0.0
          %2866 = vmatprep.subr.mxu0 0.0
          %2867 = vmatpush1.msra.mxu0 0.0
          %2868 = vmatprep.subr.mxu0 0.0
          %2869 = vmatpush1.msra.mxu0 0.0
          %2870 = vmatprep.subr.mxu0 0.0
          %2871 = vmatpush1.msra.mxu0 0.0
          %2872 = vmatprep.subr.mxu0 0.0
          %2873 = vmatpush1.msra.mxu0 0.0
          %2874 = vmatprep.subr.mxu0 0.0
          %2875 = vmatpush1.msra.mxu0 0.0
          %2876 = vmatprep.subr.mxu0 0.0
          %2877 = vmatpush1.msra.mxu0 0.0
          %2878 = vmatprep.subr.mxu0 0.0
          %2879 = vmatpush1.msra.mxu0 0.0
          %2880 = vmatprep.subr.mxu0 0.0
          %2881 = vmatpush1.msra.mxu0 0.0
          %2882 = vmatprep.subr.mxu0 0.0
          %2883 = vmatpush1.msra.mxu0 0.0
          %2884 = vmatprep.subr.mxu0 0.0
          %2885 = vmatpush1.msra.mxu0 0.0
          %2886 = vmatprep.subr.mxu0 0.0
          %2887 = vmatpush1.msra.mxu0 0.0
          %2888 = vmatprep.subr.mxu0 0.0
          %2889 = vmatpush1.msra.mxu0 0.0
          %2890 = vmatprep.subr.mxu0 0.0
          %2891 = vmatpush1.msra.mxu0 0.0
          %2892 = vmatprep.subr.mxu0 0.0
          %2893 = vmatpush1.msra.mxu0 0.0
          %2894 = vmatprep.subr.mxu0 0.0
          %2895 = vmatpush1.msra.mxu0 0.0
          %2896 = vmatprep.subr.mxu0 0.0
          %2897 = vmatpush1.msra.mxu0 0.0
          %2898 = vmatprep.subr.mxu0 0.0
          %2899 = vmatpush1.msra.mxu0 0.0
          %2900 = vmatprep.subr.mxu0 0.0
          %2901 = vmatpush1.msra.mxu0 0.0
          %2902 = vmatprep.subr.mxu0 0.0
          %2903 = vmatpush1.msra.mxu0 0.0
          %2904 = vmatprep.subr.mxu0 0.0
          %2905 = vmatpush1.msra.mxu0 0.0
          %2906 = vmatprep.subr.mxu0 0.0
          %2907 = vmatpush1.msra.mxu0 0.0
          %2908 = vmatprep.subr.mxu0 0.0
          %2909 = vmatpush1.msra.mxu0 0.0
          %2910 = vmatprep.subr.mxu0 0.0
          %2911 = vmatpush1.msra.mxu0 0.0
          %2912 = vmatprep.mubr.f32.mxu0 0.0
          %v2913 = vand.u32 %v2692, 4294901760
          %v2914 = vsub.f32 %v2692, %v2913
          %2915 = vmatmul.mubr.f32.gmra.mrb[0].mxu0 %v2914
          %v2916 = vpop.f32.mrb[0].mxu0
          %v2917 = vadd.f32 %v2843, %v2916
          %v2918 = vpop.f32.mrb[0].mxu0
          %2919 = vdwg.mxu0
          %2920 = vmatprep.subr.mxu0 0.0
          %v2921 = vand.u32 %v1788, 4294901760
          %2922 = vmatpush1.msra.mxu0 %v2921
          %2923 = vmatprep.subr.mxu0 0.0
          %2924 = vmatpush1.msra.mxu0 0.0
          %2925 = vmatprep.subr.mxu0 0.0
          %2926 = vmatpush1.msra.mxu0 0.0
          %2927 = vmatprep.subr.mxu0 0.0
          %2928 = vmatpush1.msra.mxu0 0.0
          %2929 = vmatprep.subr.mxu0 0.0
          %2930 = vmatpush1.msra.mxu0 0.0
          %2931 = vmatprep.subr.mxu0 0.0
          %2932 = vmatpush1.msra.mxu0 0.0
          %2933 = vmatprep.subr.mxu0 0.0
          %2934 = vmatpush1.msra.mxu0 0.0
          %2935 = vmatprep.subr.mxu0 0.0
          %2936 = vmatpush1.msra.mxu0 0.0
          %2937 = vmatprep.subr.mxu0 0.0
          %2938 = vmatpush1.msra.mxu0 0.0
          %2939 = vmatprep.subr.mxu0 0.0
          %2940 = vmatpush1.msra.mxu0 0.0
          %2941 = vmatprep.subr.mxu0 0.0
          %2942 = vmatpush1.msra.mxu0 0.0
          %2943 = vmatprep.subr.mxu0 0.0
          %2944 = vmatpush1.msra.mxu0 0.0
          %2945 = vmatprep.subr.mxu0 0.0
          %2946 = vmatpush1.msra.mxu0 0.0
          %2947 = vmatprep.subr.mxu0 0.0
          %2948 = vmatpush1.msra.mxu0 0.0
          %2949 = vmatprep.subr.mxu0 0.0
          %2950 = vmatpush1.msra.mxu0 0.0
          %2951 = vmatprep.subr.mxu0 0.0
          %2952 = vmatpush1.msra.mxu0 0.0
          %2953 = vmatprep.subr.mxu0 0.0
          %2954 = vmatpush1.msra.mxu0 0.0
          %2955 = vmatprep.subr.mxu0 0.0
          %2956 = vmatpush1.msra.mxu0 0.0
          %2957 = vmatprep.subr.mxu0 0.0
          %2958 = vmatpush1.msra.mxu0 0.0
          %2959 = vmatprep.subr.mxu0 0.0
          %2960 = vmatpush1.msra.mxu0 0.0
          %2961 = vmatprep.subr.mxu0 0.0
          %2962 = vmatpush1.msra.mxu0 0.0
          %2963 = vmatprep.subr.mxu0 0.0
          %2964 = vmatpush1.msra.mxu0 0.0
          %2965 = vmatprep.subr.mxu0 0.0
          %2966 = vmatpush1.msra.mxu0 0.0
          %2967 = vmatprep.subr.mxu0 0.0
          %2968 = vmatpush1.msra.mxu0 0.0
          %2969 = vmatprep.subr.mxu0 0.0
          %2970 = vmatpush1.msra.mxu0 0.0
          %2971 = vmatprep.subr.mxu0 0.0
          %2972 = vmatpush1.msra.mxu0 0.0
          %2973 = vmatprep.subr.mxu0 0.0
          %2974 = vmatpush1.msra.mxu0 0.0
          %2975 = vmatprep.subr.mxu0 0.0
          %2976 = vmatpush1.msra.mxu0 0.0
          %2977 = vmatprep.subr.mxu0 0.0
          %2978 = vmatpush1.msra.mxu0 0.0
          %2979 = vmatprep.subr.mxu0 0.0
          %2980 = vmatpush1.msra.mxu0 0.0
          %2981 = vmatprep.subr.mxu0 0.0
          %2982 = vmatpush1.msra.mxu0 0.0
          %2983 = vmatprep.subr.mxu0 0.0
          %2984 = vmatpush1.msra.mxu0 0.0
          %2985 = vmatprep.mubr.f32.mxu0 0.0
          %v2986 = vand.u32 %v2692, 4294901760
          %v2987 = vsub.f32 %v2692, %v2986
          %v2988 = vand.u32 %v2987, 4294901760
          %2989 = vmatmul.mubr.f32.gmra.mrb[0].mxu0 %v2988
          %v2990 = vpop.f32.mrb[0].mxu0
          %v2991 = vadd.f32 %v2917, %v2990
          %v2992 = vpop.f32.mrb[0].mxu0
          %2993 = vdwg.mxu0
          %2994 = vmatprep.subr.mxu0 0.0
          %v2995 = vand.u32 %v1788, 4294901760
          %v2996 = vsub.f32 %v1788, %v2995
          %v2997 = vand.u32 %v2996, 4294901760
          %2998 = vmatpush1.msra.mxu0 %v2997
          %2999 = vmatprep.subr.mxu0 0.0
          %3000 = vmatpush1.msra.mxu0 0.0
          %3001 = vmatprep.subr.mxu0 0.0
          %3002 = vmatpush1.msra.mxu0 0.0
          %3003 = vmatprep.subr.mxu0 0.0
          %3004 = vmatpush1.msra.mxu0 0.0
          %3005 = vmatprep.subr.mxu0 0.0
          %3006 = vmatpush1.msra.mxu0 0.0
          %3007 = vmatprep.subr.mxu0 0.0
          %3008 = vmatpush1.msra.mxu0 0.0
          %3009 = vmatprep.subr.mxu0 0.0
          %3010 = vmatpush1.msra.mxu0 0.0
          %3011 = vmatprep.subr.mxu0 0.0
          %3012 = vmatpush1.msra.mxu0 0.0
          %3013 = vmatprep.subr.mxu0 0.0
          %3014 = vmatpush1.msra.mxu0 0.0
          %3015 = vmatprep.subr.mxu0 0.0
          %3016 = vmatpush1.msra.mxu0 0.0
          %3017 = vmatprep.subr.mxu0 0.0
          %3018 = vmatpush1.msra.mxu0 0.0
          %3019 = vmatprep.subr.mxu0 0.0
          %3020 = vmatpush1.msra.mxu0 0.0
          %3021 = vmatprep.subr.mxu0 0.0
          %3022 = vmatpush1.msra.mxu0 0.0
          %3023 = vmatprep.subr.mxu0 0.0
          %3024 = vmatpush1.msra.mxu0 0.0
          %3025 = vmatprep.subr.mxu0 0.0
          %3026 = vmatpush1.msra.mxu0 0.0
          %3027 = vmatprep.subr.mxu0 0.0
          %3028 = vmatpush1.msra.mxu0 0.0
          %3029 = vmatprep.subr.mxu0 0.0
          %3030 = vmatpush1.msra.mxu0 0.0
          %3031 = vmatprep.subr.mxu0 0.0
          %3032 = vmatpush1.msra.mxu0 0.0
          %3033 = vmatprep.subr.mxu0 0.0
          %3034 = vmatpush1.msra.mxu0 0.0
          %3035 = vmatprep.subr.mxu0 0.0
          %3036 = vmatpush1.msra.mxu0 0.0
          %3037 = vmatprep.subr.mxu0 0.0
          %3038 = vmatpush1.msra.mxu0 0.0
          %3039 = vmatprep.subr.mxu0 0.0
          %3040 = vmatpush1.msra.mxu0 0.0
          %3041 = vmatprep.subr.mxu0 0.0
          %3042 = vmatpush1.msra.mxu0 0.0
          %3043 = vmatprep.subr.mxu0 0.0
          %3044 = vmatpush1.msra.mxu0 0.0
          %3045 = vmatprep.subr.mxu0 0.0
          %3046 = vmatpush1.msra.mxu0 0.0
          %3047 = vmatprep.subr.mxu0 0.0
          %3048 = vmatpush1.msra.mxu0 0.0
          %3049 = vmatprep.subr.mxu0 0.0
          %3050 = vmatpush1.msra.mxu0 0.0
          %3051 = vmatprep.subr.mxu0 0.0
          %3052 = vmatpush1.msra.mxu0 0.0
          %3053 = vmatprep.subr.mxu0 0.0
          %3054 = vmatpush1.msra.mxu0 0.0
          %3055 = vmatprep.subr.mxu0 0.0
          %3056 = vmatpush1.msra.mxu0 0.0
          %3057 = vmatprep.subr.mxu0 0.0
          %3058 = vmatpush1.msra.mxu0 0.0
          %3059 = vmatprep.subr.mxu0 0.0
          %3060 = vmatpush1.msra.mxu0 0.0
          %3061 = vmatprep.mubr.f32.mxu0 0.0
          %v3062 = vand.u32 %v2692, 4294901760
          %3063 = vmatmul.mubr.f32.gmra.mrb[0].mxu0 %v3062
          %v3064 = vpop.f32.mrb[0].mxu0
          %v3065 = vadd.f32 %v2991, %v3064
          %v3066 = vpop.f32.mrb[0].mxu0
          %3067 = vdwg.mxu0
          %3068 = vmatprep.subr.mxu0 0.0
          %v3069 = vand.u32 %v1788, 4294901760
          %3070 = vmatpush1.msra.mxu0 %v3069
          %3071 = vmatprep.subr.mxu0 0.0
          %3072 = vmatpush1.msra.mxu0 0.0
          %3073 = vmatprep.subr.mxu0 0.0
          %3074 = vmatpush1.msra.mxu0 0.0
          %3075 = vmatprep.subr.mxu0 0.0
          %3076 = vmatpush1.msra.mxu0 0.0
          %3077 = vmatprep.subr.mxu0 0.0
          %3078 = vmatpush1.msra.mxu0 0.0
          %3079 = vmatprep.subr.mxu0 0.0
          %3080 = vmatpush1.msra.mxu0 0.0
          %3081 = vmatprep.subr.mxu0 0.0
          %3082 = vmatpush1.msra.mxu0 0.0
          %3083 = vmatprep.subr.mxu0 0.0
          %3084 = vmatpush1.msra.mxu0 0.0
          %3085 = vmatprep.subr.mxu0 0.0
          %3086 = vmatpush1.msra.mxu0 0.0
          %3087 = vmatprep.subr.mxu0 0.0
          %3088 = vmatpush1.msra.mxu0 0.0
          %3089 = vmatprep.subr.mxu0 0.0
          %3090 = vmatpush1.msra.mxu0 0.0
          %3091 = vmatprep.subr.mxu0 0.0
          %3092 = vmatpush1.msra.mxu0 0.0
          %3093 = vmatprep.subr.mxu0 0.0
          %3094 = vmatpush1.msra.mxu0 0.0
          %3095 = vmatprep.subr.mxu0 0.0
          %3096 = vmatpush1.msra.mxu0 0.0
          %3097 = vmatprep.subr.mxu0 0.0
          %3098 = vmatpush1.msra.mxu0 0.0
          %3099 = vmatprep.subr.mxu0 0.0
          %3100 = vmatpush1.msra.mxu0 0.0
          %3101 = vmatprep.subr.mxu0 0.0
          %3102 = vmatpush1.msra.mxu0 0.0
          %3103 = vmatprep.subr.mxu0 0.0
          %3104 = vmatpush1.msra.mxu0 0.0
          %3105 = vmatprep.subr.mxu0 0.0
          %3106 = vmatpush1.msra.mxu0 0.0
          %3107 = vmatprep.subr.mxu0 0.0
          %3108 = vmatpush1.msra.mxu0 0.0
          %3109 = vmatprep.subr.mxu0 0.0
          %3110 = vmatpush1.msra.mxu0 0.0
          %3111 = vmatprep.subr.mxu0 0.0
          %3112 = vmatpush1.msra.mxu0 0.0
          %3113 = vmatprep.subr.mxu0 0.0
          %3114 = vmatpush1.msra.mxu0 0.0
          %3115 = vmatprep.subr.mxu0 0.0
          %3116 = vmatpush1.msra.mxu0 0.0
          %3117 = vmatprep.subr.mxu0 0.0
          %3118 = vmatpush1.msra.mxu0 0.0
          %3119 = vmatprep.subr.mxu0 0.0
          %3120 = vmatpush1.msra.mxu0 0.0
          %3121 = vmatprep.subr.mxu0 0.0
          %3122 = vmatpush1.msra.mxu0 0.0
          %3123 = vmatprep.subr.mxu0 0.0
          %3124 = vmatpush1.msra.mxu0 0.0
          %3125 = vmatprep.subr.mxu0 0.0
          %3126 = vmatpush1.msra.mxu0 0.0
          %3127 = vmatprep.subr.mxu0 0.0
          %3128 = vmatpush1.msra.mxu0 0.0
          %3129 = vmatprep.subr.mxu0 0.0
          %3130 = vmatpush1.msra.mxu0 0.0
          %3131 = vmatprep.subr.mxu0 0.0
          %3132 = vmatpush1.msra.mxu0 0.0
          %3133 = vmatprep.mubr.f32.mxu0 0.0
          %v3134 = vand.u32 %v2692, 4294901760
          %3135 = vmatmul.mubr.f32.gmra.mrb[0].mxu0 %v3134
          %v3136 = vpop.f32.mrb[0].mxu0
          %v3137 = vadd.f32 %v3065, %v3136
          %v3138 = vpop.f32.mrb[0].mxu0
          %3139 = vdwg.mxu0
          %v3140 = vmax.f32 %v2688, %v3137
          %v3141 = vsub.f32 %v2688, %v3140
          %v3142 = vmul.f32 %v3141, 1.442695
          %v3143 = vpow.pop %v3142
          %v3144 = vsub.f32 %v3137, %v3140
          %v3145 = vmul.f32 %v3144, 1.442695
          %v3146 = vpow.pop %v3145
          %v3147 = vadd.f32 %v3143, %v3146
          %v3148 = vlog2.pop %v3147
          %v3149 = vmul.f32 %v3148, 0.6931472
          %v3150 = vadd.f32 %v3140, %v3149
          %v3151 = vsel %vm395, 0.0, %v3150
        $region69: #{transducer_forward.1} parent=43 // loop_footer
          %s2243 = sadd.s32 1, %s2239
        $region70: #{transducer_forward.1} parent=43 // loop_footer_branch
          %2238 = sbr.rel target = $region66
        $region71: #{transducer_forward.1} parent=43 // loop_exit
          _
        %s3152 = sld [smem:[#allocation4 + %s37]]
        %s3153 = ssub.s32 %s3152, 1
        %s3154 = sld [smem:[#allocation5 + %s37]]
        %v3155 = vstv %s3153
        %vm3156 = vcmp.eq.s32.totalorder %v390, %v3155
        %v3157 = vstv %s3154
        %vm3158 = vcmp.eq.s32.totalorder %v392, %v3157
        %vm3159 = vmand %vm3156, %vm3158
        %v3160 = vadd.f32 %v2244, %v1283
        %v3161 = vsel %vm3159, %v3160, 0.0
        %v3162 = vsel %vm1783, %v3161, 0.0
        %3163 = vadd.xlane.f32.xlu0 %v3162
        %v3164 = vpop.xlane.xlu0 %3163
        %v3165 = vrot.slane %v3164, 4
        %v3166 = vadd.f32 %v3164, %v3165
        %v3167 = vrot.slane %v3166, 2
        %v3168 = vadd.f32 %v3166, %v3167
        %v3169 = vrot.slane %v3168, 1
        %v3170 = vadd.f32 %v3168, %v3169
        %s3171 = vtos %v3170
        %s3172 = ssub.f32 0.0, %s3171
        %v3173 = vstv %s3172
        %3174 = vst [vmem:[%s330] sm:$0x1] %v3173
        %p3175 = scmp.lt.s32.totalorder %s37, 1
        %s3176 = scalar_select %p3175, %s37, 1
        %s3177 = scalar_lea.vmem %s9, %s3176
        // Predicated region
        $region72: #{transducer_forward.1} parent=43 // pred_check
          %p3178 = pneg %p186
        $region73: #{transducer_forward.1} parent=43 // pred_check_branch
          %3180 = sbr.rel (%p3178) target = $region75
        $region74: #{transducer_forward.1} parent=43 // pred_region
          _
        $region75: #{transducer_forward.1} parent=43 // pred_fallthru
          _
      $region44: #{transducer_forward.1} parent=5 // pred_fallthru
        _
      %p3181 = scmp.le.s32.totalorder 2, %s32
      // Predicated region
      $region76: #{transducer_forward.1} parent=5 // pred_check
        %p3182 = pneg %p3181
      $region77: #{transducer_forward.1} parent=5 // pred_check_branch
        %3184 = sbr.rel (%p3182) target = $region79
      $region78: #{transducer_forward.1} parent=5 // pred_region
        %s3185 = ssub.s32 %s32, 2
        // Predicated region
        $region80: #{transducer_forward.1} parent=78 // pred_check
          %p3186 = pneg %p192
        $region81: #{transducer_forward.1} parent=78 // pred_check_branch
          %3188 = sbr.rel (%p3186) target = $region83
        $region82: #{transducer_forward.1} parent=78 // pred_region
          %p3189 = scmp.lt.s32.totalorder %s38, 1
          %s3190 = scalar_select %p3189, %s38, 1
          %s3191 = scalar_lea.vmem %s9, %s3190
        $region83: #{transducer_forward.1} parent=78 // pred_fallthru
          _
      $region79: #{transducer_forward.1} parent=5 // pred_fallthru
        _
    $region6: #{transducer_forward.1} parent=1 // loop_footer
      %s36 = sadd.s32 1, %s32
    $region7: #{transducer_forward.1} parent=1 // loop_footer_branch
      %31 = sbr.rel target = $region3
    $region8: #{transducer_forward.1} parent=1 // loop_exit
      _
    %3192 = vsyncpa [#allocation7], 1
    %s3193 = scalar_lea.sflag [#allocation7], 1
    %3194 = vsyncpa %s3193, 1
    %3195 = vsyncpa [#allocation9], 1
    %3196 = vsyncpa [#allocation12], 1

</llo_original>
